<compile_context>
chip_gen: v6e
topology: v6e:2x2x1
jax: 0.10.0
libtpu: 0.0.40
codegen_flags: <defaults>
</compile_context>

<pallas_src>
import functools

import jax
import jax.numpy as jnp
import numpy as np
from jax import lax
from jax.experimental import pallas as pl
from jax.experimental.pallas import tpu as pltpu


def _sigmoid(x):
    # tanh-based sigmoid (EUP tanh is the most portable transcendental path).
    return 0.5 * jnp.tanh(0.5 * x) + 0.5


# --------------------------------------------------------------------------
# Fused Pallas kernel: 2 bidirectional LSTM layers + attention pooling.
# --------------------------------------------------------------------------
def _lstm_mil_kernel(x_ref, wih0_ref, whh0_ref, b0_ref,
                     wih1_ref, whh1_ref, b1_ref,
                     wa_ref, ba_ref, wx_ref, bx_ref,
                     weighted_ref, aux_ref,
                     projf, projr, h0f, h0r, h1f, h1r,
                     *, hidden, batch, seq):
    # x_ref    : (B, N, D)  f32 bags (native batch-major layout, no host transpose)
    # wih*_ref : (Din, 8H)  [W_ih_fwd^T | W_ih_rev^T], gate order (i,f,o,g)
    # whh*_ref : (2H, 4H)   rows [0:H]=W_hh_fwd^T, rows [H:2H]=W_hh_rev^T
    # b*_ref   : (1, 8H)    fused (b_ih+b_hh) biases [fwd | rev]
    # wa/wx    : (1, D) VMEM;  ba/bx: (1, 1) SMEM scalars
    # outputs  : weighted (B, D), aux (B, N)
    # scratch  : projf/projr (N, B, 4H) step projections; h{0,1}{f,r} (N, B, H)
    H, B, N = hidden, batch, seq
    G3, G4 = 3 * H, 4 * H

    # Mask for zero-padding the per-direction hidden state:
    # rows [0:B] (fwd) keep lanes [0:H]; rows [B:2B] (rev) keep lanes [H:2H].
    rows = lax.broadcasted_iota(jnp.int32, (2 * B, 2 * H), 0)
    cols = lax.broadcasted_iota(jnp.int32, (2 * B, 2 * H), 1)
    pad_mask = (rows < B) == (cols < H)

    def project(x_flat_tm, wih_ref, bias_ref):
        """Hoisted input projection for ALL time steps of one layer.

        x_flat_tm: (N*B, Din) f32, rows in time-major order (row = t*B + b).
        Writes projf[t] = x_t @ Wih_f^T + b_f, projr[t] = x_t @ Wih_r^T + b_r.
        """
        w = wih_ref[...]
        p = jnp.dot(x_flat_tm.astype(w.dtype), w,
                    preferred_element_type=jnp.float32) + bias_ref[...]
        for t in range(N):                      # static setup loop, off the
            rows_t = p[t * B:(t + 1) * B]       # serial recurrence path
            projf[t] = rows_t[:, :G4]
            projr[t] = rows_t[:, G4:]

    def recurrence(whh_ref, outf, outr):
        """Bidirectional recurrence: fwd rows [0:B], rev rows [B:2B]."""
        whh = whh_ref[...]                      # (2H, 4H)

        def step(s, carry):
            h_pad, c = carry                    # (2B, 2H), (2B, H) f32
            # step s: fwd consumes time s, rev consumes time N-1-s.
            g_in = jnp.concatenate([projf[s], projr[N - 1 - s]], axis=0)
            g = g_in + jnp.dot(h_pad.astype(whh.dtype), whh,
                               preferred_element_type=jnp.float32)  # (2B, 4H)
            sig = _sigmoid(g[:, :G3])           # gates (i, f, o) only
            i_g = sig[:, :H]
            f_g = sig[:, H:2 * H]
            o_g = sig[:, 2 * H:G3]
            g_g = jnp.tanh(g[:, G3:])           # gate g only
            c_new = f_g * c + i_g * g_g
            h_new = o_g * jnp.tanh(c_new)
            outf[s] = h_new[:B]                 # fwd hidden @ time s
            outr[N - 1 - s] = h_new[B:]         # rev hidden @ time N-1-s
            # Re-pad: fwd rows keep lanes [0:H], rev rows keep lanes [H:2H].
            h_pad_new = jnp.where(pad_mask,
                                  jnp.concatenate([h_new, h_new], axis=-1),
                                  0.0)
            return h_pad_new, c_new

        init = (jnp.zeros((2 * B, 2 * H), jnp.float32),
                jnp.zeros((2 * B, H), jnp.float32))
        lax.fori_loop(0, N, step, init, unroll=True)

    # ---- layer 0: projections from the (B, N, D) input, one big matmul ------
    x0_flat = jnp.concatenate([x_ref[:, t, :] for t in range(N)], axis=0)
    project(x0_flat, wih0_ref, b0_ref)
    recurrence(whh0_ref, h0f, h0r)

    # ---- layer 1: input = layer-0 bidirectional output (eval-mode dropout) --
    x1_flat = jnp.concatenate(
        [jnp.concatenate([h0f[t], h0r[t]], axis=-1) for t in range(N)], axis=0)
    project(x1_flat, wih1_ref, b1_ref)
    recurrence(whh1_ref, h1f, h1r)

    # ---- gated-attention MIL pooling (computed directly in (B, N) layout) ---
    wa = wa_ref[...]                            # (1, D)
    wx = wx_ref[...]
    ba = ba_ref[0, 0]                           # SMEM scalars
    bx = bx_ref[0, 0]

    h1_list, attn_cols, aux_cols = [], [], []
    for t in range(N):
        h_t = jnp.concatenate([h1f[t], h1r[t]], axis=-1)          # (B, D)
        h1_list.append(h_t)
        th = jnp.tanh(h_t)
        attn_cols.append(jnp.sum(th * wa, axis=-1, keepdims=True))  # (B, 1)
        aux_cols.append(jnp.sum(th * wx, axis=-1, keepdims=True))

    attn = jnp.concatenate(attn_cols, axis=1) + ba                # (B, N)
    aux = jnp.concatenate(aux_cols, axis=1) + bx                  # (B, N)
    aux_ref[...] = aux.astype(aux_ref.dtype)

    m = jnp.max(attn, axis=1, keepdims=True)
    e = jnp.exp(attn - m)
    wgt = e * pl.reciprocal(jnp.sum(e, axis=1, keepdims=True), approx=True)

    acc = wgt[:, 0:1] * h1_list[0]
    for t in range(1, N):
        acc = acc + wgt[:, t:t + 1] * h1_list[t]
    weighted_ref[...] = acc.astype(weighted_ref.dtype)            # (B, D)


# --------------------------------------------------------------------------
# Wrapper: one pallas_call, whole problem VMEM-resident (a few tens of KB).
# --------------------------------------------------------------------------
def lstm_mil_forward(bags, packed):
    """bags: (B, N, D) f32 -> (weighted (B, D), aux_attn_scores (B, N))."""
    b, n, d = bags.shape
    hidden = d // 2
    kernel = functools.partial(_lstm_mil_kernel, hidden=hidden, batch=b, seq=n)
    vmem = pl.BlockSpec(memory_space=pltpu.MemorySpace.VMEM)
    smem = pl.BlockSpec(memory_space=pltpu.MemorySpace.SMEM)
    weighted, aux = pl.pallas_call(
        kernel,
        out_shape=(jax.ShapeDtypeStruct((b, d), jnp.float32),
                   jax.ShapeDtypeStruct((b, n), jnp.float32)),
        in_specs=[vmem,                      # bags (B, N, D)
                  vmem, vmem, vmem,          # layer-0 W_ih, W_hh, bias
                  vmem, vmem, vmem,          # layer-1 W_ih, W_hh, bias
                  vmem, smem,                # attn weight (VMEM), bias (SMEM)
                  vmem, smem],               # aux  weight (VMEM), bias (SMEM)
        out_specs=(vmem, vmem),
        scratch_shapes=[
            pltpu.VMEM((n, b, 4 * hidden), jnp.float32),   # fwd step projections
            pltpu.VMEM((n, b, 4 * hidden), jnp.float32),   # rev step projections
            pltpu.VMEM((n, b, hidden), jnp.float32),       # layer-0 fwd hidden
            pltpu.VMEM((n, b, hidden), jnp.float32),       # layer-0 rev hidden
            pltpu.VMEM((n, b, hidden), jnp.float32),       # layer-1 fwd hidden
            pltpu.VMEM((n, b, hidden), jnp.float32),       # layer-1 rev hidden
        ],
    )(bags, packed["w_ih0"], packed["w_hh0"], packed["b0"],
      packed["w_ih1"], packed["w_hh1"], packed["b1"],
      packed["attn_w"], packed["attn_b"], packed["aux_w"], packed["aux_b"])
    return weighted, aux


# --------------------------------------------------------------------------
# Parameter packing (done once, outside the forward): transpose, fuse fwd/rev,
# reorder PyTorch gate blocks (i,f,g,o) -> (i,f,o,g), combine biases.
# --------------------------------------------------------------------------
def _reorder_gates(a):
    """Leading dim is 4H in PyTorch order (i,f,g,o); reorder to (i,f,o,g)."""
    h = a.shape[0] // 4
    return jnp.concatenate([a[:2 * h], a[3 * h:], a[2 * h:3 * h]], axis=0)


def pack_params(params, matmul_dtype=jnp.float32):
    packed = {}
    for li, lp in enumerate(params["lstm"]):
        wih_f = _reorder_gates(lp["w_ih_f"]).T          # (Din, 4H)
        wih_r = _reorder_gates(lp["w_ih_r"]).T
        whh_f = _reorder_gates(lp["w_hh_f"]).T          # (H, 4H)
        whh_r = _reorder_gates(lp["w_hh_r"]).T
        packed[f"w_ih{li}"] = jnp.concatenate([wih_f, wih_r], axis=1).astype(matmul_dtype)
        packed[f"w_hh{li}"] = jnp.concatenate([whh_f, whh_r], axis=0).astype(matmul_dtype)
        bias = jnp.concatenate([_reorder_gates(lp["b_f"]),
                                _reorder_gates(lp["b_r"])])
        packed[f"b{li}"] = bias.reshape(1, -1).astype(jnp.float32)
    packed["attn_w"] = params["attn_w"].astype(jnp.float32)           # (1, D)
    packed["attn_b"] = params["attn_b"].reshape(1, 1).astype(jnp.float32)
    packed["aux_w"] = params["aux_w"].astype(jnp.float32)
    packed["aux_b"] = params["aux_b"].reshape(1, 1).astype(jnp.float32)
    return packed


# --------------------------------------------------------------------------
# Pure-JAX reference (numerical validation), PyTorch gate order (i,f,g,o).
# --------------------------------------------------------------------------
def _ref_lstm_direction(x_tm, w_ih, w_hh, b, hidden, reverse):
    xs = x_tm[::-1] if reverse else x_tm

    def step(carry, x_t):
        h, c = carry
        gates = x_t @ w_ih.T + h @ w_hh.T + b
        i = jax.nn.sigmoid(gates[:, :hidden])
        f = jax.nn.sigmoid(gates[:, hidden:2 * hidden])
        g = jnp.tanh(gates[:, 2 * hidden:3 * hidden])
        o = jax.nn.sigmoid(gates[:, 3 * hidden:])
        c = f * c + i * g
        h = o * jnp.tanh(c)
        return (h, c), h

    bsz = x_tm.shape[1]
    init = (jnp.zeros((bsz, hidden)), jnp.zeros((bsz, hidden)))
    _, hs = lax.scan(step, init, xs)
    return hs[::-1] if reverse else hs


def _ref_forward(bags, params):
    _, _, d = bags.shape
    hidden = d // 2
    x = jnp.transpose(bags, (1, 0, 2))
    for layer_p in params["lstm"]:
        h_f = _ref_lstm_direction(x, layer_p["w_ih_f"], layer_p["w_hh_f"],
                                  layer_p["b_f"], hidden, reverse=False)
        h_r = _ref_lstm_direction(x, layer_p["w_ih_r"], layer_p["w_hh_r"],
                                  layer_p["b_r"], hidden, reverse=True)
        x = jnp.concatenate([h_f, h_r], axis=-1)
    bags_lstm = jnp.transpose(x, (1, 0, 2))
    th = jnp.tanh(bags_lstm)
    attn = jnp.einsum("bnd,d->bn", th, params["attn_w"][0]) + params["attn_b"][0]
    aux = jnp.einsum("bnd,d->bn", th, params["aux_w"][0]) + params["aux_b"][0]
    w = jax.nn.softmax(attn, axis=-1)
    weighted = jnp.einsum("bn,bnd->bd", w, bags_lstm)
    return weighted, aux


# --------------------------------------------------------------------------
# Deterministic parameter init (same shapes as the PyTorch module).
# --------------------------------------------------------------------------
def init_params(key, input_dim):
    hidden = input_dim // 2
    k_lstm = 1.0 / float(np.sqrt(hidden))
    k_lin = 1.0 / float(np.sqrt(input_dim))
    keys = iter(jax.random.split(key, 64))

    def uni(shape, k):
        return jax.random.uniform(next(keys), shape, jnp.float32, -k, k)

    lstm = []
    for _ in range(2):            # both layers have input dim = 2H = input_dim
        layer_p = {}
        for d in ("f", "r"):
            layer_p[f"w_ih_{d}"] = uni((4 * hidden, input_dim), k_lstm)
            layer_p[f"w_hh_{d}"] = uni((4 * hidden, hidden), k_lstm)
            # b_ih + b_hh are always summed in the cell; keep them combined.
            layer_p[f"b_{d}"] = uni((4 * hidden,), k_lstm) + uni((4 * hidden,), k_lstm)
        lstm.append(layer_p)

    return {
        "lstm": lstm,
        "attn_w": uni((1, input_dim), k_lin),
        "attn_b": uni((1,), k_lin),
        "aux_w": uni((1, input_dim), k_lin),
        "aux_b": uni((1,), k_lin),
    }


if __name__ == "__main__":
    batch, num_instances, input_dim = 2, 8, 64

    key = jax.random.PRNGKey(0)
    k_params, k_data = jax.random.split(key)
    params = init_params(k_params, input_dim)
    packed = pack_params(params)
    bags = jax.random.normal(k_data, (batch, num_instances, input_dim), jnp.float32)

    fwd = jax.jit(lstm_mil_forward)
    weighted, aux_scores = fwd(bags, packed)
    jax.block_until_ready((weighted, aux_scores))

    assert weighted.shape == (batch, input_dim)
    assert aux_scores.shape == (batch, num_instances)

    ref_w, ref_aux = _ref_forward(bags, params)
    np.testing.assert_allclose(np.asarray(weighted), np.asarray(ref_w),
                               rtol=3e-2, atol=3e-2)
    np.testing.assert_allclose(np.asarray(aux_scores), np.asarray(ref_aux),
                               rtol=3e-2, atol=3e-2)

    print("KERNEL_OK")
</pallas_src>

<mosaic_0001>
module attributes {stable_mosaic.version = 11 : i64} {
  func.func @_lstm_mil_kernel(%arg0: memref<2x8x64xf32, #tpu.memory_space<vmem>>, %arg1: memref<64x256xf32, #tpu.memory_space<vmem>>, %arg2: memref<64x128xf32, #tpu.memory_space<vmem>>, %arg3: memref<1x256xf32, #tpu.memory_space<vmem>>, %arg4: memref<64x256xf32, #tpu.memory_space<vmem>>, %arg5: memref<64x128xf32, #tpu.memory_space<vmem>>, %arg6: memref<1x256xf32, #tpu.memory_space<vmem>>, %arg7: memref<1x64xf32, #tpu.memory_space<vmem>>, %arg8: memref<1x1xf32, #tpu.memory_space<smem>>, %arg9: memref<1x64xf32, #tpu.memory_space<vmem>>, %arg10: memref<1x1xf32, #tpu.memory_space<smem>>, %arg11: memref<2x64xf32, #tpu.memory_space<vmem>>, %arg12: memref<2x8xf32, #tpu.memory_space<vmem>>, %arg13: memref<8x2x128xf32, #tpu.memory_space<vmem>>, %arg14: memref<8x2x128xf32, #tpu.memory_space<vmem>>, %arg15: memref<8x2x32xf32, #tpu.memory_space<vmem>>, %arg16: memref<8x2x32xf32, #tpu.memory_space<vmem>>, %arg17: memref<8x2x32xf32, #tpu.memory_space<vmem>>, %arg18: memref<8x2x32xf32, #tpu.memory_space<vmem>>) attributes {dimension_semantics = [], scalar_prefetch = 0 : i64, scratch_operands = 6 : i64, tpu.core_type = #tpu.core_type<tc>} {
    %0 = tpu.iota {dimensions = array<i32: 0>} : vector<4x64xi32>
    %1 = tpu.iota {dimensions = array<i32: 1>} : vector<4x64xi32>
    %c2_i32 = arith.constant 2 : i32
    %2 = vector.broadcast %c2_i32 : i32 to vector<4x64xi32>
    %3 = arith.cmpi slt, %0, %2 : vector<4x64xi32>
    %c32_i32 = arith.constant 32 : i32
    %4 = vector.broadcast %c32_i32 : i32 to vector<4x64xi32>
    %5 = arith.cmpi slt, %1, %4 : vector<4x64xi32>
    %6 = arith.xori %3, %5 : vector<4x64xi1>
    %cst = arith.constant dense<true> : vector<4x64xi1>
    %7 = arith.xori %6, %cst : vector<4x64xi1>
    %c0 = arith.constant 0 : index
    %c0_0 = arith.constant 0 : index
    %c0_1 = arith.constant 0 : index
    %8 = vector.load %arg0[%c0, %c0_0, %c0_1] : memref<2x8x64xf32, #tpu.memory_space<vmem>>, vector<2x1x64xf32>
    %9 = vector.shape_cast %8 : vector<2x1x64xf32> to vector<2x64xf32>
    %c0_2 = arith.constant 0 : index
    %c1 = arith.constant 1 : index
    %c0_3 = arith.constant 0 : index
    %10 = vector.load %arg0[%c0_2, %c1, %c0_3] : memref<2x8x64xf32, #tpu.memory_space<vmem>>, vector<2x1x64xf32>
    %11 = vector.shape_cast %10 : vector<2x1x64xf32> to vector<2x64xf32>
    %c0_4 = arith.constant 0 : index
    %c2 = arith.constant 2 : index
    %c0_5 = arith.constant 0 : index
    %12 = vector.load %arg0[%c0_4, %c2, %c0_5] : memref<2x8x64xf32, #tpu.memory_space<vmem>>, vector<2x1x64xf32>
    %13 = vector.shape_cast %12 : vector<2x1x64xf32> to vector<2x64xf32>
    %c0_6 = arith.constant 0 : index
    %c3 = arith.constant 3 : index
    %c0_7 = arith.constant 0 : index
    %14 = vector.load %arg0[%c0_6, %c3, %c0_7] : memref<2x8x64xf32, #tpu.memory_space<vmem>>, vector<2x1x64xf32>
    %15 = vector.shape_cast %14 : vector<2x1x64xf32> to vector<2x64xf32>
    %c0_8 = arith.constant 0 : index
    %c4 = arith.constant 4 : index
    %c0_9 = arith.constant 0 : index
    %16 = vector.load %arg0[%c0_8, %c4, %c0_9] : memref<2x8x64xf32, #tpu.memory_space<vmem>>, vector<2x1x64xf32>
    %17 = vector.shape_cast %16 : vector<2x1x64xf32> to vector<2x64xf32>
    %c0_10 = arith.constant 0 : index
    %c5 = arith.constant 5 : index
    %c0_11 = arith.constant 0 : index
    %18 = vector.load %arg0[%c0_10, %c5, %c0_11] : memref<2x8x64xf32, #tpu.memory_space<vmem>>, vector<2x1x64xf32>
    %19 = vector.shape_cast %18 : vector<2x1x64xf32> to vector<2x64xf32>
    %c0_12 = arith.constant 0 : index
    %c6 = arith.constant 6 : index
    %c0_13 = arith.constant 0 : index
    %20 = vector.load %arg0[%c0_12, %c6, %c0_13] : memref<2x8x64xf32, #tpu.memory_space<vmem>>, vector<2x1x64xf32>
    %21 = vector.shape_cast %20 : vector<2x1x64xf32> to vector<2x64xf32>
    %c0_14 = arith.constant 0 : index
    %c7 = arith.constant 7 : index
    %c0_15 = arith.constant 0 : index
    %22 = vector.load %arg0[%c0_14, %c7, %c0_15] : memref<2x8x64xf32, #tpu.memory_space<vmem>>, vector<2x1x64xf32>
    %23 = vector.shape_cast %22 : vector<2x1x64xf32> to vector<2x64xf32>
    %24 = tpu.concatenate %9, %11, %13, %15, %17, %19, %21, %23 in 0 : vector<2x64xf32>, vector<2x64xf32>, vector<2x64xf32>, vector<2x64xf32>, vector<2x64xf32>, vector<2x64xf32>, vector<2x64xf32>, vector<2x64xf32> -> vector<16x64xf32>
    %c0_16 = arith.constant 0 : index
    %c0_17 = arith.constant 0 : index
    %25 = vector.load %arg1[%c0_16, %c0_17] : memref<64x256xf32, #tpu.memory_space<vmem>>, vector<64x256xf32>
    %cst_18 = arith.constant dense<0.000000e+00> : vector<16x256xf32>
    %26 = tpu.matmul %24, %25, %cst_18 {dimension_numbers = #tpu.dot_dimension_numbers<[1], [0], [0], [1], [0, 0, 1, 1], [], []>} : vector<16x64xf32>, vector<64x256xf32>, vector<16x256xf32> -> vector<16x256xf32>
    %c0_19 = arith.constant 0 : index
    %c0_20 = arith.constant 0 : index
    %27 = vector.load %arg3[%c0_19, %c0_20] : memref<1x256xf32, #tpu.memory_space<vmem>>, vector<1x256xf32>
    %28 = vector.broadcast %27 : vector<1x256xf32> to vector<16x256xf32>
    %29 = arith.addf %26, %28 : vector<16x256xf32>
    %30 = vector.extract_strided_slice %29 {offsets = [0, 0], sizes = [2, 256], strides = [1, 1]} : vector<16x256xf32> to vector<2x256xf32>
    %31 = vector.extract_strided_slice %30 {offsets = [0, 0], sizes = [2, 128], strides = [1, 1]} : vector<2x256xf32> to vector<2x128xf32>
    %c0_21 = arith.constant 0 : index
    %c0_22 = arith.constant 0 : index
    %c0_23 = arith.constant 0 : index
    %32 = vector.load %arg13[%c0_21, %c0_22, %c0_23] : memref<8x2x128xf32, #tpu.memory_space<vmem>>, vector<1x2x128xf32>
    %33 = vector.shape_cast %32 : vector<1x2x128xf32> to vector<2x128xf32>
    %34 = vector.shape_cast %31 : vector<2x128xf32> to vector<1x2x128xf32>
    tpu.vector_store %arg13[%c0_21, %c0_22, %c0_23], %34 {strides = array<i32>} : memref<8x2x128xf32, #tpu.memory_space<vmem>>, vector<1x2x128xf32>,
    %35 = vector.extract_strided_slice %30 {offsets = [0, 128], sizes = [2, 128], strides = [1, 1]} : vector<2x256xf32> to vector<2x128xf32>
    %c0_24 = arith.constant 0 : index
    %c0_25 = arith.constant 0 : index
    %c0_26 = arith.constant 0 : index
    %36 = vector.load %arg14[%c0_24, %c0_25, %c0_26] : memref<8x2x128xf32, #tpu.memory_space<vmem>>, vector<1x2x128xf32>
    %37 = vector.shape_cast %36 : vector<1x2x128xf32> to vector<2x128xf32>
    %38 = vector.shape_cast %35 : vector<2x128xf32> to vector<1x2x128xf32>
    tpu.vector_store %arg14[%c0_24, %c0_25, %c0_26], %38 {strides = array<i32>} : memref<8x2x128xf32, #tpu.memory_space<vmem>>, vector<1x2x128xf32>,
    %39 = vector.extract_strided_slice %29 {offsets = [2, 0], sizes = [2, 256], strides = [1, 1]} : vector<16x256xf32> to vector<2x256xf32>
    %40 = vector.extract_strided_slice %39 {offsets = [0, 0], sizes = [2, 128], strides = [1, 1]} : vector<2x256xf32> to vector<2x128xf32>
    %c1_27 = arith.constant 1 : index
    %c0_28 = arith.constant 0 : index
    %c0_29 = arith.constant 0 : index
    %41 = vector.load %arg13[%c1_27, %c0_28, %c0_29] : memref<8x2x128xf32, #tpu.memory_space<vmem>>, vector<1x2x128xf32>
    %42 = vector.shape_cast %41 : vector<1x2x128xf32> to vector<2x128xf32>
    %43 = vector.shape_cast %40 : vector<2x128xf32> to vector<1x2x128xf32>
    tpu.vector_store %arg13[%c1_27, %c0_28, %c0_29], %43 {strides = array<i32>} : memref<8x2x128xf32, #tpu.memory_space<vmem>>, vector<1x2x128xf32>,
    %44 = vector.extract_strided_slice %39 {offsets = [0, 128], sizes = [2, 128], strides = [1, 1]} : vector<2x256xf32> to vector<2x128xf32>
    %c1_30 = arith.constant 1 : index
    %c0_31 = arith.constant 0 : index
    %c0_32 = arith.constant 0 : index
    %45 = vector.load %arg14[%c1_30, %c0_31, %c0_32] : memref<8x2x128xf32, #tpu.memory_space<vmem>>, vector<1x2x128xf32>
    %46 = vector.shape_cast %45 : vector<1x2x128xf32> to vector<2x128xf32>
    %47 = vector.shape_cast %44 : vector<2x128xf32> to vector<1x2x128xf32>
    tpu.vector_store %arg14[%c1_30, %c0_31, %c0_32], %47 {strides = array<i32>} : memref<8x2x128xf32, #tpu.memory_space<vmem>>, vector<1x2x128xf32>,
    %48 = vector.extract_strided_slice %29 {offsets = [4, 0], sizes = [2, 256], strides = [1, 1]} : vector<16x256xf32> to vector<2x256xf32>
    %49 = vector.extract_strided_slice %48 {offsets = [0, 0], sizes = [2, 128], strides = [1, 1]} : vector<2x256xf32> to vector<2x128xf32>
    %c2_33 = arith.constant 2 : index
    %c0_34 = arith.constant 0 : index
    %c0_35 = arith.constant 0 : index
    %50 = vector.load %arg13[%c2_33, %c0_34, %c0_35] : memref<8x2x128xf32, #tpu.memory_space<vmem>>, vector<1x2x128xf32>
    %51 = vector.shape_cast %50 : vector<1x2x128xf32> to vector<2x128xf32>
    %52 = vector.shape_cast %49 : vector<2x128xf32> to vector<1x2x128xf32>
    tpu.vector_store %arg13[%c2_33, %c0_34, %c0_35], %52 {strides = array<i32>} : memref<8x2x128xf32, #tpu.memory_space<vmem>>, vector<1x2x128xf32>,
    %53 = vector.extract_strided_slice %48 {offsets = [0, 128], sizes = [2, 128], strides = [1, 1]} : vector<2x256xf32> to vector<2x128xf32>
    %c2_36 = arith.constant 2 : index
    %c0_37 = arith.constant 0 : index
    %c0_38 = arith.constant 0 : index
    %54 = vector.load %arg14[%c2_36, %c0_37, %c0_38] : memref<8x2x128xf32, #tpu.memory_space<vmem>>, vector<1x2x128xf32>
    %55 = vector.shape_cast %54 : vector<1x2x128xf32> to vector<2x128xf32>
    %56 = vector.shape_cast %53 : vector<2x128xf32> to vector<1x2x128xf32>
    tpu.vector_store %arg14[%c2_36, %c0_37, %c0_38], %56 {strides = array<i32>} : memref<8x2x128xf32, #tpu.memory_space<vmem>>, vector<1x2x128xf32>,
    %57 = vector.extract_strided_slice %29 {offsets = [6, 0], sizes = [2, 256], strides = [1, 1]} : vector<16x256xf32> to vector<2x256xf32>
    %58 = vector.extract_strided_slice %57 {offsets = [0, 0], sizes = [2, 128], strides = [1, 1]} : vector<2x256xf32> to vector<2x128xf32>
    %c3_39 = arith.constant 3 : index
    %c0_40 = arith.constant 0 : index
    %c0_41 = arith.constant 0 : index
    %59 = vector.load %arg13[%c3_39, %c0_40, %c0_41] : memref<8x2x128xf32, #tpu.memory_space<vmem>>, vector<1x2x128xf32>
    %60 = vector.shape_cast %59 : vector<1x2x128xf32> to vector<2x128xf32>
    %61 = vector.shape_cast %58 : vector<2x128xf32> to vector<1x2x128xf32>
    tpu.vector_store %arg13[%c3_39, %c0_40, %c0_41], %61 {strides = array<i32>} : memref<8x2x128xf32, #tpu.memory_space<vmem>>, vector<1x2x128xf32>,
    %62 = vector.extract_strided_slice %57 {offsets = [0, 128], sizes = [2, 128], strides = [1, 1]} : vector<2x256xf32> to vector<2x128xf32>
    %c3_42 = arith.constant 3 : index
    %c0_43 = arith.constant 0 : index
    %c0_44 = arith.constant 0 : index
    %63 = vector.load %arg14[%c3_42, %c0_43, %c0_44] : memref<8x2x128xf32, #tpu.memory_space<vmem>>, vector<1x2x128xf32>
    %64 = vector.shape_cast %63 : vector<1x2x128xf32> to vector<2x128xf32>
    %65 = vector.shape_cast %62 : vector<2x128xf32> to vector<1x2x128xf32>
    tpu.vector_store %arg14[%c3_42, %c0_43, %c0_44], %65 {strides = array<i32>} : memref<8x2x128xf32, #tpu.memory_space<vmem>>, vector<1x2x128xf32>,
    %66 = vector.extract_strided_slice %29 {offsets = [8, 0], sizes = [2, 256], strides = [1, 1]} : vector<16x256xf32> to vector<2x256xf32>
    %67 = vector.extract_strided_slice %66 {offsets = [0, 0], sizes = [2, 128], strides = [1, 1]} : vector<2x256xf32> to vector<2x128xf32>
    %c4_45 = arith.constant 4 : index
    %c0_46 = arith.constant 0 : index
    %c0_47 = arith.constant 0 : index
    %68 = vector.load %arg13[%c4_45, %c0_46, %c0_47] : memref<8x2x128xf32, #tpu.memory_space<vmem>>, vector<1x2x128xf32>
    %69 = vector.shape_cast %68 : vector<1x2x128xf32> to vector<2x128xf32>
    %70 = vector.shape_cast %67 : vector<2x128xf32> to vector<1x2x128xf32>
    tpu.vector_store %arg13[%c4_45, %c0_46, %c0_47], %70 {strides = array<i32>} : memref<8x2x128xf32, #tpu.memory_space<vmem>>, vector<1x2x128xf32>,
    %71 = vector.extract_strided_slice %66 {offsets = [0, 128], sizes = [2, 128], strides = [1, 1]} : vector<2x256xf32> to vector<2x128xf32>
    %c4_48 = arith.constant 4 : index
    %c0_49 = arith.constant 0 : index
    %c0_50 = arith.constant 0 : index
    %72 = vector.load %arg14[%c4_48, %c0_49, %c0_50] : memref<8x2x128xf32, #tpu.memory_space<vmem>>, vector<1x2x128xf32>
    %73 = vector.shape_cast %72 : vector<1x2x128xf32> to vector<2x128xf32>
    %74 = vector.shape_cast %71 : vector<2x128xf32> to vector<1x2x128xf32>
    tpu.vector_store %arg14[%c4_48, %c0_49, %c0_50], %74 {strides = array<i32>} : memref<8x2x128xf32, #tpu.memory_space<vmem>>, vector<1x2x128xf32>,
    %75 = vector.extract_strided_slice %29 {offsets = [10, 0], sizes = [2, 256], strides = [1, 1]} : vector<16x256xf32> to vector<2x256xf32>
    %76 = vector.extract_strided_slice %75 {offsets = [0, 0], sizes = [2, 128], strides = [1, 1]} : vector<2x256xf32> to vector<2x128xf32>
    %c5_51 = arith.constant 5 : index
    %c0_52 = arith.constant 0 : index
    %c0_53 = arith.constant 0 : index
    %77 = vector.load %arg13[%c5_51, %c0_52, %c0_53] : memref<8x2x128xf32, #tpu.memory_space<vmem>>, vector<1x2x128xf32>
    %78 = vector.shape_cast %77 : vector<1x2x128xf32> to vector<2x128xf32>
    %79 = vector.shape_cast %76 : vector<2x128xf32> to vector<1x2x128xf32>
    tpu.vector_store %arg13[%c5_51, %c0_52, %c0_53], %79 {strides = array<i32>} : memref<8x2x128xf32, #tpu.memory_space<vmem>>, vector<1x2x128xf32>,
    %80 = vector.extract_strided_slice %75 {offsets = [0, 128], sizes = [2, 128], strides = [1, 1]} : vector<2x256xf32> to vector<2x128xf32>
    %c5_54 = arith.constant 5 : index
    %c0_55 = arith.constant 0 : index
    %c0_56 = arith.constant 0 : index
    %81 = vector.load %arg14[%c5_54, %c0_55, %c0_56] : memref<8x2x128xf32, #tpu.memory_space<vmem>>, vector<1x2x128xf32>
    %82 = vector.shape_cast %81 : vector<1x2x128xf32> to vector<2x128xf32>
    %83 = vector.shape_cast %80 : vector<2x128xf32> to vector<1x2x128xf32>
    tpu.vector_store %arg14[%c5_54, %c0_55, %c0_56], %83 {strides = array<i32>} : memref<8x2x128xf32, #tpu.memory_space<vmem>>, vector<1x2x128xf32>,
    %84 = vector.extract_strided_slice %29 {offsets = [12, 0], sizes = [2, 256], strides = [1, 1]} : vector<16x256xf32> to vector<2x256xf32>
    %85 = vector.extract_strided_slice %84 {offsets = [0, 0], sizes = [2, 128], strides = [1, 1]} : vector<2x256xf32> to vector<2x128xf32>
    %c6_57 = arith.constant 6 : index
    %c0_58 = arith.constant 0 : index
    %c0_59 = arith.constant 0 : index
    %86 = vector.load %arg13[%c6_57, %c0_58, %c0_59] : memref<8x2x128xf32, #tpu.memory_space<vmem>>, vector<1x2x128xf32>
    %87 = vector.shape_cast %86 : vector<1x2x128xf32> to vector<2x128xf32>
    %88 = vector.shape_cast %85 : vector<2x128xf32> to vector<1x2x128xf32>
    tpu.vector_store %arg13[%c6_57, %c0_58, %c0_59], %88 {strides = array<i32>} : memref<8x2x128xf32, #tpu.memory_space<vmem>>, vector<1x2x128xf32>,
    %89 = vector.extract_strided_slice %84 {offsets = [0, 128], sizes = [2, 128], strides = [1, 1]} : vector<2x256xf32> to vector<2x128xf32>
    %c6_60 = arith.constant 6 : index
    %c0_61 = arith.constant 0 : index
    %c0_62 = arith.constant 0 : index
    %90 = vector.load %arg14[%c6_60, %c0_61, %c0_62] : memref<8x2x128xf32, #tpu.memory_space<vmem>>, vector<1x2x128xf32>
    %91 = vector.shape_cast %90 : vector<1x2x128xf32> to vector<2x128xf32>
    %92 = vector.shape_cast %89 : vector<2x128xf32> to vector<1x2x128xf32>
    tpu.vector_store %arg14[%c6_60, %c0_61, %c0_62], %92 {strides = array<i32>} : memref<8x2x128xf32, #tpu.memory_space<vmem>>, vector<1x2x128xf32>,
    %93 = vector.extract_strided_slice %29 {offsets = [14, 0], sizes = [2, 256], strides = [1, 1]} : vector<16x256xf32> to vector<2x256xf32>
    %94 = vector.extract_strided_slice %93 {offsets = [0, 0], sizes = [2, 128], strides = [1, 1]} : vector<2x256xf32> to vector<2x128xf32>
    %c7_63 = arith.constant 7 : index
    %c0_64 = arith.constant 0 : index
    %c0_65 = arith.constant 0 : index
    %95 = vector.load %arg13[%c7_63, %c0_64, %c0_65] : memref<8x2x128xf32, #tpu.memory_space<vmem>>, vector<1x2x128xf32>
    %96 = vector.shape_cast %95 : vector<1x2x128xf32> to vector<2x128xf32>
    %97 = vector.shape_cast %94 : vector<2x128xf32> to vector<1x2x128xf32>
    tpu.vector_store %arg13[%c7_63, %c0_64, %c0_65], %97 {strides = array<i32>} : memref<8x2x128xf32, #tpu.memory_space<vmem>>, vector<1x2x128xf32>,
    %98 = vector.extract_strided_slice %93 {offsets = [0, 128], sizes = [2, 128], strides = [1, 1]} : vector<2x256xf32> to vector<2x128xf32>
    %c7_66 = arith.constant 7 : index
    %c0_67 = arith.constant 0 : index
    %c0_68 = arith.constant 0 : index
    %99 = vector.load %arg14[%c7_66, %c0_67, %c0_68] : memref<8x2x128xf32, #tpu.memory_space<vmem>>, vector<1x2x128xf32>
    %100 = vector.shape_cast %99 : vector<1x2x128xf32> to vector<2x128xf32>
    %101 = vector.shape_cast %98 : vector<2x128xf32> to vector<1x2x128xf32>
    tpu.vector_store %arg14[%c7_66, %c0_67, %c0_68], %101 {strides = array<i32>} : memref<8x2x128xf32, #tpu.memory_space<vmem>>, vector<1x2x128xf32>,
    %c0_69 = arith.constant 0 : index
    %c0_70 = arith.constant 0 : index
    %102 = vector.load %arg2[%c0_69, %c0_70] : memref<64x128xf32, #tpu.memory_space<vmem>>, vector<64x128xf32>
    %cst_71 = arith.constant 0.000000e+00 : f32
    %103 = vector.broadcast %cst_71 : f32 to vector<4x64xf32>
    %cst_72 = arith.constant 0.000000e+00 : f32
    %104 = vector.broadcast %cst_72 : f32 to vector<4x32xf32>
    %c0_i32 = arith.constant 0 : i32
    %105 = arith.index_cast %c0_i32 : i32 to index
    %c0_73 = arith.constant 0 : index
    %c0_74 = arith.constant 0 : index
    %106 = vector.load %arg13[%105, %c0_73, %c0_74] : memref<8x2x128xf32, #tpu.memory_space<vmem>>, vector<1x2x128xf32>
    %107 = vector.shape_cast %106 : vector<1x2x128xf32> to vector<2x128xf32>
    %c7_i32 = arith.constant 7 : i32
    %108 = arith.subi %c7_i32, %c0_i32 : i32
    %109 = arith.index_cast %108 : i32 to index
    %c0_75 = arith.constant 0 : index
    %c0_76 = arith.constant 0 : index
    %110 = vector.load %arg14[%109, %c0_75, %c0_76] : memref<8x2x128xf32, #tpu.memory_space<vmem>>, vector<1x2x128xf32>
    %111 = vector.shape_cast %110 : vector<1x2x128xf32> to vector<2x128xf32>
    %112 = tpu.concatenate %107, %111 in 0 : vector<2x128xf32>, vector<2x128xf32> -> vector<4x128xf32>
    %cst_77 = arith.constant dense<0.000000e+00> : vector<4x128xf32>
    %113 = tpu.matmul %103, %102, %cst_77 {dimension_numbers = #tpu.dot_dimension_numbers<[1], [0], [0], [1], [0, 0, 1, 1], [], []>} : vector<4x64xf32>, vector<64x128xf32>, vector<4x128xf32> -> vector<4x128xf32>
    %114 = arith.addf %112, %113 : vector<4x128xf32>
    %115 = vector.extract_strided_slice %114 {offsets = [0, 0], sizes = [4, 96], strides = [1, 1]} : vector<4x128xf32> to vector<4x96xf32>
    %cst_78 = arith.constant 5.000000e-01 : f32
    %116 = vector.broadcast %cst_78 : f32 to vector<4x96xf32>
    %117 = arith.mulf %116, %115 : vector<4x96xf32>
    %118 = math.tanh %117 : vector<4x96xf32>
    %cst_79 = arith.constant 5.000000e-01 : f32
    %119 = vector.broadcast %cst_79 : f32 to vector<4x96xf32>
    %120 = arith.mulf %119, %118 : vector<4x96xf32>
    %cst_80 = arith.constant 5.000000e-01 : f32
    %121 = vector.broadcast %cst_80 : f32 to vector<4x96xf32>
    %122 = arith.addf %120, %121 : vector<4x96xf32>
    %123 = vector.extract_strided_slice %122 {offsets = [0, 0], sizes = [4, 32], strides = [1, 1]} : vector<4x96xf32> to vector<4x32xf32>
    %124 = vector.extract_strided_slice %122 {offsets = [0, 32], sizes = [4, 32], strides = [1, 1]} : vector<4x96xf32> to vector<4x32xf32>
    %125 = vector.extract_strided_slice %122 {offsets = [0, 64], sizes = [4, 32], strides = [1, 1]} : vector<4x96xf32> to vector<4x32xf32>
    %126 = vector.extract_strided_slice %114 {offsets = [0, 96], sizes = [4, 32], strides = [1, 1]} : vector<4x128xf32> to vector<4x32xf32>
    %127 = math.tanh %126 : vector<4x32xf32>
    %128 = arith.mulf %124, %104 : vector<4x32xf32>
    %129 = arith.mulf %123, %127 : vector<4x32xf32>
    %130 = arith.addf %128, %129 : vector<4x32xf32>
    %131 = math.tanh %130 : vector<4x32xf32>
    %132 = arith.mulf %125, %131 : vector<4x32xf32>
    %133 = vector.extract_strided_slice %132 {offsets = [0, 0], sizes = [2, 32], strides = [1, 1]} : vector<4x32xf32> to vector<2x32xf32>
    %134 = arith.index_cast %c0_i32 : i32 to index
    %c0_81 = arith.constant 0 : index
    %c0_82 = arith.constant 0 : index
    %135 = vector.load %arg15[%134, %c0_81, %c0_82] : memref<8x2x32xf32, #tpu.memory_space<vmem>>, vector<1x2x32xf32>
    %136 = vector.shape_cast %135 : vector<1x2x32xf32> to vector<2x32xf32>
    %137 = vector.shape_cast %133 : vector<2x32xf32> to vector<1x2x32xf32>
    tpu.vector_store %arg15[%134, %c0_81, %c0_82], %137 {strides = array<i32>} : memref<8x2x32xf32, #tpu.memory_space<vmem>>, vector<1x2x32xf32>,
    %138 = vector.extract_strided_slice %132 {offsets = [2, 0], sizes = [2, 32], strides = [1, 1]} : vector<4x32xf32> to vector<2x32xf32>
    %c7_i32_83 = arith.constant 7 : i32
    %139 = arith.subi %c7_i32_83, %c0_i32 : i32
    %140 = arith.index_cast %139 : i32 to index
    %c0_84 = arith.constant 0 : index
    %c0_85 = arith.constant 0 : index
    %141 = vector.load %arg16[%140, %c0_84, %c0_85] : memref<8x2x32xf32, #tpu.memory_space<vmem>>, vector<1x2x32xf32>
    %142 = vector.shape_cast %141 : vector<1x2x32xf32> to vector<2x32xf32>
    %143 = vector.shape_cast %138 : vector<2x32xf32> to vector<1x2x32xf32>
    tpu.vector_store %arg16[%140, %c0_84, %c0_85], %143 {strides = array<i32>} : memref<8x2x32xf32, #tpu.memory_space<vmem>>, vector<1x2x32xf32>,
    %144 = tpu.concatenate %132, %132 in 1 : vector<4x32xf32>, vector<4x32xf32> -> vector<4x64xf32>
    %cst_86 = arith.constant 0.000000e+00 : f32
    %145 = vector.broadcast %cst_86 : f32 to vector<4x64xf32>
    %146 = arith.select %7, %144, %145 : vector<4x64xi1>, vector<4x64xf32>
    %c1_i32 = arith.constant 1 : i32
    %147 = arith.index_cast %c1_i32 : i32 to index
    %c0_87 = arith.constant 0 : index
    %c0_88 = arith.constant 0 : index
    %148 = vector.load %arg13[%147, %c0_87, %c0_88] : memref<8x2x128xf32, #tpu.memory_space<vmem>>, vector<1x2x128xf32>
    %149 = vector.shape_cast %148 : vector<1x2x128xf32> to vector<2x128xf32>
    %c7_i32_89 = arith.constant 7 : i32
    %150 = arith.subi %c7_i32_89, %c1_i32 : i32
    %151 = arith.index_cast %150 : i32 to index
    %c0_90 = arith.constant 0 : index
    %c0_91 = arith.constant 0 : index
    %152 = vector.load %arg14[%151, %c0_90, %c0_91] : memref<8x2x128xf32, #tpu.memory_space<vmem>>, vector<1x2x128xf32>
    %153 = vector.shape_cast %152 : vector<1x2x128xf32> to vector<2x128xf32>
    %154 = tpu.concatenate %149, %153 in 0 : vector<2x128xf32>, vector<2x128xf32> -> vector<4x128xf32>
    %cst_92 = arith.constant dense<0.000000e+00> : vector<4x128xf32>
    %155 = tpu.matmul %146, %102, %cst_92 {dimension_numbers = #tpu.dot_dimension_numbers<[1], [0], [0], [1], [0, 0, 1, 1], [], []>} : vector<4x64xf32>, vector<64x128xf32>, vector<4x128xf32> -> vector<4x128xf32>
    %156 = arith.addf %154, %155 : vector<4x128xf32>
    %157 = vector.extract_strided_slice %156 {offsets = [0, 0], sizes = [4, 96], strides = [1, 1]} : vector<4x128xf32> to vector<4x96xf32>
    %cst_93 = arith.constant 5.000000e-01 : f32
    %158 = vector.broadcast %cst_93 : f32 to vector<4x96xf32>
    %159 = arith.mulf %158, %157 : vector<4x96xf32>
    %160 = math.tanh %159 : vector<4x96xf32>
    %cst_94 = arith.constant 5.000000e-01 : f32
    %161 = vector.broadcast %cst_94 : f32 to vector<4x96xf32>
    %162 = arith.mulf %161, %160 : vector<4x96xf32>
    %cst_95 = arith.constant 5.000000e-01 : f32
    %163 = vector.broadcast %cst_95 : f32 to vector<4x96xf32>
    %164 = arith.addf %162, %163 : vector<4x96xf32>
    %165 = vector.extract_strided_slice %164 {offsets = [0, 0], sizes = [4, 32], strides = [1, 1]} : vector<4x96xf32> to vector<4x32xf32>
    %166 = vector.extract_strided_slice %164 {offsets = [0, 32], sizes = [4, 32], strides = [1, 1]} : vector<4x96xf32> to vector<4x32xf32>
    %167 = vector.extract_strided_slice %164 {offsets = [0, 64], sizes = [4, 32], strides = [1, 1]} : vector<4x96xf32> to vector<4x32xf32>
    %168 = vector.extract_strided_slice %156 {offsets = [0, 96], sizes = [4, 32], strides = [1, 1]} : vector<4x128xf32> to vector<4x32xf32>
    %169 = math.tanh %168 : vector<4x32xf32>
    %170 = arith.mulf %166, %130 : vector<4x32xf32>
    %171 = arith.mulf %165, %169 : vector<4x32xf32>
    %172 = arith.addf %170, %171 : vector<4x32xf32>
    %173 = math.tanh %172 : vector<4x32xf32>
    %174 = arith.mulf %167, %173 : vector<4x32xf32>
    %175 = vector.extract_strided_slice %174 {offsets = [0, 0], sizes = [2, 32], strides = [1, 1]} : vector<4x32xf32> to vector<2x32xf32>
    %176 = arith.index_cast %c1_i32 : i32 to index
    %c0_96 = arith.constant 0 : index
    %c0_97 = arith.constant 0 : index
    %177 = vector.load %arg15[%176, %c0_96, %c0_97] : memref<8x2x32xf32, #tpu.memory_space<vmem>>, vector<1x2x32xf32>
    %178 = vector.shape_cast %177 : vector<1x2x32xf32> to vector<2x32xf32>
    %179 = vector.shape_cast %175 : vector<2x32xf32> to vector<1x2x32xf32>
    tpu.vector_store %arg15[%176, %c0_96, %c0_97], %179 {strides = array<i32>} : memref<8x2x32xf32, #tpu.memory_space<vmem>>, vector<1x2x32xf32>,
    %180 = vector.extract_strided_slice %174 {offsets = [2, 0], sizes = [2, 32], strides = [1, 1]} : vector<4x32xf32> to vector<2x32xf32>
    %c7_i32_98 = arith.constant 7 : i32
    %181 = arith.subi %c7_i32_98, %c1_i32 : i32
    %182 = arith.index_cast %181 : i32 to index
    %c0_99 = arith.constant 0 : index
    %c0_100 = arith.constant 0 : index
    %183 = vector.load %arg16[%182, %c0_99, %c0_100] : memref<8x2x32xf32, #tpu.memory_space<vmem>>, vector<1x2x32xf32>
    %184 = vector.shape_cast %183 : vector<1x2x32xf32> to vector<2x32xf32>
    %185 = vector.shape_cast %180 : vector<2x32xf32> to vector<1x2x32xf32>
    tpu.vector_store %arg16[%182, %c0_99, %c0_100], %185 {strides = array<i32>} : memref<8x2x32xf32, #tpu.memory_space<vmem>>, vector<1x2x32xf32>,
    %186 = tpu.concatenate %174, %174 in 1 : vector<4x32xf32>, vector<4x32xf32> -> vector<4x64xf32>
    %cst_101 = arith.constant 0.000000e+00 : f32
    %187 = vector.broadcast %cst_101 : f32 to vector<4x64xf32>
    %188 = arith.select %7, %186, %187 : vector<4x64xi1>, vector<4x64xf32>
    %c2_i32_102 = arith.constant 2 : i32
    %189 = arith.index_cast %c2_i32_102 : i32 to index
    %c0_103 = arith.constant 0 : index
    %c0_104 = arith.constant 0 : index
    %190 = vector.load %arg13[%189, %c0_103, %c0_104] : memref<8x2x128xf32, #tpu.memory_space<vmem>>, vector<1x2x128xf32>
    %191 = vector.shape_cast %190 : vector<1x2x128xf32> to vector<2x128xf32>
    %c7_i32_105 = arith.constant 7 : i32
    %192 = arith.subi %c7_i32_105, %c2_i32_102 : i32
    %193 = arith.index_cast %192 : i32 to index
    %c0_106 = arith.constant 0 : index
    %c0_107 = arith.constant 0 : index
    %194 = vector.load %arg14[%193, %c0_106, %c0_107] : memref<8x2x128xf32, #tpu.memory_space<vmem>>, vector<1x2x128xf32>
    %195 = vector.shape_cast %194 : vector<1x2x128xf32> to vector<2x128xf32>
    %196 = tpu.concatenate %191, %195 in 0 : vector<2x128xf32>, vector<2x128xf32> -> vector<4x128xf32>
    %cst_108 = arith.constant dense<0.000000e+00> : vector<4x128xf32>
    %197 = tpu.matmul %188, %102, %cst_108 {dimension_numbers = #tpu.dot_dimension_numbers<[1], [0], [0], [1], [0, 0, 1, 1], [], []>} : vector<4x64xf32>, vector<64x128xf32>, vector<4x128xf32> -> vector<4x128xf32>
    %198 = arith.addf %196, %197 : vector<4x128xf32>
    %199 = vector.extract_strided_slice %198 {offsets = [0, 0], sizes = [4, 96], strides = [1, 1]} : vector<4x128xf32> to vector<4x96xf32>
    %cst_109 = arith.constant 5.000000e-01 : f32
    %200 = vector.broadcast %cst_109 : f32 to vector<4x96xf32>
    %201 = arith.mulf %200, %199 : vector<4x96xf32>
    %202 = math.tanh %201 : vector<4x96xf32>
    %cst_110 = arith.constant 5.000000e-01 : f32
    %203 = vector.broadcast %cst_110 : f32 to vector<4x96xf32>
    %204 = arith.mulf %203, %202 : vector<4x96xf32>
    %cst_111 = arith.constant 5.000000e-01 : f32
    %205 = vector.broadcast %cst_111 : f32 to vector<4x96xf32>
    %206 = arith.addf %204, %205 : vector<4x96xf32>
    %207 = vector.extract_strided_slice %206 {offsets = [0, 0], sizes = [4, 32], strides = [1, 1]} : vector<4x96xf32> to vector<4x32xf32>
    %208 = vector.extract_strided_slice %206 {offsets = [0, 32], sizes = [4, 32], strides = [1, 1]} : vector<4x96xf32> to vector<4x32xf32>
    %209 = vector.extract_strided_slice %206 {offsets = [0, 64], sizes = [4, 32], strides = [1, 1]} : vector<4x96xf32> to vector<4x32xf32>
    %210 = vector.extract_strided_slice %198 {offsets = [0, 96], sizes = [4, 32], strides = [1, 1]} : vector<4x128xf32> to vector<4x32xf32>
    %211 = math.tanh %210 : vector<4x32xf32>
    %212 = arith.mulf %208, %172 : vector<4x32xf32>
    %213 = arith.mulf %207, %211 : vector<4x32xf32>
    %214 = arith.addf %212, %213 : vector<4x32xf32>
    %215 = math.tanh %214 : vector<4x32xf32>
    %216 = arith.mulf %209, %215 : vector<4x32xf32>
    %217 = vector.extract_strided_slice %216 {offsets = [0, 0], sizes = [2, 32], strides = [1, 1]} : vector<4x32xf32> to vector<2x32xf32>
    %218 = arith.index_cast %c2_i32_102 : i32 to index
    %c0_112 = arith.constant 0 : index
    %c0_113 = arith.constant 0 : index
    %219 = vector.load %arg15[%218, %c0_112, %c0_113] : memref<8x2x32xf32, #tpu.memory_space<vmem>>, vector<1x2x32xf32>
    %220 = vector.shape_cast %219 : vector<1x2x32xf32> to vector<2x32xf32>
    %221 = vector.shape_cast %217 : vector<2x32xf32> to vector<1x2x32xf32>
    tpu.vector_store %arg15[%218, %c0_112, %c0_113], %221 {strides = array<i32>} : memref<8x2x32xf32, #tpu.memory_space<vmem>>, vector<1x2x32xf32>,
    %222 = vector.extract_strided_slice %216 {offsets = [2, 0], sizes = [2, 32], strides = [1, 1]} : vector<4x32xf32> to vector<2x32xf32>
    %c7_i32_114 = arith.constant 7 : i32
    %223 = arith.subi %c7_i32_114, %c2_i32_102 : i32
    %224 = arith.index_cast %223 : i32 to index
    %c0_115 = arith.constant 0 : index
    %c0_116 = arith.constant 0 : index
    %225 = vector.load %arg16[%224, %c0_115, %c0_116] : memref<8x2x32xf32, #tpu.memory_space<vmem>>, vector<1x2x32xf32>
    %226 = vector.shape_cast %225 : vector<1x2x32xf32> to vector<2x32xf32>
    %227 = vector.shape_cast %222 : vector<2x32xf32> to vector<1x2x32xf32>
    tpu.vector_store %arg16[%224, %c0_115, %c0_116], %227 {strides = array<i32>} : memref<8x2x32xf32, #tpu.memory_space<vmem>>, vector<1x2x32xf32>,
    %228 = tpu.concatenate %216, %216 in 1 : vector<4x32xf32>, vector<4x32xf32> -> vector<4x64xf32>
    %cst_117 = arith.constant 0.000000e+00 : f32
    %229 = vector.broadcast %cst_117 : f32 to vector<4x64xf32>
    %230 = arith.select %7, %228, %229 : vector<4x64xi1>, vector<4x64xf32>
    %c3_i32 = arith.constant 3 : i32
    %231 = arith.index_cast %c3_i32 : i32 to index
    %c0_118 = arith.constant 0 : index
    %c0_119 = arith.constant 0 : index
    %232 = vector.load %arg13[%231, %c0_118, %c0_119] : memref<8x2x128xf32, #tpu.memory_space<vmem>>, vector<1x2x128xf32>
    %233 = vector.shape_cast %232 : vector<1x2x128xf32> to vector<2x128xf32>
    %c7_i32_120 = arith.constant 7 : i32
    %234 = arith.subi %c7_i32_120, %c3_i32 : i32
    %235 = arith.index_cast %234 : i32 to index
    %c0_121 = arith.constant 0 : index
    %c0_122 = arith.constant 0 : index
    %236 = vector.load %arg14[%235, %c0_121, %c0_122] : memref<8x2x128xf32, #tpu.memory_space<vmem>>, vector<1x2x128xf32>
    %237 = vector.shape_cast %236 : vector<1x2x128xf32> to vector<2x128xf32>
    %238 = tpu.concatenate %233, %237 in 0 : vector<2x128xf32>, vector<2x128xf32> -> vector<4x128xf32>
    %cst_123 = arith.constant dense<0.000000e+00> : vector<4x128xf32>
    %239 = tpu.matmul %230, %102, %cst_123 {dimension_numbers = #tpu.dot_dimension_numbers<[1], [0], [0], [1], [0, 0, 1, 1], [], []>} : vector<4x64xf32>, vector<64x128xf32>, vector<4x128xf32> -> vector<4x128xf32>
    %240 = arith.addf %238, %239 : vector<4x128xf32>
    %241 = vector.extract_strided_slice %240 {offsets = [0, 0], sizes = [4, 96], strides = [1, 1]} : vector<4x128xf32> to vector<4x96xf32>
    %cst_124 = arith.constant 5.000000e-01 : f32
    %242 = vector.broadcast %cst_124 : f32 to vector<4x96xf32>
    %243 = arith.mulf %242, %241 : vector<4x96xf32>
    %244 = math.tanh %243 : vector<4x96xf32>
    %cst_125 = arith.constant 5.000000e-01 : f32
    %245 = vector.broadcast %cst_125 : f32 to vector<4x96xf32>
    %246 = arith.mulf %245, %244 : vector<4x96xf32>
    %cst_126 = arith.constant 5.000000e-01 : f32
    %247 = vector.broadcast %cst_126 : f32 to vector<4x96xf32>
    %248 = arith.addf %246, %247 : vector<4x96xf32>
    %249 = vector.extract_strided_slice %248 {offsets = [0, 0], sizes = [4, 32], strides = [1, 1]} : vector<4x96xf32> to vector<4x32xf32>
    %250 = vector.extract_strided_slice %248 {offsets = [0, 32], sizes = [4, 32], strides = [1, 1]} : vector<4x96xf32> to vector<4x32xf32>
    %251 = vector.extract_strided_slice %248 {offsets = [0, 64], sizes = [4, 32], strides = [1, 1]} : vector<4x96xf32> to vector<4x32xf32>
    %252 = vector.extract_strided_slice %240 {offsets = [0, 96], sizes = [4, 32], strides = [1, 1]} : vector<4x128xf32> to vector<4x32xf32>
    %253 = math.tanh %252 : vector<4x32xf32>
    %254 = arith.mulf %250, %214 : vector<4x32xf32>
    %255 = arith.mulf %249, %253 : vector<4x32xf32>
    %256 = arith.addf %254, %255 : vector<4x32xf32>
    %257 = math.tanh %256 : vector<4x32xf32>
    %258 = arith.mulf %251, %257 : vector<4x32xf32>
    %259 = vector.extract_strided_slice %258 {offsets = [0, 0], sizes = [2, 32], strides = [1, 1]} : vector<4x32xf32> to vector<2x32xf32>
    %260 = arith.index_cast %c3_i32 : i32 to index
    %c0_127 = arith.constant 0 : index
    %c0_128 = arith.constant 0 : index
    %261 = vector.load %arg15[%260, %c0_127, %c0_128] : memref<8x2x32xf32, #tpu.memory_space<vmem>>, vector<1x2x32xf32>
    %262 = vector.shape_cast %261 : vector<1x2x32xf32> to vector<2x32xf32>
    %263 = vector.shape_cast %259 : vector<2x32xf32> to vector<1x2x32xf32>
    tpu.vector_store %arg15[%260, %c0_127, %c0_128], %263 {strides = array<i32>} : memref<8x2x32xf32, #tpu.memory_space<vmem>>, vector<1x2x32xf32>,
    %264 = vector.extract_strided_slice %258 {offsets = [2, 0], sizes = [2, 32], strides = [1, 1]} : vector<4x32xf32> to vector<2x32xf32>
    %c7_i32_129 = arith.constant 7 : i32
    %265 = arith.subi %c7_i32_129, %c3_i32 : i32
    %266 = arith.index_cast %265 : i32 to index
    %c0_130 = arith.constant 0 : index
    %c0_131 = arith.constant 0 : index
    %267 = vector.load %arg16[%266, %c0_130, %c0_131] : memref<8x2x32xf32, #tpu.memory_space<vmem>>, vector<1x2x32xf32>
    %268 = vector.shape_cast %267 : vector<1x2x32xf32> to vector<2x32xf32>
    %269 = vector.shape_cast %264 : vector<2x32xf32> to vector<1x2x32xf32>
    tpu.vector_store %arg16[%266, %c0_130, %c0_131], %269 {strides = array<i32>} : memref<8x2x32xf32, #tpu.memory_space<vmem>>, vector<1x2x32xf32>,
    %270 = tpu.concatenate %258, %258 in 1 : vector<4x32xf32>, vector<4x32xf32> -> vector<4x64xf32>
    %cst_132 = arith.constant 0.000000e+00 : f32
    %271 = vector.broadcast %cst_132 : f32 to vector<4x64xf32>
    %272 = arith.select %7, %270, %271 : vector<4x64xi1>, vector<4x64xf32>
    %c4_i32 = arith.constant 4 : i32
    %273 = arith.index_cast %c4_i32 : i32 to index
    %c0_133 = arith.constant 0 : index
    %c0_134 = arith.constant 0 : index
    %274 = vector.load %arg13[%273, %c0_133, %c0_134] : memref<8x2x128xf32, #tpu.memory_space<vmem>>, vector<1x2x128xf32>
    %275 = vector.shape_cast %274 : vector<1x2x128xf32> to vector<2x128xf32>
    %c7_i32_135 = arith.constant 7 : i32
    %276 = arith.subi %c7_i32_135, %c4_i32 : i32
    %277 = arith.index_cast %276 : i32 to index
    %c0_136 = arith.constant 0 : index
    %c0_137 = arith.constant 0 : index
    %278 = vector.load %arg14[%277, %c0_136, %c0_137] : memref<8x2x128xf32, #tpu.memory_space<vmem>>, vector<1x2x128xf32>
    %279 = vector.shape_cast %278 : vector<1x2x128xf32> to vector<2x128xf32>
    %280 = tpu.concatenate %275, %279 in 0 : vector<2x128xf32>, vector<2x128xf32> -> vector<4x128xf32>
    %cst_138 = arith.constant dense<0.000000e+00> : vector<4x128xf32>
    %281 = tpu.matmul %272, %102, %cst_138 {dimension_numbers = #tpu.dot_dimension_numbers<[1], [0], [0], [1], [0, 0, 1, 1], [], []>} : vector<4x64xf32>, vector<64x128xf32>, vector<4x128xf32> -> vector<4x128xf32>
    %282 = arith.addf %280, %281 : vector<4x128xf32>
    %283 = vector.extract_strided_slice %282 {offsets = [0, 0], sizes = [4, 96], strides = [1, 1]} : vector<4x128xf32> to vector<4x96xf32>
    %cst_139 = arith.constant 5.000000e-01 : f32
    %284 = vector.broadcast %cst_139 : f32 to vector<4x96xf32>
    %285 = arith.mulf %284, %283 : vector<4x96xf32>
    %286 = math.tanh %285 : vector<4x96xf32>
    %cst_140 = arith.constant 5.000000e-01 : f32
    %287 = vector.broadcast %cst_140 : f32 to vector<4x96xf32>
    %288 = arith.mulf %287, %286 : vector<4x96xf32>
    %cst_141 = arith.constant 5.000000e-01 : f32
    %289 = vector.broadcast %cst_141 : f32 to vector<4x96xf32>
    %290 = arith.addf %288, %289 : vector<4x96xf32>
    %291 = vector.extract_strided_slice %290 {offsets = [0, 0], sizes = [4, 32], strides = [1, 1]} : vector<4x96xf32> to vector<4x32xf32>
    %292 = vector.extract_strided_slice %290 {offsets = [0, 32], sizes = [4, 32], strides = [1, 1]} : vector<4x96xf32> to vector<4x32xf32>
    %293 = vector.extract_strided_slice %290 {offsets = [0, 64], sizes = [4, 32], strides = [1, 1]} : vector<4x96xf32> to vector<4x32xf32>
    %294 = vector.extract_strided_slice %282 {offsets = [0, 96], sizes = [4, 32], strides = [1, 1]} : vector<4x128xf32> to vector<4x32xf32>
    %295 = math.tanh %294 : vector<4x32xf32>
    %296 = arith.mulf %292, %256 : vector<4x32xf32>
    %297 = arith.mulf %291, %295 : vector<4x32xf32>
    %298 = arith.addf %296, %297 : vector<4x32xf32>
    %299 = math.tanh %298 : vector<4x32xf32>
    %300 = arith.mulf %293, %299 : vector<4x32xf32>
    %301 = vector.extract_strided_slice %300 {offsets = [0, 0], sizes = [2, 32], strides = [1, 1]} : vector<4x32xf32> to vector<2x32xf32>
    %302 = arith.index_cast %c4_i32 : i32 to index
    %c0_142 = arith.constant 0 : index
    %c0_143 = arith.constant 0 : index
    %303 = vector.load %arg15[%302, %c0_142, %c0_143] : memref<8x2x32xf32, #tpu.memory_space<vmem>>, vector<1x2x32xf32>
    %304 = vector.shape_cast %303 : vector<1x2x32xf32> to vector<2x32xf32>
    %305 = vector.shape_cast %301 : vector<2x32xf32> to vector<1x2x32xf32>
    tpu.vector_store %arg15[%302, %c0_142, %c0_143], %305 {strides = array<i32>} : memref<8x2x32xf32, #tpu.memory_space<vmem>>, vector<1x2x32xf32>,
    %306 = vector.extract_strided_slice %300 {offsets = [2, 0], sizes = [2, 32], strides = [1, 1]} : vector<4x32xf32> to vector<2x32xf32>
    %c7_i32_144 = arith.constant 7 : i32
    %307 = arith.subi %c7_i32_144, %c4_i32 : i32
    %308 = arith.index_cast %307 : i32 to index
    %c0_145 = arith.constant 0 : index
    %c0_146 = arith.constant 0 : index
    %309 = vector.load %arg16[%308, %c0_145, %c0_146] : memref<8x2x32xf32, #tpu.memory_space<vmem>>, vector<1x2x32xf32>
    %310 = vector.shape_cast %309 : vector<1x2x32xf32> to vector<2x32xf32>
    %311 = vector.shape_cast %306 : vector<2x32xf32> to vector<1x2x32xf32>
    tpu.vector_store %arg16[%308, %c0_145, %c0_146], %311 {strides = array<i32>} : memref<8x2x32xf32, #tpu.memory_space<vmem>>, vector<1x2x32xf32>,
    %312 = tpu.concatenate %300, %300 in 1 : vector<4x32xf32>, vector<4x32xf32> -> vector<4x64xf32>
    %cst_147 = arith.constant 0.000000e+00 : f32
    %313 = vector.broadcast %cst_147 : f32 to vector<4x64xf32>
    %314 = arith.select %7, %312, %313 : vector<4x64xi1>, vector<4x64xf32>
    %c5_i32 = arith.constant 5 : i32
    %315 = arith.index_cast %c5_i32 : i32 to index
    %c0_148 = arith.constant 0 : index
    %c0_149 = arith.constant 0 : index
    %316 = vector.load %arg13[%315, %c0_148, %c0_149] : memref<8x2x128xf32, #tpu.memory_space<vmem>>, vector<1x2x128xf32>
    %317 = vector.shape_cast %316 : vector<1x2x128xf32> to vector<2x128xf32>
    %c7_i32_150 = arith.constant 7 : i32
    %318 = arith.subi %c7_i32_150, %c5_i32 : i32
    %319 = arith.index_cast %318 : i32 to index
    %c0_151 = arith.constant 0 : index
    %c0_152 = arith.constant 0 : index
    %320 = vector.load %arg14[%319, %c0_151, %c0_152] : memref<8x2x128xf32, #tpu.memory_space<vmem>>, vector<1x2x128xf32>
    %321 = vector.shape_cast %320 : vector<1x2x128xf32> to vector<2x128xf32>
    %322 = tpu.concatenate %317, %321 in 0 : vector<2x128xf32>, vector<2x128xf32> -> vector<4x128xf32>
    %cst_153 = arith.constant dense<0.000000e+00> : vector<4x128xf32>
    %323 = tpu.matmul %314, %102, %cst_153 {dimension_numbers = #tpu.dot_dimension_numbers<[1], [0], [0], [1], [0, 0, 1, 1], [], []>} : vector<4x64xf32>, vector<64x128xf32>, vector<4x128xf32> -> vector<4x128xf32>
    %324 = arith.addf %322, %323 : vector<4x128xf32>
    %325 = vector.extract_strided_slice %324 {offsets = [0, 0], sizes = [4, 96], strides = [1, 1]} : vector<4x128xf32> to vector<4x96xf32>
    %cst_154 = arith.constant 5.000000e-01 : f32
    %326 = vector.broadcast %cst_154 : f32 to vector<4x96xf32>
    %327 = arith.mulf %326, %325 : vector<4x96xf32>
    %328 = math.tanh %327 : vector<4x96xf32>
    %cst_155 = arith.constant 5.000000e-01 : f32
    %329 = vector.broadcast %cst_155 : f32 to vector<4x96xf32>
    %330 = arith.mulf %329, %328 : vector<4x96xf32>
    %cst_156 = arith.constant 5.000000e-01 : f32
    %331 = vector.broadcast %cst_156 : f32 to vector<4x96xf32>
    %332 = arith.addf %330, %331 : vector<4x96xf32>
    %333 = vector.extract_strided_slice %332 {offsets = [0, 0], sizes = [4, 32], strides = [1, 1]} : vector<4x96xf32> to vector<4x32xf32>
    %334 = vector.extract_strided_slice %332 {offsets = [0, 32], sizes = [4, 32], strides = [1, 1]} : vector<4x96xf32> to vector<4x32xf32>
    %335 = vector.extract_strided_slice %332 {offsets = [0, 64], sizes = [4, 32], strides = [1, 1]} : vector<4x96xf32> to vector<4x32xf32>
    %336 = vector.extract_strided_slice %324 {offsets = [0, 96], sizes = [4, 32], strides = [1, 1]} : vector<4x128xf32> to vector<4x32xf32>
    %337 = math.tanh %336 : vector<4x32xf32>
    %338 = arith.mulf %334, %298 : vector<4x32xf32>
    %339 = arith.mulf %333, %337 : vector<4x32xf32>
    %340 = arith.addf %338, %339 : vector<4x32xf32>
    %341 = math.tanh %340 : vector<4x32xf32>
    %342 = arith.mulf %335, %341 : vector<4x32xf32>
    %343 = vector.extract_strided_slice %342 {offsets = [0, 0], sizes = [2, 32], strides = [1, 1]} : vector<4x32xf32> to vector<2x32xf32>
    %344 = arith.index_cast %c5_i32 : i32 to index
    %c0_157 = arith.constant 0 : index
    %c0_158 = arith.constant 0 : index
    %345 = vector.load %arg15[%344, %c0_157, %c0_158] : memref<8x2x32xf32, #tpu.memory_space<vmem>>, vector<1x2x32xf32>
    %346 = vector.shape_cast %345 : vector<1x2x32xf32> to vector<2x32xf32>
    %347 = vector.shape_cast %343 : vector<2x32xf32> to vector<1x2x32xf32>
    tpu.vector_store %arg15[%344, %c0_157, %c0_158], %347 {strides = array<i32>} : memref<8x2x32xf32, #tpu.memory_space<vmem>>, vector<1x2x32xf32>,
    %348 = vector.extract_strided_slice %342 {offsets = [2, 0], sizes = [2, 32], strides = [1, 1]} : vector<4x32xf32> to vector<2x32xf32>
    %c7_i32_159 = arith.constant 7 : i32
    %349 = arith.subi %c7_i32_159, %c5_i32 : i32
    %350 = arith.index_cast %349 : i32 to index
    %c0_160 = arith.constant 0 : index
    %c0_161 = arith.constant 0 : index
    %351 = vector.load %arg16[%350, %c0_160, %c0_161] : memref<8x2x32xf32, #tpu.memory_space<vmem>>, vector<1x2x32xf32>
    %352 = vector.shape_cast %351 : vector<1x2x32xf32> to vector<2x32xf32>
    %353 = vector.shape_cast %348 : vector<2x32xf32> to vector<1x2x32xf32>
    tpu.vector_store %arg16[%350, %c0_160, %c0_161], %353 {strides = array<i32>} : memref<8x2x32xf32, #tpu.memory_space<vmem>>, vector<1x2x32xf32>,
    %354 = tpu.concatenate %342, %342 in 1 : vector<4x32xf32>, vector<4x32xf32> -> vector<4x64xf32>
    %cst_162 = arith.constant 0.000000e+00 : f32
    %355 = vector.broadcast %cst_162 : f32 to vector<4x64xf32>
    %356 = arith.select %7, %354, %355 : vector<4x64xi1>, vector<4x64xf32>
    %c6_i32 = arith.constant 6 : i32
    %357 = arith.index_cast %c6_i32 : i32 to index
    %c0_163 = arith.constant 0 : index
    %c0_164 = arith.constant 0 : index
    %358 = vector.load %arg13[%357, %c0_163, %c0_164] : memref<8x2x128xf32, #tpu.memory_space<vmem>>, vector<1x2x128xf32>
    %359 = vector.shape_cast %358 : vector<1x2x128xf32> to vector<2x128xf32>
    %c7_i32_165 = arith.constant 7 : i32
    %360 = arith.subi %c7_i32_165, %c6_i32 : i32
    %361 = arith.index_cast %360 : i32 to index
    %c0_166 = arith.constant 0 : index
    %c0_167 = arith.constant 0 : index
    %362 = vector.load %arg14[%361, %c0_166, %c0_167] : memref<8x2x128xf32, #tpu.memory_space<vmem>>, vector<1x2x128xf32>
    %363 = vector.shape_cast %362 : vector<1x2x128xf32> to vector<2x128xf32>
    %364 = tpu.concatenate %359, %363 in 0 : vector<2x128xf32>, vector<2x128xf32> -> vector<4x128xf32>
    %cst_168 = arith.constant dense<0.000000e+00> : vector<4x128xf32>
    %365 = tpu.matmul %356, %102, %cst_168 {dimension_numbers = #tpu.dot_dimension_numbers<[1], [0], [0], [1], [0, 0, 1, 1], [], []>} : vector<4x64xf32>, vector<64x128xf32>, vector<4x128xf32> -> vector<4x128xf32>
    %366 = arith.addf %364, %365 : vector<4x128xf32>
    %367 = vector.extract_strided_slice %366 {offsets = [0, 0], sizes = [4, 96], strides = [1, 1]} : vector<4x128xf32> to vector<4x96xf32>
    %cst_169 = arith.constant 5.000000e-01 : f32
    %368 = vector.broadcast %cst_169 : f32 to vector<4x96xf32>
    %369 = arith.mulf %368, %367 : vector<4x96xf32>
    %370 = math.tanh %369 : vector<4x96xf32>
    %cst_170 = arith.constant 5.000000e-01 : f32
    %371 = vector.broadcast %cst_170 : f32 to vector<4x96xf32>
    %372 = arith.mulf %371, %370 : vector<4x96xf32>
    %cst_171 = arith.constant 5.000000e-01 : f32
    %373 = vector.broadcast %cst_171 : f32 to vector<4x96xf32>
    %374 = arith.addf %372, %373 : vector<4x96xf32>
    %375 = vector.extract_strided_slice %374 {offsets = [0, 0], sizes = [4, 32], strides = [1, 1]} : vector<4x96xf32> to vector<4x32xf32>
    %376 = vector.extract_strided_slice %374 {offsets = [0, 32], sizes = [4, 32], strides = [1, 1]} : vector<4x96xf32> to vector<4x32xf32>
    %377 = vector.extract_strided_slice %374 {offsets = [0, 64], sizes = [4, 32], strides = [1, 1]} : vector<4x96xf32> to vector<4x32xf32>
    %378 = vector.extract_strided_slice %366 {offsets = [0, 96], sizes = [4, 32], strides = [1, 1]} : vector<4x128xf32> to vector<4x32xf32>
    %379 = math.tanh %378 : vector<4x32xf32>
    %380 = arith.mulf %376, %340 : vector<4x32xf32>
    %381 = arith.mulf %375, %379 : vector<4x32xf32>
    %382 = arith.addf %380, %381 : vector<4x32xf32>
    %383 = math.tanh %382 : vector<4x32xf32>
    %384 = arith.mulf %377, %383 : vector<4x32xf32>
    %385 = vector.extract_strided_slice %384 {offsets = [0, 0], sizes = [2, 32], strides = [1, 1]} : vector<4x32xf32> to vector<2x32xf32>
    %386 = arith.index_cast %c6_i32 : i32 to index
    %c0_172 = arith.constant 0 : index
    %c0_173 = arith.constant 0 : index
    %387 = vector.load %arg15[%386, %c0_172, %c0_173] : memref<8x2x32xf32, #tpu.memory_space<vmem>>, vector<1x2x32xf32>
    %388 = vector.shape_cast %387 : vector<1x2x32xf32> to vector<2x32xf32>
    %389 = vector.shape_cast %385 : vector<2x32xf32> to vector<1x2x32xf32>
    tpu.vector_store %arg15[%386, %c0_172, %c0_173], %389 {strides = array<i32>} : memref<8x2x32xf32, #tpu.memory_space<vmem>>, vector<1x2x32xf32>,
    %390 = vector.extract_strided_slice %384 {offsets = [2, 0], sizes = [2, 32], strides = [1, 1]} : vector<4x32xf32> to vector<2x32xf32>
    %c7_i32_174 = arith.constant 7 : i32
    %391 = arith.subi %c7_i32_174, %c6_i32 : i32
    %392 = arith.index_cast %391 : i32 to index
    %c0_175 = arith.constant 0 : index
    %c0_176 = arith.constant 0 : index
    %393 = vector.load %arg16[%392, %c0_175, %c0_176] : memref<8x2x32xf32, #tpu.memory_space<vmem>>, vector<1x2x32xf32>
    %394 = vector.shape_cast %393 : vector<1x2x32xf32> to vector<2x32xf32>
    %395 = vector.shape_cast %390 : vector<2x32xf32> to vector<1x2x32xf32>
    tpu.vector_store %arg16[%392, %c0_175, %c0_176], %395 {strides = array<i32>} : memref<8x2x32xf32, #tpu.memory_space<vmem>>, vector<1x2x32xf32>,
    %396 = tpu.concatenate %384, %384 in 1 : vector<4x32xf32>, vector<4x32xf32> -> vector<4x64xf32>
    %cst_177 = arith.constant 0.000000e+00 : f32
    %397 = vector.broadcast %cst_177 : f32 to vector<4x64xf32>
    %398 = arith.select %7, %396, %397 : vector<4x64xi1>, vector<4x64xf32>
    %c7_i32_178 = arith.constant 7 : i32
    %399 = arith.index_cast %c7_i32_178 : i32 to index
    %c0_179 = arith.constant 0 : index
    %c0_180 = arith.constant 0 : index
    %400 = vector.load %arg13[%399, %c0_179, %c0_180] : memref<8x2x128xf32, #tpu.memory_space<vmem>>, vector<1x2x128xf32>
    %401 = vector.shape_cast %400 : vector<1x2x128xf32> to vector<2x128xf32>
    %c7_i32_181 = arith.constant 7 : i32
    %402 = arith.subi %c7_i32_181, %c7_i32_178 : i32
    %403 = arith.index_cast %402 : i32 to index
    %c0_182 = arith.constant 0 : index
    %c0_183 = arith.constant 0 : index
    %404 = vector.load %arg14[%403, %c0_182, %c0_183] : memref<8x2x128xf32, #tpu.memory_space<vmem>>, vector<1x2x128xf32>
    %405 = vector.shape_cast %404 : vector<1x2x128xf32> to vector<2x128xf32>
    %406 = tpu.concatenate %401, %405 in 0 : vector<2x128xf32>, vector<2x128xf32> -> vector<4x128xf32>
    %cst_184 = arith.constant dense<0.000000e+00> : vector<4x128xf32>
    %407 = tpu.matmul %398, %102, %cst_184 {dimension_numbers = #tpu.dot_dimension_numbers<[1], [0], [0], [1], [0, 0, 1, 1], [], []>} : vector<4x64xf32>, vector<64x128xf32>, vector<4x128xf32> -> vector<4x128xf32>
    %408 = arith.addf %406, %407 : vector<4x128xf32>
    %409 = vector.extract_strided_slice %408 {offsets = [0, 0], sizes = [4, 96], strides = [1, 1]} : vector<4x128xf32> to vector<4x96xf32>
    %cst_185 = arith.constant 5.000000e-01 : f32
    %410 = vector.broadcast %cst_185 : f32 to vector<4x96xf32>
    %411 = arith.mulf %410, %409 : vector<4x96xf32>
    %412 = math.tanh %411 : vector<4x96xf32>
    %cst_186 = arith.constant 5.000000e-01 : f32
    %413 = vector.broadcast %cst_186 : f32 to vector<4x96xf32>
    %414 = arith.mulf %413, %412 : vector<4x96xf32>
    %cst_187 = arith.constant 5.000000e-01 : f32
    %415 = vector.broadcast %cst_187 : f32 to vector<4x96xf32>
    %416 = arith.addf %414, %415 : vector<4x96xf32>
    %417 = vector.extract_strided_slice %416 {offsets = [0, 0], sizes = [4, 32], strides = [1, 1]} : vector<4x96xf32> to vector<4x32xf32>
    %418 = vector.extract_strided_slice %416 {offsets = [0, 32], sizes = [4, 32], strides = [1, 1]} : vector<4x96xf32> to vector<4x32xf32>
    %419 = vector.extract_strided_slice %416 {offsets = [0, 64], sizes = [4, 32], strides = [1, 1]} : vector<4x96xf32> to vector<4x32xf32>
    %420 = vector.extract_strided_slice %408 {offsets = [0, 96], sizes = [4, 32], strides = [1, 1]} : vector<4x128xf32> to vector<4x32xf32>
    %421 = math.tanh %420 : vector<4x32xf32>
    %422 = arith.mulf %418, %382 : vector<4x32xf32>
    %423 = arith.mulf %417, %421 : vector<4x32xf32>
    %424 = arith.addf %422, %423 : vector<4x32xf32>
    %425 = math.tanh %424 : vector<4x32xf32>
    %426 = arith.mulf %419, %425 : vector<4x32xf32>
    %427 = vector.extract_strided_slice %426 {offsets = [0, 0], sizes = [2, 32], strides = [1, 1]} : vector<4x32xf32> to vector<2x32xf32>
    %428 = arith.index_cast %c7_i32_178 : i32 to index
    %c0_188 = arith.constant 0 : index
    %c0_189 = arith.constant 0 : index
    %429 = vector.load %arg15[%428, %c0_188, %c0_189] : memref<8x2x32xf32, #tpu.memory_space<vmem>>, vector<1x2x32xf32>
    %430 = vector.shape_cast %429 : vector<1x2x32xf32> to vector<2x32xf32>
    %431 = vector.shape_cast %427 : vector<2x32xf32> to vector<1x2x32xf32>
    tpu.vector_store %arg15[%428, %c0_188, %c0_189], %431 {strides = array<i32>} : memref<8x2x32xf32, #tpu.memory_space<vmem>>, vector<1x2x32xf32>,
    %432 = vector.extract_strided_slice %426 {offsets = [2, 0], sizes = [2, 32], strides = [1, 1]} : vector<4x32xf32> to vector<2x32xf32>
    %c7_i32_190 = arith.constant 7 : i32
    %433 = arith.subi %c7_i32_190, %c7_i32_178 : i32
    %434 = arith.index_cast %433 : i32 to index
    %c0_191 = arith.constant 0 : index
    %c0_192 = arith.constant 0 : index
    %435 = vector.load %arg16[%434, %c0_191, %c0_192] : memref<8x2x32xf32, #tpu.memory_space<vmem>>, vector<1x2x32xf32>
    %436 = vector.shape_cast %435 : vector<1x2x32xf32> to vector<2x32xf32>
    %437 = vector.shape_cast %432 : vector<2x32xf32> to vector<1x2x32xf32>
    tpu.vector_store %arg16[%434, %c0_191, %c0_192], %437 {strides = array<i32>} : memref<8x2x32xf32, #tpu.memory_space<vmem>>, vector<1x2x32xf32>,
    %438 = tpu.concatenate %426, %426 in 1 : vector<4x32xf32>, vector<4x32xf32> -> vector<4x64xf32>
    %cst_193 = arith.constant 0.000000e+00 : f32
    %439 = vector.broadcast %cst_193 : f32 to vector<4x64xf32>
    %440 = arith.select %7, %438, %439 : vector<4x64xi1>, vector<4x64xf32>
    %c8_i32 = arith.constant 8 : i32
    %c0_194 = arith.constant 0 : index
    %c0_195 = arith.constant 0 : index
    %c0_196 = arith.constant 0 : index
    %441 = vector.load %arg15[%c0_194, %c0_195, %c0_196] : memref<8x2x32xf32, #tpu.memory_space<vmem>>, vector<1x2x32xf32>
    %442 = vector.shape_cast %441 : vector<1x2x32xf32> to vector<2x32xf32>
    %c0_197 = arith.constant 0 : index
    %c0_198 = arith.constant 0 : index
    %c0_199 = arith.constant 0 : index
    %443 = vector.load %arg16[%c0_197, %c0_198, %c0_199] : memref<8x2x32xf32, #tpu.memory_space<vmem>>, vector<1x2x32xf32>
    %444 = vector.shape_cast %443 : vector<1x2x32xf32> to vector<2x32xf32>
    %445 = tpu.concatenate %442, %444 in 1 : vector<2x32xf32>, vector<2x32xf32> -> vector<2x64xf32>
    %c1_200 = arith.constant 1 : index
    %c0_201 = arith.constant 0 : index
    %c0_202 = arith.constant 0 : index
    %446 = vector.load %arg15[%c1_200, %c0_201, %c0_202] : memref<8x2x32xf32, #tpu.memory_space<vmem>>, vector<1x2x32xf32>
    %447 = vector.shape_cast %446 : vector<1x2x32xf32> to vector<2x32xf32>
    %c1_203 = arith.constant 1 : index
    %c0_204 = arith.constant 0 : index
    %c0_205 = arith.constant 0 : index
    %448 = vector.load %arg16[%c1_203, %c0_204, %c0_205] : memref<8x2x32xf32, #tpu.memory_space<vmem>>, vector<1x2x32xf32>
    %449 = vector.shape_cast %448 : vector<1x2x32xf32> to vector<2x32xf32>
    %450 = tpu.concatenate %447, %449 in 1 : vector<2x32xf32>, vector<2x32xf32> -> vector<2x64xf32>
    %c2_206 = arith.constant 2 : index
    %c0_207 = arith.constant 0 : index
    %c0_208 = arith.constant 0 : index
    %451 = vector.load %arg15[%c2_206, %c0_207, %c0_208] : memref<8x2x32xf32, #tpu.memory_space<vmem>>, vector<1x2x32xf32>
    %452 = vector.shape_cast %451 : vector<1x2x32xf32> to vector<2x32xf32>
    %c2_209 = arith.constant 2 : index
    %c0_210 = arith.constant 0 : index
    %c0_211 = arith.constant 0 : index
    %453 = vector.load %arg16[%c2_209, %c0_210, %c0_211] : memref<8x2x32xf32, #tpu.memory_space<vmem>>, vector<1x2x32xf32>
    %454 = vector.shape_cast %453 : vector<1x2x32xf32> to vector<2x32xf32>
    %455 = tpu.concatenate %452, %454 in 1 : vector<2x32xf32>, vector<2x32xf32> -> vector<2x64xf32>
    %c3_212 = arith.constant 3 : index
    %c0_213 = arith.constant 0 : index
    %c0_214 = arith.constant 0 : index
    %456 = vector.load %arg15[%c3_212, %c0_213, %c0_214] : memref<8x2x32xf32, #tpu.memory_space<vmem>>, vector<1x2x32xf32>
    %457 = vector.shape_cast %456 : vector<1x2x32xf32> to vector<2x32xf32>
    %c3_215 = arith.constant 3 : index
    %c0_216 = arith.constant 0 : index
    %c0_217 = arith.constant 0 : index
    %458 = vector.load %arg16[%c3_215, %c0_216, %c0_217] : memref<8x2x32xf32, #tpu.memory_space<vmem>>, vector<1x2x32xf32>
    %459 = vector.shape_cast %458 : vector<1x2x32xf32> to vector<2x32xf32>
    %460 = tpu.concatenate %457, %459 in 1 : vector<2x32xf32>, vector<2x32xf32> -> vector<2x64xf32>
    %c4_218 = arith.constant 4 : index
    %c0_219 = arith.constant 0 : index
    %c0_220 = arith.constant 0 : index
    %461 = vector.load %arg15[%c4_218, %c0_219, %c0_220] : memref<8x2x32xf32, #tpu.memory_space<vmem>>, vector<1x2x32xf32>
    %462 = vector.shape_cast %461 : vector<1x2x32xf32> to vector<2x32xf32>
    %c4_221 = arith.constant 4 : index
    %c0_222 = arith.constant 0 : index
    %c0_223 = arith.constant 0 : index
    %463 = vector.load %arg16[%c4_221, %c0_222, %c0_223] : memref<8x2x32xf32, #tpu.memory_space<vmem>>, vector<1x2x32xf32>
    %464 = vector.shape_cast %463 : vector<1x2x32xf32> to vector<2x32xf32>
    %465 = tpu.concatenate %462, %464 in 1 : vector<2x32xf32>, vector<2x32xf32> -> vector<2x64xf32>
    %c5_224 = arith.constant 5 : index
    %c0_225 = arith.constant 0 : index
    %c0_226 = arith.constant 0 : index
    %466 = vector.load %arg15[%c5_224, %c0_225, %c0_226] : memref<8x2x32xf32, #tpu.memory_space<vmem>>, vector<1x2x32xf32>
    %467 = vector.shape_cast %466 : vector<1x2x32xf32> to vector<2x32xf32>
    %c5_227 = arith.constant 5 : index
    %c0_228 = arith.constant 0 : index
    %c0_229 = arith.constant 0 : index
    %468 = vector.load %arg16[%c5_227, %c0_228, %c0_229] : memref<8x2x32xf32, #tpu.memory_space<vmem>>, vector<1x2x32xf32>
    %469 = vector.shape_cast %468 : vector<1x2x32xf32> to vector<2x32xf32>
    %470 = tpu.concatenate %467, %469 in 1 : vector<2x32xf32>, vector<2x32xf32> -> vector<2x64xf32>
    %c6_230 = arith.constant 6 : index
    %c0_231 = arith.constant 0 : index
    %c0_232 = arith.constant 0 : index
    %471 = vector.load %arg15[%c6_230, %c0_231, %c0_232] : memref<8x2x32xf32, #tpu.memory_space<vmem>>, vector<1x2x32xf32>
    %472 = vector.shape_cast %471 : vector<1x2x32xf32> to vector<2x32xf32>
    %c6_233 = arith.constant 6 : index
    %c0_234 = arith.constant 0 : index
    %c0_235 = arith.constant 0 : index
    %473 = vector.load %arg16[%c6_233, %c0_234, %c0_235] : memref<8x2x32xf32, #tpu.memory_space<vmem>>, vector<1x2x32xf32>
    %474 = vector.shape_cast %473 : vector<1x2x32xf32> to vector<2x32xf32>
    %475 = tpu.concatenate %472, %474 in 1 : vector<2x32xf32>, vector<2x32xf32> -> vector<2x64xf32>
    %c7_236 = arith.constant 7 : index
    %c0_237 = arith.constant 0 : index
    %c0_238 = arith.constant 0 : index
    %476 = vector.load %arg15[%c7_236, %c0_237, %c0_238] : memref<8x2x32xf32, #tpu.memory_space<vmem>>, vector<1x2x32xf32>
    %477 = vector.shape_cast %476 : vector<1x2x32xf32> to vector<2x32xf32>
    %c7_239 = arith.constant 7 : index
    %c0_240 = arith.constant 0 : index
    %c0_241 = arith.constant 0 : index
    %478 = vector.load %arg16[%c7_239, %c0_240, %c0_241] : memref<8x2x32xf32, #tpu.memory_space<vmem>>, vector<1x2x32xf32>
    %479 = vector.shape_cast %478 : vector<1x2x32xf32> to vector<2x32xf32>
    %480 = tpu.concatenate %477, %479 in 1 : vector<2x32xf32>, vector<2x32xf32> -> vector<2x64xf32>
    %481 = tpu.concatenate %445, %450, %455, %460, %465, %470, %475, %480 in 0 : vector<2x64xf32>, vector<2x64xf32>, vector<2x64xf32>, vector<2x64xf32>, vector<2x64xf32>, vector<2x64xf32>, vector<2x64xf32>, vector<2x64xf32> -> vector<16x64xf32>
    %c0_242 = arith.constant 0 : index
    %c0_243 = arith.constant 0 : index
    %482 = vector.load %arg4[%c0_242, %c0_243] : memref<64x256xf32, #tpu.memory_space<vmem>>, vector<64x256xf32>
    %cst_244 = arith.constant dense<0.000000e+00> : vector<16x256xf32>
    %483 = tpu.matmul %481, %482, %cst_244 {dimension_numbers = #tpu.dot_dimension_numbers<[1], [0], [0], [1], [0, 0, 1, 1], [], []>} : vector<16x64xf32>, vector<64x256xf32>, vector<16x256xf32> -> vector<16x256xf32>
    %c0_245 = arith.constant 0 : index
    %c0_246 = arith.constant 0 : index
    %484 = vector.load %arg6[%c0_245, %c0_246] : memref<1x256xf32, #tpu.memory_space<vmem>>, vector<1x256xf32>
    %485 = vector.broadcast %484 : vector<1x256xf32> to vector<16x256xf32>
    %486 = arith.addf %483, %485 : vector<16x256xf32>
    %487 = vector.extract_strided_slice %486 {offsets = [0, 0], sizes = [2, 256], strides = [1, 1]} : vector<16x256xf32> to vector<2x256xf32>
    %488 = vector.extract_strided_slice %487 {offsets = [0, 0], sizes = [2, 128], strides = [1, 1]} : vector<2x256xf32> to vector<2x128xf32>
    %c0_247 = arith.constant 0 : index
    %c0_248 = arith.constant 0 : index
    %c0_249 = arith.constant 0 : index
    %489 = vector.load %arg13[%c0_247, %c0_248, %c0_249] : memref<8x2x128xf32, #tpu.memory_space<vmem>>, vector<1x2x128xf32>
    %490 = vector.shape_cast %489 : vector<1x2x128xf32> to vector<2x128xf32>
    %491 = vector.shape_cast %488 : vector<2x128xf32> to vector<1x2x128xf32>
    tpu.vector_store %arg13[%c0_247, %c0_248, %c0_249], %491 {strides = array<i32>} : memref<8x2x128xf32, #tpu.memory_space<vmem>>, vector<1x2x128xf32>,
    %492 = vector.extract_strided_slice %487 {offsets = [0, 128], sizes = [2, 128], strides = [1, 1]} : vector<2x256xf32> to vector<2x128xf32>
    %c0_250 = arith.constant 0 : index
    %c0_251 = arith.constant 0 : index
    %c0_252 = arith.constant 0 : index
    %493 = vector.load %arg14[%c0_250, %c0_251, %c0_252] : memref<8x2x128xf32, #tpu.memory_space<vmem>>, vector<1x2x128xf32>
    %494 = vector.shape_cast %493 : vector<1x2x128xf32> to vector<2x128xf32>
    %495 = vector.shape_cast %492 : vector<2x128xf32> to vector<1x2x128xf32>
    tpu.vector_store %arg14[%c0_250, %c0_251, %c0_252], %495 {strides = array<i32>} : memref<8x2x128xf32, #tpu.memory_space<vmem>>, vector<1x2x128xf32>,
    %496 = vector.extract_strided_slice %486 {offsets = [2, 0], sizes = [2, 256], strides = [1, 1]} : vector<16x256xf32> to vector<2x256xf32>
    %497 = vector.extract_strided_slice %496 {offsets = [0, 0], sizes = [2, 128], strides = [1, 1]} : vector<2x256xf32> to vector<2x128xf32>
    %c1_253 = arith.constant 1 : index
    %c0_254 = arith.constant 0 : index
    %c0_255 = arith.constant 0 : index
    %498 = vector.load %arg13[%c1_253, %c0_254, %c0_255] : memref<8x2x128xf32, #tpu.memory_space<vmem>>, vector<1x2x128xf32>
    %499 = vector.shape_cast %498 : vector<1x2x128xf32> to vector<2x128xf32>
    %500 = vector.shape_cast %497 : vector<2x128xf32> to vector<1x2x128xf32>
    tpu.vector_store %arg13[%c1_253, %c0_254, %c0_255], %500 {strides = array<i32>} : memref<8x2x128xf32, #tpu.memory_space<vmem>>, vector<1x2x128xf32>,
    %501 = vector.extract_strided_slice %496 {offsets = [0, 128], sizes = [2, 128], strides = [1, 1]} : vector<2x256xf32> to vector<2x128xf32>
    %c1_256 = arith.constant 1 : index
    %c0_257 = arith.constant 0 : index
    %c0_258 = arith.constant 0 : index
    %502 = vector.load %arg14[%c1_256, %c0_257, %c0_258] : memref<8x2x128xf32, #tpu.memory_space<vmem>>, vector<1x2x128xf32>
    %503 = vector.shape_cast %502 : vector<1x2x128xf32> to vector<2x128xf32>
    %504 = vector.shape_cast %501 : vector<2x128xf32> to vector<1x2x128xf32>
    tpu.vector_store %arg14[%c1_256, %c0_257, %c0_258], %504 {strides = array<i32>} : memref<8x2x128xf32, #tpu.memory_space<vmem>>, vector<1x2x128xf32>,
    %505 = vector.extract_strided_slice %486 {offsets = [4, 0], sizes = [2, 256], strides = [1, 1]} : vector<16x256xf32> to vector<2x256xf32>
    %506 = vector.extract_strided_slice %505 {offsets = [0, 0], sizes = [2, 128], strides = [1, 1]} : vector<2x256xf32> to vector<2x128xf32>
    %c2_259 = arith.constant 2 : index
    %c0_260 = arith.constant 0 : index
    %c0_261 = arith.constant 0 : index
    %507 = vector.load %arg13[%c2_259, %c0_260, %c0_261] : memref<8x2x128xf32, #tpu.memory_space<vmem>>, vector<1x2x128xf32>
    %508 = vector.shape_cast %507 : vector<1x2x128xf32> to vector<2x128xf32>
    %509 = vector.shape_cast %506 : vector<2x128xf32> to vector<1x2x128xf32>
    tpu.vector_store %arg13[%c2_259, %c0_260, %c0_261], %509 {strides = array<i32>} : memref<8x2x128xf32, #tpu.memory_space<vmem>>, vector<1x2x128xf32>,
    %510 = vector.extract_strided_slice %505 {offsets = [0, 128], sizes = [2, 128], strides = [1, 1]} : vector<2x256xf32> to vector<2x128xf32>
    %c2_262 = arith.constant 2 : index
    %c0_263 = arith.constant 0 : index
    %c0_264 = arith.constant 0 : index
    %511 = vector.load %arg14[%c2_262, %c0_263, %c0_264] : memref<8x2x128xf32, #tpu.memory_space<vmem>>, vector<1x2x128xf32>
    %512 = vector.shape_cast %511 : vector<1x2x128xf32> to vector<2x128xf32>
    %513 = vector.shape_cast %510 : vector<2x128xf32> to vector<1x2x128xf32>
    tpu.vector_store %arg14[%c2_262, %c0_263, %c0_264], %513 {strides = array<i32>} : memref<8x2x128xf32, #tpu.memory_space<vmem>>, vector<1x2x128xf32>,
    %514 = vector.extract_strided_slice %486 {offsets = [6, 0], sizes = [2, 256], strides = [1, 1]} : vector<16x256xf32> to vector<2x256xf32>
    %515 = vector.extract_strided_slice %514 {offsets = [0, 0], sizes = [2, 128], strides = [1, 1]} : vector<2x256xf32> to vector<2x128xf32>
    %c3_265 = arith.constant 3 : index
    %c0_266 = arith.constant 0 : index
    %c0_267 = arith.constant 0 : index
    %516 = vector.load %arg13[%c3_265, %c0_266, %c0_267] : memref<8x2x128xf32, #tpu.memory_space<vmem>>, vector<1x2x128xf32>
    %517 = vector.shape_cast %516 : vector<1x2x128xf32> to vector<2x128xf32>
    %518 = vector.shape_cast %515 : vector<2x128xf32> to vector<1x2x128xf32>
    tpu.vector_store %arg13[%c3_265, %c0_266, %c0_267], %518 {strides = array<i32>} : memref<8x2x128xf32, #tpu.memory_space<vmem>>, vector<1x2x128xf32>,
    %519 = vector.extract_strided_slice %514 {offsets = [0, 128], sizes = [2, 128], strides = [1, 1]} : vector<2x256xf32> to vector<2x128xf32>
    %c3_268 = arith.constant 3 : index
    %c0_269 = arith.constant 0 : index
    %c0_270 = arith.constant 0 : index
    %520 = vector.load %arg14[%c3_268, %c0_269, %c0_270] : memref<8x2x128xf32, #tpu.memory_space<vmem>>, vector<1x2x128xf32>
    %521 = vector.shape_cast %520 : vector<1x2x128xf32> to vector<2x128xf32>
    %522 = vector.shape_cast %519 : vector<2x128xf32> to vector<1x2x128xf32>
    tpu.vector_store %arg14[%c3_268, %c0_269, %c0_270], %522 {strides = array<i32>} : memref<8x2x128xf32, #tpu.memory_space<vmem>>, vector<1x2x128xf32>,
    %523 = vector.extract_strided_slice %486 {offsets = [8, 0], sizes = [2, 256], strides = [1, 1]} : vector<16x256xf32> to vector<2x256xf32>
    %524 = vector.extract_strided_slice %523 {offsets = [0, 0], sizes = [2, 128], strides = [1, 1]} : vector<2x256xf32> to vector<2x128xf32>
    %c4_271 = arith.constant 4 : index
    %c0_272 = arith.constant 0 : index
    %c0_273 = arith.constant 0 : index
    %525 = vector.load %arg13[%c4_271, %c0_272, %c0_273] : memref<8x2x128xf32, #tpu.memory_space<vmem>>, vector<1x2x128xf32>
    %526 = vector.shape_cast %525 : vector<1x2x128xf32> to vector<2x128xf32>
    %527 = vector.shape_cast %524 : vector<2x128xf32> to vector<1x2x128xf32>
    tpu.vector_store %arg13[%c4_271, %c0_272, %c0_273], %527 {strides = array<i32>} : memref<8x2x128xf32, #tpu.memory_space<vmem>>, vector<1x2x128xf32>,
    %528 = vector.extract_strided_slice %523 {offsets = [0, 128], sizes = [2, 128], strides = [1, 1]} : vector<2x256xf32> to vector<2x128xf32>
    %c4_274 = arith.constant 4 : index
    %c0_275 = arith.constant 0 : index
    %c0_276 = arith.constant 0 : index
    %529 = vector.load %arg14[%c4_274, %c0_275, %c0_276] : memref<8x2x128xf32, #tpu.memory_space<vmem>>, vector<1x2x128xf32>
    %530 = vector.shape_cast %529 : vector<1x2x128xf32> to vector<2x128xf32>
    %531 = vector.shape_cast %528 : vector<2x128xf32> to vector<1x2x128xf32>
    tpu.vector_store %arg14[%c4_274, %c0_275, %c0_276], %531 {strides = array<i32>} : memref<8x2x128xf32, #tpu.memory_space<vmem>>, vector<1x2x128xf32>,
    %532 = vector.extract_strided_slice %486 {offsets = [10, 0], sizes = [2, 256], strides = [1, 1]} : vector<16x256xf32> to vector<2x256xf32>
    %533 = vector.extract_strided_slice %532 {offsets = [0, 0], sizes = [2, 128], strides = [1, 1]} : vector<2x256xf32> to vector<2x128xf32>
    %c5_277 = arith.constant 5 : index
    %c0_278 = arith.constant 0 : index
    %c0_279 = arith.constant 0 : index
    %534 = vector.load %arg13[%c5_277, %c0_278, %c0_279] : memref<8x2x128xf32, #tpu.memory_space<vmem>>, vector<1x2x128xf32>
    %535 = vector.shape_cast %534 : vector<1x2x128xf32> to vector<2x128xf32>
    %536 = vector.shape_cast %533 : vector<2x128xf32> to vector<1x2x128xf32>
    tpu.vector_store %arg13[%c5_277, %c0_278, %c0_279], %536 {strides = array<i32>} : memref<8x2x128xf32, #tpu.memory_space<vmem>>, vector<1x2x128xf32>,
    %537 = vector.extract_strided_slice %532 {offsets = [0, 128], sizes = [2, 128], strides = [1, 1]} : vector<2x256xf32> to vector<2x128xf32>
    %c5_280 = arith.constant 5 : index
    %c0_281 = arith.constant 0 : index
    %c0_282 = arith.constant 0 : index
    %538 = vector.load %arg14[%c5_280, %c0_281, %c0_282] : memref<8x2x128xf32, #tpu.memory_space<vmem>>, vector<1x2x128xf32>
    %539 = vector.shape_cast %538 : vector<1x2x128xf32> to vector<2x128xf32>
    %540 = vector.shape_cast %537 : vector<2x128xf32> to vector<1x2x128xf32>
    tpu.vector_store %arg14[%c5_280, %c0_281, %c0_282], %540 {strides = array<i32>} : memref<8x2x128xf32, #tpu.memory_space<vmem>>, vector<1x2x128xf32>,
    %541 = vector.extract_strided_slice %486 {offsets = [12, 0], sizes = [2, 256], strides = [1, 1]} : vector<16x256xf32> to vector<2x256xf32>
    %542 = vector.extract_strided_slice %541 {offsets = [0, 0], sizes = [2, 128], strides = [1, 1]} : vector<2x256xf32> to vector<2x128xf32>
    %c6_283 = arith.constant 6 : index
    %c0_284 = arith.constant 0 : index
    %c0_285 = arith.constant 0 : index
    %543 = vector.load %arg13[%c6_283, %c0_284, %c0_285] : memref<8x2x128xf32, #tpu.memory_space<vmem>>, vector<1x2x128xf32>
    %544 = vector.shape_cast %543 : vector<1x2x128xf32> to vector<2x128xf32>
    %545 = vector.shape_cast %542 : vector<2x128xf32> to vector<1x2x128xf32>
    tpu.vector_store %arg13[%c6_283, %c0_284, %c0_285], %545 {strides = array<i32>} : memref<8x2x128xf32, #tpu.memory_space<vmem>>, vector<1x2x128xf32>,
    %546 = vector.extract_strided_slice %541 {offsets = [0, 128], sizes = [2, 128], strides = [1, 1]} : vector<2x256xf32> to vector<2x128xf32>
    %c6_286 = arith.constant 6 : index
    %c0_287 = arith.constant 0 : index
    %c0_288 = arith.constant 0 : index
    %547 = vector.load %arg14[%c6_286, %c0_287, %c0_288] : memref<8x2x128xf32, #tpu.memory_space<vmem>>, vector<1x2x128xf32>
    %548 = vector.shape_cast %547 : vector<1x2x128xf32> to vector<2x128xf32>
    %549 = vector.shape_cast %546 : vector<2x128xf32> to vector<1x2x128xf32>
    tpu.vector_store %arg14[%c6_286, %c0_287, %c0_288], %549 {strides = array<i32>} : memref<8x2x128xf32, #tpu.memory_space<vmem>>, vector<1x2x128xf32>,
    %550 = vector.extract_strided_slice %486 {offsets = [14, 0], sizes = [2, 256], strides = [1, 1]} : vector<16x256xf32> to vector<2x256xf32>
    %551 = vector.extract_strided_slice %550 {offsets = [0, 0], sizes = [2, 128], strides = [1, 1]} : vector<2x256xf32> to vector<2x128xf32>
    %c7_289 = arith.constant 7 : index
    %c0_290 = arith.constant 0 : index
    %c0_291 = arith.constant 0 : index
    %552 = vector.load %arg13[%c7_289, %c0_290, %c0_291] : memref<8x2x128xf32, #tpu.memory_space<vmem>>, vector<1x2x128xf32>
    %553 = vector.shape_cast %552 : vector<1x2x128xf32> to vector<2x128xf32>
    %554 = vector.shape_cast %551 : vector<2x128xf32> to vector<1x2x128xf32>
    tpu.vector_store %arg13[%c7_289, %c0_290, %c0_291], %554 {strides = array<i32>} : memref<8x2x128xf32, #tpu.memory_space<vmem>>, vector<1x2x128xf32>,
    %555 = vector.extract_strided_slice %550 {offsets = [0, 128], sizes = [2, 128], strides = [1, 1]} : vector<2x256xf32> to vector<2x128xf32>
    %c7_292 = arith.constant 7 : index
    %c0_293 = arith.constant 0 : index
    %c0_294 = arith.constant 0 : index
    %556 = vector.load %arg14[%c7_292, %c0_293, %c0_294] : memref<8x2x128xf32, #tpu.memory_space<vmem>>, vector<1x2x128xf32>
    %557 = vector.shape_cast %556 : vector<1x2x128xf32> to vector<2x128xf32>
    %558 = vector.shape_cast %555 : vector<2x128xf32> to vector<1x2x128xf32>
    tpu.vector_store %arg14[%c7_292, %c0_293, %c0_294], %558 {strides = array<i32>} : memref<8x2x128xf32, #tpu.memory_space<vmem>>, vector<1x2x128xf32>,
    %c0_295 = arith.constant 0 : index
    %c0_296 = arith.constant 0 : index
    %559 = vector.load %arg5[%c0_295, %c0_296] : memref<64x128xf32, #tpu.memory_space<vmem>>, vector<64x128xf32>
    %cst_297 = arith.constant 0.000000e+00 : f32
    %560 = vector.broadcast %cst_297 : f32 to vector<4x64xf32>
    %cst_298 = arith.constant 0.000000e+00 : f32
    %561 = vector.broadcast %cst_298 : f32 to vector<4x32xf32>
    %c0_i32_299 = arith.constant 0 : i32
    %562 = arith.index_cast %c0_i32_299 : i32 to index
    %c0_300 = arith.constant 0 : index
    %c0_301 = arith.constant 0 : index
    %563 = vector.load %arg13[%562, %c0_300, %c0_301] : memref<8x2x128xf32, #tpu.memory_space<vmem>>, vector<1x2x128xf32>
    %564 = vector.shape_cast %563 : vector<1x2x128xf32> to vector<2x128xf32>
    %c7_i32_302 = arith.constant 7 : i32
    %565 = arith.subi %c7_i32_302, %c0_i32_299 : i32
    %566 = arith.index_cast %565 : i32 to index
    %c0_303 = arith.constant 0 : index
    %c0_304 = arith.constant 0 : index
    %567 = vector.load %arg14[%566, %c0_303, %c0_304] : memref<8x2x128xf32, #tpu.memory_space<vmem>>, vector<1x2x128xf32>
    %568 = vector.shape_cast %567 : vector<1x2x128xf32> to vector<2x128xf32>
    %569 = tpu.concatenate %564, %568 in 0 : vector<2x128xf32>, vector<2x128xf32> -> vector<4x128xf32>
    %cst_305 = arith.constant dense<0.000000e+00> : vector<4x128xf32>
    %570 = tpu.matmul %560, %559, %cst_305 {dimension_numbers = #tpu.dot_dimension_numbers<[1], [0], [0], [1], [0, 0, 1, 1], [], []>} : vector<4x64xf32>, vector<64x128xf32>, vector<4x128xf32> -> vector<4x128xf32>
    %571 = arith.addf %569, %570 : vector<4x128xf32>
    %572 = vector.extract_strided_slice %571 {offsets = [0, 0], sizes = [4, 96], strides = [1, 1]} : vector<4x128xf32> to vector<4x96xf32>
    %cst_306 = arith.constant 5.000000e-01 : f32
    %573 = vector.broadcast %cst_306 : f32 to vector<4x96xf32>
    %574 = arith.mulf %573, %572 : vector<4x96xf32>
    %575 = math.tanh %574 : vector<4x96xf32>
    %cst_307 = arith.constant 5.000000e-01 : f32
    %576 = vector.broadcast %cst_307 : f32 to vector<4x96xf32>
    %577 = arith.mulf %576, %575 : vector<4x96xf32>
    %cst_308 = arith.constant 5.000000e-01 : f32
    %578 = vector.broadcast %cst_308 : f32 to vector<4x96xf32>
    %579 = arith.addf %577, %578 : vector<4x96xf32>
    %580 = vector.extract_strided_slice %579 {offsets = [0, 0], sizes = [4, 32], strides = [1, 1]} : vector<4x96xf32> to vector<4x32xf32>
    %581 = vector.extract_strided_slice %579 {offsets = [0, 32], sizes = [4, 32], strides = [1, 1]} : vector<4x96xf32> to vector<4x32xf32>
    %582 = vector.extract_strided_slice %579 {offsets = [0, 64], sizes = [4, 32], strides = [1, 1]} : vector<4x96xf32> to vector<4x32xf32>
    %583 = vector.extract_strided_slice %571 {offsets = [0, 96], sizes = [4, 32], strides = [1, 1]} : vector<4x128xf32> to vector<4x32xf32>
    %584 = math.tanh %583 : vector<4x32xf32>
    %585 = arith.mulf %581, %561 : vector<4x32xf32>
    %586 = arith.mulf %580, %584 : vector<4x32xf32>
    %587 = arith.addf %585, %586 : vector<4x32xf32>
    %588 = math.tanh %587 : vector<4x32xf32>
    %589 = arith.mulf %582, %588 : vector<4x32xf32>
    %590 = vector.extract_strided_slice %589 {offsets = [0, 0], sizes = [2, 32], strides = [1, 1]} : vector<4x32xf32> to vector<2x32xf32>
    %591 = arith.index_cast %c0_i32_299 : i32 to index
    %c0_309 = arith.constant 0 : index
    %c0_310 = arith.constant 0 : index
    %592 = vector.load %arg17[%591, %c0_309, %c0_310] : memref<8x2x32xf32, #tpu.memory_space<vmem>>, vector<1x2x32xf32>
    %593 = vector.shape_cast %592 : vector<1x2x32xf32> to vector<2x32xf32>
    %594 = vector.shape_cast %590 : vector<2x32xf32> to vector<1x2x32xf32>
    tpu.vector_store %arg17[%591, %c0_309, %c0_310], %594 {strides = array<i32>} : memref<8x2x32xf32, #tpu.memory_space<vmem>>, vector<1x2x32xf32>,
    %595 = vector.extract_strided_slice %589 {offsets = [2, 0], sizes = [2, 32], strides = [1, 1]} : vector<4x32xf32> to vector<2x32xf32>
    %c7_i32_311 = arith.constant 7 : i32
    %596 = arith.subi %c7_i32_311, %c0_i32_299 : i32
    %597 = arith.index_cast %596 : i32 to index
    %c0_312 = arith.constant 0 : index
    %c0_313 = arith.constant 0 : index
    %598 = vector.load %arg18[%597, %c0_312, %c0_313] : memref<8x2x32xf32, #tpu.memory_space<vmem>>, vector<1x2x32xf32>
    %599 = vector.shape_cast %598 : vector<1x2x32xf32> to vector<2x32xf32>
    %600 = vector.shape_cast %595 : vector<2x32xf32> to vector<1x2x32xf32>
    tpu.vector_store %arg18[%597, %c0_312, %c0_313], %600 {strides = array<i32>} : memref<8x2x32xf32, #tpu.memory_space<vmem>>, vector<1x2x32xf32>,
    %601 = tpu.concatenate %589, %589 in 1 : vector<4x32xf32>, vector<4x32xf32> -> vector<4x64xf32>
    %cst_314 = arith.constant 0.000000e+00 : f32
    %602 = vector.broadcast %cst_314 : f32 to vector<4x64xf32>
    %603 = arith.select %7, %601, %602 : vector<4x64xi1>, vector<4x64xf32>
    %c1_i32_315 = arith.constant 1 : i32
    %604 = arith.index_cast %c1_i32_315 : i32 to index
    %c0_316 = arith.constant 0 : index
    %c0_317 = arith.constant 0 : index
    %605 = vector.load %arg13[%604, %c0_316, %c0_317] : memref<8x2x128xf32, #tpu.memory_space<vmem>>, vector<1x2x128xf32>
    %606 = vector.shape_cast %605 : vector<1x2x128xf32> to vector<2x128xf32>
    %c7_i32_318 = arith.constant 7 : i32
    %607 = arith.subi %c7_i32_318, %c1_i32_315 : i32
    %608 = arith.index_cast %607 : i32 to index
    %c0_319 = arith.constant 0 : index
    %c0_320 = arith.constant 0 : index
    %609 = vector.load %arg14[%608, %c0_319, %c0_320] : memref<8x2x128xf32, #tpu.memory_space<vmem>>, vector<1x2x128xf32>
    %610 = vector.shape_cast %609 : vector<1x2x128xf32> to vector<2x128xf32>
    %611 = tpu.concatenate %606, %610 in 0 : vector<2x128xf32>, vector<2x128xf32> -> vector<4x128xf32>
    %cst_321 = arith.constant dense<0.000000e+00> : vector<4x128xf32>
    %612 = tpu.matmul %603, %559, %cst_321 {dimension_numbers = #tpu.dot_dimension_numbers<[1], [0], [0], [1], [0, 0, 1, 1], [], []>} : vector<4x64xf32>, vector<64x128xf32>, vector<4x128xf32> -> vector<4x128xf32>
    %613 = arith.addf %611, %612 : vector<4x128xf32>
    %614 = vector.extract_strided_slice %613 {offsets = [0, 0], sizes = [4, 96], strides = [1, 1]} : vector<4x128xf32> to vector<4x96xf32>
    %cst_322 = arith.constant 5.000000e-01 : f32
    %615 = vector.broadcast %cst_322 : f32 to vector<4x96xf32>
    %616 = arith.mulf %615, %614 : vector<4x96xf32>
    %617 = math.tanh %616 : vector<4x96xf32>
    %cst_323 = arith.constant 5.000000e-01 : f32
    %618 = vector.broadcast %cst_323 : f32 to vector<4x96xf32>
    %619 = arith.mulf %618, %617 : vector<4x96xf32>
    %cst_324 = arith.constant 5.000000e-01 : f32
    %620 = vector.broadcast %cst_324 : f32 to vector<4x96xf32>
    %621 = arith.addf %619, %620 : vector<4x96xf32>
    %622 = vector.extract_strided_slice %621 {offsets = [0, 0], sizes = [4, 32], strides = [1, 1]} : vector<4x96xf32> to vector<4x32xf32>
    %623 = vector.extract_strided_slice %621 {offsets = [0, 32], sizes = [4, 32], strides = [1, 1]} : vector<4x96xf32> to vector<4x32xf32>
    %624 = vector.extract_strided_slice %621 {offsets = [0, 64], sizes = [4, 32], strides = [1, 1]} : vector<4x96xf32> to vector<4x32xf32>
    %625 = vector.extract_strided_slice %613 {offsets = [0, 96], sizes = [4, 32], strides = [1, 1]} : vector<4x128xf32> to vector<4x32xf32>
    %626 = math.tanh %625 : vector<4x32xf32>
    %627 = arith.mulf %623, %587 : vector<4x32xf32>
    %628 = arith.mulf %622, %626 : vector<4x32xf32>
    %629 = arith.addf %627, %628 : vector<4x32xf32>
    %630 = math.tanh %629 : vector<4x32xf32>
    %631 = arith.mulf %624, %630 : vector<4x32xf32>
    %632 = vector.extract_strided_slice %631 {offsets = [0, 0], sizes = [2, 32], strides = [1, 1]} : vector<4x32xf32> to vector<2x32xf32>
    %633 = arith.index_cast %c1_i32_315 : i32 to index
    %c0_325 = arith.constant 0 : index
    %c0_326 = arith.constant 0 : index
    %634 = vector.load %arg17[%633, %c0_325, %c0_326] : memref<8x2x32xf32, #tpu.memory_space<vmem>>, vector<1x2x32xf32>
    %635 = vector.shape_cast %634 : vector<1x2x32xf32> to vector<2x32xf32>
    %636 = vector.shape_cast %632 : vector<2x32xf32> to vector<1x2x32xf32>
    tpu.vector_store %arg17[%633, %c0_325, %c0_326], %636 {strides = array<i32>} : memref<8x2x32xf32, #tpu.memory_space<vmem>>, vector<1x2x32xf32>,
    %637 = vector.extract_strided_slice %631 {offsets = [2, 0], sizes = [2, 32], strides = [1, 1]} : vector<4x32xf32> to vector<2x32xf32>
    %c7_i32_327 = arith.constant 7 : i32
    %638 = arith.subi %c7_i32_327, %c1_i32_315 : i32
    %639 = arith.index_cast %638 : i32 to index
    %c0_328 = arith.constant 0 : index
    %c0_329 = arith.constant 0 : index
    %640 = vector.load %arg18[%639, %c0_328, %c0_329] : memref<8x2x32xf32, #tpu.memory_space<vmem>>, vector<1x2x32xf32>
    %641 = vector.shape_cast %640 : vector<1x2x32xf32> to vector<2x32xf32>
    %642 = vector.shape_cast %637 : vector<2x32xf32> to vector<1x2x32xf32>
    tpu.vector_store %arg18[%639, %c0_328, %c0_329], %642 {strides = array<i32>} : memref<8x2x32xf32, #tpu.memory_space<vmem>>, vector<1x2x32xf32>,
    %643 = tpu.concatenate %631, %631 in 1 : vector<4x32xf32>, vector<4x32xf32> -> vector<4x64xf32>
    %cst_330 = arith.constant 0.000000e+00 : f32
    %644 = vector.broadcast %cst_330 : f32 to vector<4x64xf32>
    %645 = arith.select %7, %643, %644 : vector<4x64xi1>, vector<4x64xf32>
    %c2_i32_331 = arith.constant 2 : i32
    %646 = arith.index_cast %c2_i32_331 : i32 to index
    %c0_332 = arith.constant 0 : index
    %c0_333 = arith.constant 0 : index
    %647 = vector.load %arg13[%646, %c0_332, %c0_333] : memref<8x2x128xf32, #tpu.memory_space<vmem>>, vector<1x2x128xf32>
    %648 = vector.shape_cast %647 : vector<1x2x128xf32> to vector<2x128xf32>
    %c7_i32_334 = arith.constant 7 : i32
    %649 = arith.subi %c7_i32_334, %c2_i32_331 : i32
    %650 = arith.index_cast %649 : i32 to index
    %c0_335 = arith.constant 0 : index
    %c0_336 = arith.constant 0 : index
    %651 = vector.load %arg14[%650, %c0_335, %c0_336] : memref<8x2x128xf32, #tpu.memory_space<vmem>>, vector<1x2x128xf32>
    %652 = vector.shape_cast %651 : vector<1x2x128xf32> to vector<2x128xf32>
    %653 = tpu.concatenate %648, %652 in 0 : vector<2x128xf32>, vector<2x128xf32> -> vector<4x128xf32>
    %cst_337 = arith.constant dense<0.000000e+00> : vector<4x128xf32>
    %654 = tpu.matmul %645, %559, %cst_337 {dimension_numbers = #tpu.dot_dimension_numbers<[1], [0], [0], [1], [0, 0, 1, 1], [], []>} : vector<4x64xf32>, vector<64x128xf32>, vector<4x128xf32> -> vector<4x128xf32>
    %655 = arith.addf %653, %654 : vector<4x128xf32>
    %656 = vector.extract_strided_slice %655 {offsets = [0, 0], sizes = [4, 96], strides = [1, 1]} : vector<4x128xf32> to vector<4x96xf32>
    %cst_338 = arith.constant 5.000000e-01 : f32
    %657 = vector.broadcast %cst_338 : f32 to vector<4x96xf32>
    %658 = arith.mulf %657, %656 : vector<4x96xf32>
    %659 = math.tanh %658 : vector<4x96xf32>
    %cst_339 = arith.constant 5.000000e-01 : f32
    %660 = vector.broadcast %cst_339 : f32 to vector<4x96xf32>
    %661 = arith.mulf %660, %659 : vector<4x96xf32>
    %cst_340 = arith.constant 5.000000e-01 : f32
    %662 = vector.broadcast %cst_340 : f32 to vector<4x96xf32>
    %663 = arith.addf %661, %662 : vector<4x96xf32>
    %664 = vector.extract_strided_slice %663 {offsets = [0, 0], sizes = [4, 32], strides = [1, 1]} : vector<4x96xf32> to vector<4x32xf32>
    %665 = vector.extract_strided_slice %663 {offsets = [0, 32], sizes = [4, 32], strides = [1, 1]} : vector<4x96xf32> to vector<4x32xf32>
    %666 = vector.extract_strided_slice %663 {offsets = [0, 64], sizes = [4, 32], strides = [1, 1]} : vector<4x96xf32> to vector<4x32xf32>
    %667 = vector.extract_strided_slice %655 {offsets = [0, 96], sizes = [4, 32], strides = [1, 1]} : vector<4x128xf32> to vector<4x32xf32>
    %668 = math.tanh %667 : vector<4x32xf32>
    %669 = arith.mulf %665, %629 : vector<4x32xf32>
    %670 = arith.mulf %664, %668 : vector<4x32xf32>
    %671 = arith.addf %669, %670 : vector<4x32xf32>
    %672 = math.tanh %671 : vector<4x32xf32>
    %673 = arith.mulf %666, %672 : vector<4x32xf32>
    %674 = vector.extract_strided_slice %673 {offsets = [0, 0], sizes = [2, 32], strides = [1, 1]} : vector<4x32xf32> to vector<2x32xf32>
    %675 = arith.index_cast %c2_i32_331 : i32 to index
    %c0_341 = arith.constant 0 : index
    %c0_342 = arith.constant 0 : index
    %676 = vector.load %arg17[%675, %c0_341, %c0_342] : memref<8x2x32xf32, #tpu.memory_space<vmem>>, vector<1x2x32xf32>
    %677 = vector.shape_cast %676 : vector<1x2x32xf32> to vector<2x32xf32>
    %678 = vector.shape_cast %674 : vector<2x32xf32> to vector<1x2x32xf32>
    tpu.vector_store %arg17[%675, %c0_341, %c0_342], %678 {strides = array<i32>} : memref<8x2x32xf32, #tpu.memory_space<vmem>>, vector<1x2x32xf32>,
    %679 = vector.extract_strided_slice %673 {offsets = [2, 0], sizes = [2, 32], strides = [1, 1]} : vector<4x32xf32> to vector<2x32xf32>
    %c7_i32_343 = arith.constant 7 : i32
    %680 = arith.subi %c7_i32_343, %c2_i32_331 : i32
    %681 = arith.index_cast %680 : i32 to index
    %c0_344 = arith.constant 0 : index
    %c0_345 = arith.constant 0 : index
    %682 = vector.load %arg18[%681, %c0_344, %c0_345] : memref<8x2x32xf32, #tpu.memory_space<vmem>>, vector<1x2x32xf32>
    %683 = vector.shape_cast %682 : vector<1x2x32xf32> to vector<2x32xf32>
    %684 = vector.shape_cast %679 : vector<2x32xf32> to vector<1x2x32xf32>
    tpu.vector_store %arg18[%681, %c0_344, %c0_345], %684 {strides = array<i32>} : memref<8x2x32xf32, #tpu.memory_space<vmem>>, vector<1x2x32xf32>,
    %685 = tpu.concatenate %673, %673 in 1 : vector<4x32xf32>, vector<4x32xf32> -> vector<4x64xf32>
    %cst_346 = arith.constant 0.000000e+00 : f32
    %686 = vector.broadcast %cst_346 : f32 to vector<4x64xf32>
    %687 = arith.select %7, %685, %686 : vector<4x64xi1>, vector<4x64xf32>
    %c3_i32_347 = arith.constant 3 : i32
    %688 = arith.index_cast %c3_i32_347 : i32 to index
    %c0_348 = arith.constant 0 : index
    %c0_349 = arith.constant 0 : index
    %689 = vector.load %arg13[%688, %c0_348, %c0_349] : memref<8x2x128xf32, #tpu.memory_space<vmem>>, vector<1x2x128xf32>
    %690 = vector.shape_cast %689 : vector<1x2x128xf32> to vector<2x128xf32>
    %c7_i32_350 = arith.constant 7 : i32
    %691 = arith.subi %c7_i32_350, %c3_i32_347 : i32
    %692 = arith.index_cast %691 : i32 to index
    %c0_351 = arith.constant 0 : index
    %c0_352 = arith.constant 0 : index
    %693 = vector.load %arg14[%692, %c0_351, %c0_352] : memref<8x2x128xf32, #tpu.memory_space<vmem>>, vector<1x2x128xf32>
    %694 = vector.shape_cast %693 : vector<1x2x128xf32> to vector<2x128xf32>
    %695 = tpu.concatenate %690, %694 in 0 : vector<2x128xf32>, vector<2x128xf32> -> vector<4x128xf32>
    %cst_353 = arith.constant dense<0.000000e+00> : vector<4x128xf32>
    %696 = tpu.matmul %687, %559, %cst_353 {dimension_numbers = #tpu.dot_dimension_numbers<[1], [0], [0], [1], [0, 0, 1, 1], [], []>} : vector<4x64xf32>, vector<64x128xf32>, vector<4x128xf32> -> vector<4x128xf32>
    %697 = arith.addf %695, %696 : vector<4x128xf32>
    %698 = vector.extract_strided_slice %697 {offsets = [0, 0], sizes = [4, 96], strides = [1, 1]} : vector<4x128xf32> to vector<4x96xf32>
    %cst_354 = arith.constant 5.000000e-01 : f32
    %699 = vector.broadcast %cst_354 : f32 to vector<4x96xf32>
    %700 = arith.mulf %699, %698 : vector<4x96xf32>
    %701 = math.tanh %700 : vector<4x96xf32>
    %cst_355 = arith.constant 5.000000e-01 : f32
    %702 = vector.broadcast %cst_355 : f32 to vector<4x96xf32>
    %703 = arith.mulf %702, %701 : vector<4x96xf32>
    %cst_356 = arith.constant 5.000000e-01 : f32
    %704 = vector.broadcast %cst_356 : f32 to vector<4x96xf32>
    %705 = arith.addf %703, %704 : vector<4x96xf32>
    %706 = vector.extract_strided_slice %705 {offsets = [0, 0], sizes = [4, 32], strides = [1, 1]} : vector<4x96xf32> to vector<4x32xf32>
    %707 = vector.extract_strided_slice %705 {offsets = [0, 32], sizes = [4, 32], strides = [1, 1]} : vector<4x96xf32> to vector<4x32xf32>
    %708 = vector.extract_strided_slice %705 {offsets = [0, 64], sizes = [4, 32], strides = [1, 1]} : vector<4x96xf32> to vector<4x32xf32>
    %709 = vector.extract_strided_slice %697 {offsets = [0, 96], sizes = [4, 32], strides = [1, 1]} : vector<4x128xf32> to vector<4x32xf32>
    %710 = math.tanh %709 : vector<4x32xf32>
    %711 = arith.mulf %707, %671 : vector<4x32xf32>
    %712 = arith.mulf %706, %710 : vector<4x32xf32>
    %713 = arith.addf %711, %712 : vector<4x32xf32>
    %714 = math.tanh %713 : vector<4x32xf32>
    %715 = arith.mulf %708, %714 : vector<4x32xf32>
    %716 = vector.extract_strided_slice %715 {offsets = [0, 0], sizes = [2, 32], strides = [1, 1]} : vector<4x32xf32> to vector<2x32xf32>
    %717 = arith.index_cast %c3_i32_347 : i32 to index
    %c0_357 = arith.constant 0 : index
    %c0_358 = arith.constant 0 : index
    %718 = vector.load %arg17[%717, %c0_357, %c0_358] : memref<8x2x32xf32, #tpu.memory_space<vmem>>, vector<1x2x32xf32>
    %719 = vector.shape_cast %718 : vector<1x2x32xf32> to vector<2x32xf32>
    %720 = vector.shape_cast %716 : vector<2x32xf32> to vector<1x2x32xf32>
    tpu.vector_store %arg17[%717, %c0_357, %c0_358], %720 {strides = array<i32>} : memref<8x2x32xf32, #tpu.memory_space<vmem>>, vector<1x2x32xf32>,
    %721 = vector.extract_strided_slice %715 {offsets = [2, 0], sizes = [2, 32], strides = [1, 1]} : vector<4x32xf32> to vector<2x32xf32>
    %c7_i32_359 = arith.constant 7 : i32
    %722 = arith.subi %c7_i32_359, %c3_i32_347 : i32
    %723 = arith.index_cast %722 : i32 to index
    %c0_360 = arith.constant 0 : index
    %c0_361 = arith.constant 0 : index
    %724 = vector.load %arg18[%723, %c0_360, %c0_361] : memref<8x2x32xf32, #tpu.memory_space<vmem>>, vector<1x2x32xf32>
    %725 = vector.shape_cast %724 : vector<1x2x32xf32> to vector<2x32xf32>
    %726 = vector.shape_cast %721 : vector<2x32xf32> to vector<1x2x32xf32>
    tpu.vector_store %arg18[%723, %c0_360, %c0_361], %726 {strides = array<i32>} : memref<8x2x32xf32, #tpu.memory_space<vmem>>, vector<1x2x32xf32>,
    %727 = tpu.concatenate %715, %715 in 1 : vector<4x32xf32>, vector<4x32xf32> -> vector<4x64xf32>
    %cst_362 = arith.constant 0.000000e+00 : f32
    %728 = vector.broadcast %cst_362 : f32 to vector<4x64xf32>
    %729 = arith.select %7, %727, %728 : vector<4x64xi1>, vector<4x64xf32>
    %c4_i32_363 = arith.constant 4 : i32
    %730 = arith.index_cast %c4_i32_363 : i32 to index
    %c0_364 = arith.constant 0 : index
    %c0_365 = arith.constant 0 : index
    %731 = vector.load %arg13[%730, %c0_364, %c0_365] : memref<8x2x128xf32, #tpu.memory_space<vmem>>, vector<1x2x128xf32>
    %732 = vector.shape_cast %731 : vector<1x2x128xf32> to vector<2x128xf32>
    %c7_i32_366 = arith.constant 7 : i32
    %733 = arith.subi %c7_i32_366, %c4_i32_363 : i32
    %734 = arith.index_cast %733 : i32 to index
    %c0_367 = arith.constant 0 : index
    %c0_368 = arith.constant 0 : index
    %735 = vector.load %arg14[%734, %c0_367, %c0_368] : memref<8x2x128xf32, #tpu.memory_space<vmem>>, vector<1x2x128xf32>
    %736 = vector.shape_cast %735 : vector<1x2x128xf32> to vector<2x128xf32>
    %737 = tpu.concatenate %732, %736 in 0 : vector<2x128xf32>, vector<2x128xf32> -> vector<4x128xf32>
    %cst_369 = arith.constant dense<0.000000e+00> : vector<4x128xf32>
    %738 = tpu.matmul %729, %559, %cst_369 {dimension_numbers = #tpu.dot_dimension_numbers<[1], [0], [0], [1], [0, 0, 1, 1], [], []>} : vector<4x64xf32>, vector<64x128xf32>, vector<4x128xf32> -> vector<4x128xf32>
    %739 = arith.addf %737, %738 : vector<4x128xf32>
    %740 = vector.extract_strided_slice %739 {offsets = [0, 0], sizes = [4, 96], strides = [1, 1]} : vector<4x128xf32> to vector<4x96xf32>
    %cst_370 = arith.constant 5.000000e-01 : f32
    %741 = vector.broadcast %cst_370 : f32 to vector<4x96xf32>
    %742 = arith.mulf %741, %740 : vector<4x96xf32>
    %743 = math.tanh %742 : vector<4x96xf32>
    %cst_371 = arith.constant 5.000000e-01 : f32
    %744 = vector.broadcast %cst_371 : f32 to vector<4x96xf32>
    %745 = arith.mulf %744, %743 : vector<4x96xf32>
    %cst_372 = arith.constant 5.000000e-01 : f32
    %746 = vector.broadcast %cst_372 : f32 to vector<4x96xf32>
    %747 = arith.addf %745, %746 : vector<4x96xf32>
    %748 = vector.extract_strided_slice %747 {offsets = [0, 0], sizes = [4, 32], strides = [1, 1]} : vector<4x96xf32> to vector<4x32xf32>
    %749 = vector.extract_strided_slice %747 {offsets = [0, 32], sizes = [4, 32], strides = [1, 1]} : vector<4x96xf32> to vector<4x32xf32>
    %750 = vector.extract_strided_slice %747 {offsets = [0, 64], sizes = [4, 32], strides = [1, 1]} : vector<4x96xf32> to vector<4x32xf32>
    %751 = vector.extract_strided_slice %739 {offsets = [0, 96], sizes = [4, 32], strides = [1, 1]} : vector<4x128xf32> to vector<4x32xf32>
    %752 = math.tanh %751 : vector<4x32xf32>
    %753 = arith.mulf %749, %713 : vector<4x32xf32>
    %754 = arith.mulf %748, %752 : vector<4x32xf32>
    %755 = arith.addf %753, %754 : vector<4x32xf32>
    %756 = math.tanh %755 : vector<4x32xf32>
    %757 = arith.mulf %750, %756 : vector<4x32xf32>
    %758 = vector.extract_strided_slice %757 {offsets = [0, 0], sizes = [2, 32], strides = [1, 1]} : vector<4x32xf32> to vector<2x32xf32>
    %759 = arith.index_cast %c4_i32_363 : i32 to index
    %c0_373 = arith.constant 0 : index
    %c0_374 = arith.constant 0 : index
    %760 = vector.load %arg17[%759, %c0_373, %c0_374] : memref<8x2x32xf32, #tpu.memory_space<vmem>>, vector<1x2x32xf32>
    %761 = vector.shape_cast %760 : vector<1x2x32xf32> to vector<2x32xf32>
    %762 = vector.shape_cast %758 : vector<2x32xf32> to vector<1x2x32xf32>
    tpu.vector_store %arg17[%759, %c0_373, %c0_374], %762 {strides = array<i32>} : memref<8x2x32xf32, #tpu.memory_space<vmem>>, vector<1x2x32xf32>,
    %763 = vector.extract_strided_slice %757 {offsets = [2, 0], sizes = [2, 32], strides = [1, 1]} : vector<4x32xf32> to vector<2x32xf32>
    %c7_i32_375 = arith.constant 7 : i32
    %764 = arith.subi %c7_i32_375, %c4_i32_363 : i32
    %765 = arith.index_cast %764 : i32 to index
    %c0_376 = arith.constant 0 : index
    %c0_377 = arith.constant 0 : index
    %766 = vector.load %arg18[%765, %c0_376, %c0_377] : memref<8x2x32xf32, #tpu.memory_space<vmem>>, vector<1x2x32xf32>
    %767 = vector.shape_cast %766 : vector<1x2x32xf32> to vector<2x32xf32>
    %768 = vector.shape_cast %763 : vector<2x32xf32> to vector<1x2x32xf32>
    tpu.vector_store %arg18[%765, %c0_376, %c0_377], %768 {strides = array<i32>} : memref<8x2x32xf32, #tpu.memory_space<vmem>>, vector<1x2x32xf32>,
    %769 = tpu.concatenate %757, %757 in 1 : vector<4x32xf32>, vector<4x32xf32> -> vector<4x64xf32>
    %cst_378 = arith.constant 0.000000e+00 : f32
    %770 = vector.broadcast %cst_378 : f32 to vector<4x64xf32>
    %771 = arith.select %7, %769, %770 : vector<4x64xi1>, vector<4x64xf32>
    %c5_i32_379 = arith.constant 5 : i32
    %772 = arith.index_cast %c5_i32_379 : i32 to index
    %c0_380 = arith.constant 0 : index
    %c0_381 = arith.constant 0 : index
    %773 = vector.load %arg13[%772, %c0_380, %c0_381] : memref<8x2x128xf32, #tpu.memory_space<vmem>>, vector<1x2x128xf32>
    %774 = vector.shape_cast %773 : vector<1x2x128xf32> to vector<2x128xf32>
    %c7_i32_382 = arith.constant 7 : i32
    %775 = arith.subi %c7_i32_382, %c5_i32_379 : i32
    %776 = arith.index_cast %775 : i32 to index
    %c0_383 = arith.constant 0 : index
    %c0_384 = arith.constant 0 : index
    %777 = vector.load %arg14[%776, %c0_383, %c0_384] : memref<8x2x128xf32, #tpu.memory_space<vmem>>, vector<1x2x128xf32>
    %778 = vector.shape_cast %777 : vector<1x2x128xf32> to vector<2x128xf32>
    %779 = tpu.concatenate %774, %778 in 0 : vector<2x128xf32>, vector<2x128xf32> -> vector<4x128xf32>
    %cst_385 = arith.constant dense<0.000000e+00> : vector<4x128xf32>
    %780 = tpu.matmul %771, %559, %cst_385 {dimension_numbers = #tpu.dot_dimension_numbers<[1], [0], [0], [1], [0, 0, 1, 1], [], []>} : vector<4x64xf32>, vector<64x128xf32>, vector<4x128xf32> -> vector<4x128xf32>
    %781 = arith.addf %779, %780 : vector<4x128xf32>
    %782 = vector.extract_strided_slice %781 {offsets = [0, 0], sizes = [4, 96], strides = [1, 1]} : vector<4x128xf32> to vector<4x96xf32>
    %cst_386 = arith.constant 5.000000e-01 : f32
    %783 = vector.broadcast %cst_386 : f32 to vector<4x96xf32>
    %784 = arith.mulf %783, %782 : vector<4x96xf32>
    %785 = math.tanh %784 : vector<4x96xf32>
    %cst_387 = arith.constant 5.000000e-01 : f32
    %786 = vector.broadcast %cst_387 : f32 to vector<4x96xf32>
    %787 = arith.mulf %786, %785 : vector<4x96xf32>
    %cst_388 = arith.constant 5.000000e-01 : f32
    %788 = vector.broadcast %cst_388 : f32 to vector<4x96xf32>
    %789 = arith.addf %787, %788 : vector<4x96xf32>
    %790 = vector.extract_strided_slice %789 {offsets = [0, 0], sizes = [4, 32], strides = [1, 1]} : vector<4x96xf32> to vector<4x32xf32>
    %791 = vector.extract_strided_slice %789 {offsets = [0, 32], sizes = [4, 32], strides = [1, 1]} : vector<4x96xf32> to vector<4x32xf32>
    %792 = vector.extract_strided_slice %789 {offsets = [0, 64], sizes = [4, 32], strides = [1, 1]} : vector<4x96xf32> to vector<4x32xf32>
    %793 = vector.extract_strided_slice %781 {offsets = [0, 96], sizes = [4, 32], strides = [1, 1]} : vector<4x128xf32> to vector<4x32xf32>
    %794 = math.tanh %793 : vector<4x32xf32>
    %795 = arith.mulf %791, %755 : vector<4x32xf32>
    %796 = arith.mulf %790, %794 : vector<4x32xf32>
    %797 = arith.addf %795, %796 : vector<4x32xf32>
    %798 = math.tanh %797 : vector<4x32xf32>
    %799 = arith.mulf %792, %798 : vector<4x32xf32>
    %800 = vector.extract_strided_slice %799 {offsets = [0, 0], sizes = [2, 32], strides = [1, 1]} : vector<4x32xf32> to vector<2x32xf32>
    %801 = arith.index_cast %c5_i32_379 : i32 to index
    %c0_389 = arith.constant 0 : index
    %c0_390 = arith.constant 0 : index
    %802 = vector.load %arg17[%801, %c0_389, %c0_390] : memref<8x2x32xf32, #tpu.memory_space<vmem>>, vector<1x2x32xf32>
    %803 = vector.shape_cast %802 : vector<1x2x32xf32> to vector<2x32xf32>
    %804 = vector.shape_cast %800 : vector<2x32xf32> to vector<1x2x32xf32>
    tpu.vector_store %arg17[%801, %c0_389, %c0_390], %804 {strides = array<i32>} : memref<8x2x32xf32, #tpu.memory_space<vmem>>, vector<1x2x32xf32>,
    %805 = vector.extract_strided_slice %799 {offsets = [2, 0], sizes = [2, 32], strides = [1, 1]} : vector<4x32xf32> to vector<2x32xf32>
    %c7_i32_391 = arith.constant 7 : i32
    %806 = arith.subi %c7_i32_391, %c5_i32_379 : i32
    %807 = arith.index_cast %806 : i32 to index
    %c0_392 = arith.constant 0 : index
    %c0_393 = arith.constant 0 : index
    %808 = vector.load %arg18[%807, %c0_392, %c0_393] : memref<8x2x32xf32, #tpu.memory_space<vmem>>, vector<1x2x32xf32>
    %809 = vector.shape_cast %808 : vector<1x2x32xf32> to vector<2x32xf32>
    %810 = vector.shape_cast %805 : vector<2x32xf32> to vector<1x2x32xf32>
    tpu.vector_store %arg18[%807, %c0_392, %c0_393], %810 {strides = array<i32>} : memref<8x2x32xf32, #tpu.memory_space<vmem>>, vector<1x2x32xf32>,
    %811 = tpu.concatenate %799, %799 in 1 : vector<4x32xf32>, vector<4x32xf32> -> vector<4x64xf32>
    %cst_394 = arith.constant 0.000000e+00 : f32
    %812 = vector.broadcast %cst_394 : f32 to vector<4x64xf32>
    %813 = arith.select %7, %811, %812 : vector<4x64xi1>, vector<4x64xf32>
    %c6_i32_395 = arith.constant 6 : i32
    %814 = arith.index_cast %c6_i32_395 : i32 to index
    %c0_396 = arith.constant 0 : index
    %c0_397 = arith.constant 0 : index
    %815 = vector.load %arg13[%814, %c0_396, %c0_397] : memref<8x2x128xf32, #tpu.memory_space<vmem>>, vector<1x2x128xf32>
    %816 = vector.shape_cast %815 : vector<1x2x128xf32> to vector<2x128xf32>
    %c7_i32_398 = arith.constant 7 : i32
    %817 = arith.subi %c7_i32_398, %c6_i32_395 : i32
    %818 = arith.index_cast %817 : i32 to index
    %c0_399 = arith.constant 0 : index
    %c0_400 = arith.constant 0 : index
    %819 = vector.load %arg14[%818, %c0_399, %c0_400] : memref<8x2x128xf32, #tpu.memory_space<vmem>>, vector<1x2x128xf32>
    %820 = vector.shape_cast %819 : vector<1x2x128xf32> to vector<2x128xf32>
    %821 = tpu.concatenate %816, %820 in 0 : vector<2x128xf32>, vector<2x128xf32> -> vector<4x128xf32>
    %cst_401 = arith.constant dense<0.000000e+00> : vector<4x128xf32>
    %822 = tpu.matmul %813, %559, %cst_401 {dimension_numbers = #tpu.dot_dimension_numbers<[1], [0], [0], [1], [0, 0, 1, 1], [], []>} : vector<4x64xf32>, vector<64x128xf32>, vector<4x128xf32> -> vector<4x128xf32>
    %823 = arith.addf %821, %822 : vector<4x128xf32>
    %824 = vector.extract_strided_slice %823 {offsets = [0, 0], sizes = [4, 96], strides = [1, 1]} : vector<4x128xf32> to vector<4x96xf32>
    %cst_402 = arith.constant 5.000000e-01 : f32
    %825 = vector.broadcast %cst_402 : f32 to vector<4x96xf32>
    %826 = arith.mulf %825, %824 : vector<4x96xf32>
    %827 = math.tanh %826 : vector<4x96xf32>
    %cst_403 = arith.constant 5.000000e-01 : f32
    %828 = vector.broadcast %cst_403 : f32 to vector<4x96xf32>
    %829 = arith.mulf %828, %827 : vector<4x96xf32>
    %cst_404 = arith.constant 5.000000e-01 : f32
    %830 = vector.broadcast %cst_404 : f32 to vector<4x96xf32>
    %831 = arith.addf %829, %830 : vector<4x96xf32>
    %832 = vector.extract_strided_slice %831 {offsets = [0, 0], sizes = [4, 32], strides = [1, 1]} : vector<4x96xf32> to vector<4x32xf32>
    %833 = vector.extract_strided_slice %831 {offsets = [0, 32], sizes = [4, 32], strides = [1, 1]} : vector<4x96xf32> to vector<4x32xf32>
    %834 = vector.extract_strided_slice %831 {offsets = [0, 64], sizes = [4, 32], strides = [1, 1]} : vector<4x96xf32> to vector<4x32xf32>
    %835 = vector.extract_strided_slice %823 {offsets = [0, 96], sizes = [4, 32], strides = [1, 1]} : vector<4x128xf32> to vector<4x32xf32>
    %836 = math.tanh %835 : vector<4x32xf32>
    %837 = arith.mulf %833, %797 : vector<4x32xf32>
    %838 = arith.mulf %832, %836 : vector<4x32xf32>
    %839 = arith.addf %837, %838 : vector<4x32xf32>
    %840 = math.tanh %839 : vector<4x32xf32>
    %841 = arith.mulf %834, %840 : vector<4x32xf32>
    %842 = vector.extract_strided_slice %841 {offsets = [0, 0], sizes = [2, 32], strides = [1, 1]} : vector<4x32xf32> to vector<2x32xf32>
    %843 = arith.index_cast %c6_i32_395 : i32 to index
    %c0_405 = arith.constant 0 : index
    %c0_406 = arith.constant 0 : index
    %844 = vector.load %arg17[%843, %c0_405, %c0_406] : memref<8x2x32xf32, #tpu.memory_space<vmem>>, vector<1x2x32xf32>
    %845 = vector.shape_cast %844 : vector<1x2x32xf32> to vector<2x32xf32>
    %846 = vector.shape_cast %842 : vector<2x32xf32> to vector<1x2x32xf32>
    tpu.vector_store %arg17[%843, %c0_405, %c0_406], %846 {strides = array<i32>} : memref<8x2x32xf32, #tpu.memory_space<vmem>>, vector<1x2x32xf32>,
    %847 = vector.extract_strided_slice %841 {offsets = [2, 0], sizes = [2, 32], strides = [1, 1]} : vector<4x32xf32> to vector<2x32xf32>
    %c7_i32_407 = arith.constant 7 : i32
    %848 = arith.subi %c7_i32_407, %c6_i32_395 : i32
    %849 = arith.index_cast %848 : i32 to index
    %c0_408 = arith.constant 0 : index
    %c0_409 = arith.constant 0 : index
    %850 = vector.load %arg18[%849, %c0_408, %c0_409] : memref<8x2x32xf32, #tpu.memory_space<vmem>>, vector<1x2x32xf32>
    %851 = vector.shape_cast %850 : vector<1x2x32xf32> to vector<2x32xf32>
    %852 = vector.shape_cast %847 : vector<2x32xf32> to vector<1x2x32xf32>
    tpu.vector_store %arg18[%849, %c0_408, %c0_409], %852 {strides = array<i32>} : memref<8x2x32xf32, #tpu.memory_space<vmem>>, vector<1x2x32xf32>,
    %853 = tpu.concatenate %841, %841 in 1 : vector<4x32xf32>, vector<4x32xf32> -> vector<4x64xf32>
    %cst_410 = arith.constant 0.000000e+00 : f32
    %854 = vector.broadcast %cst_410 : f32 to vector<4x64xf32>
    %855 = arith.select %7, %853, %854 : vector<4x64xi1>, vector<4x64xf32>
    %c7_i32_411 = arith.constant 7 : i32
    %856 = arith.index_cast %c7_i32_411 : i32 to index
    %c0_412 = arith.constant 0 : index
    %c0_413 = arith.constant 0 : index
    %857 = vector.load %arg13[%856, %c0_412, %c0_413] : memref<8x2x128xf32, #tpu.memory_space<vmem>>, vector<1x2x128xf32>
    %858 = vector.shape_cast %857 : vector<1x2x128xf32> to vector<2x128xf32>
    %c7_i32_414 = arith.constant 7 : i32
    %859 = arith.subi %c7_i32_414, %c7_i32_411 : i32
    %860 = arith.index_cast %859 : i32 to index
    %c0_415 = arith.constant 0 : index
    %c0_416 = arith.constant 0 : index
    %861 = vector.load %arg14[%860, %c0_415, %c0_416] : memref<8x2x128xf32, #tpu.memory_space<vmem>>, vector<1x2x128xf32>
    %862 = vector.shape_cast %861 : vector<1x2x128xf32> to vector<2x128xf32>
    %863 = tpu.concatenate %858, %862 in 0 : vector<2x128xf32>, vector<2x128xf32> -> vector<4x128xf32>
    %cst_417 = arith.constant dense<0.000000e+00> : vector<4x128xf32>
    %864 = tpu.matmul %855, %559, %cst_417 {dimension_numbers = #tpu.dot_dimension_numbers<[1], [0], [0], [1], [0, 0, 1, 1], [], []>} : vector<4x64xf32>, vector<64x128xf32>, vector<4x128xf32> -> vector<4x128xf32>
    %865 = arith.addf %863, %864 : vector<4x128xf32>
    %866 = vector.extract_strided_slice %865 {offsets = [0, 0], sizes = [4, 96], strides = [1, 1]} : vector<4x128xf32> to vector<4x96xf32>
    %cst_418 = arith.constant 5.000000e-01 : f32
    %867 = vector.broadcast %cst_418 : f32 to vector<4x96xf32>
    %868 = arith.mulf %867, %866 : vector<4x96xf32>
    %869 = math.tanh %868 : vector<4x96xf32>
    %cst_419 = arith.constant 5.000000e-01 : f32
    %870 = vector.broadcast %cst_419 : f32 to vector<4x96xf32>
    %871 = arith.mulf %870, %869 : vector<4x96xf32>
    %cst_420 = arith.constant 5.000000e-01 : f32
    %872 = vector.broadcast %cst_420 : f32 to vector<4x96xf32>
    %873 = arith.addf %871, %872 : vector<4x96xf32>
    %874 = vector.extract_strided_slice %873 {offsets = [0, 0], sizes = [4, 32], strides = [1, 1]} : vector<4x96xf32> to vector<4x32xf32>
    %875 = vector.extract_strided_slice %873 {offsets = [0, 32], sizes = [4, 32], strides = [1, 1]} : vector<4x96xf32> to vector<4x32xf32>
    %876 = vector.extract_strided_slice %873 {offsets = [0, 64], sizes = [4, 32], strides = [1, 1]} : vector<4x96xf32> to vector<4x32xf32>
    %877 = vector.extract_strided_slice %865 {offsets = [0, 96], sizes = [4, 32], strides = [1, 1]} : vector<4x128xf32> to vector<4x32xf32>
    %878 = math.tanh %877 : vector<4x32xf32>
    %879 = arith.mulf %875, %839 : vector<4x32xf32>
    %880 = arith.mulf %874, %878 : vector<4x32xf32>
    %881 = arith.addf %879, %880 : vector<4x32xf32>
    %882 = math.tanh %881 : vector<4x32xf32>
    %883 = arith.mulf %876, %882 : vector<4x32xf32>
    %884 = vector.extract_strided_slice %883 {offsets = [0, 0], sizes = [2, 32], strides = [1, 1]} : vector<4x32xf32> to vector<2x32xf32>
    %885 = arith.index_cast %c7_i32_411 : i32 to index
    %c0_421 = arith.constant 0 : index
    %c0_422 = arith.constant 0 : index
    %886 = vector.load %arg17[%885, %c0_421, %c0_422] : memref<8x2x32xf32, #tpu.memory_space<vmem>>, vector<1x2x32xf32>
    %887 = vector.shape_cast %886 : vector<1x2x32xf32> to vector<2x32xf32>
    %888 = vector.shape_cast %884 : vector<2x32xf32> to vector<1x2x32xf32>
    tpu.vector_store %arg17[%885, %c0_421, %c0_422], %888 {strides = array<i32>} : memref<8x2x32xf32, #tpu.memory_space<vmem>>, vector<1x2x32xf32>,
    %889 = vector.extract_strided_slice %883 {offsets = [2, 0], sizes = [2, 32], strides = [1, 1]} : vector<4x32xf32> to vector<2x32xf32>
    %c7_i32_423 = arith.constant 7 : i32
    %890 = arith.subi %c7_i32_423, %c7_i32_411 : i32
    %891 = arith.index_cast %890 : i32 to index
    %c0_424 = arith.constant 0 : index
    %c0_425 = arith.constant 0 : index
    %892 = vector.load %arg18[%891, %c0_424, %c0_425] : memref<8x2x32xf32, #tpu.memory_space<vmem>>, vector<1x2x32xf32>
    %893 = vector.shape_cast %892 : vector<1x2x32xf32> to vector<2x32xf32>
    %894 = vector.shape_cast %889 : vector<2x32xf32> to vector<1x2x32xf32>
    tpu.vector_store %arg18[%891, %c0_424, %c0_425], %894 {strides = array<i32>} : memref<8x2x32xf32, #tpu.memory_space<vmem>>, vector<1x2x32xf32>,
    %895 = tpu.concatenate %883, %883 in 1 : vector<4x32xf32>, vector<4x32xf32> -> vector<4x64xf32>
    %cst_426 = arith.constant 0.000000e+00 : f32
    %896 = vector.broadcast %cst_426 : f32 to vector<4x64xf32>
    %897 = arith.select %7, %895, %896 : vector<4x64xi1>, vector<4x64xf32>
    %c8_i32_427 = arith.constant 8 : i32
    %c0_428 = arith.constant 0 : index
    %c0_429 = arith.constant 0 : index
    %898 = vector.load %arg7[%c0_428, %c0_429] : memref<1x64xf32, #tpu.memory_space<vmem>>, vector<1x64xf32>
    %c0_430 = arith.constant 0 : index
    %c0_431 = arith.constant 0 : index
    %899 = vector.load %arg9[%c0_430, %c0_431] : memref<1x64xf32, #tpu.memory_space<vmem>>, vector<1x64xf32>
    %c0_432 = arith.constant 0 : index
    %c0_433 = arith.constant 0 : index
    %900 = memref.load %arg8[%c0_432, %c0_433] : memref<1x1xf32, #tpu.memory_space<smem>>
    %c0_434 = arith.constant 0 : index
    %c0_435 = arith.constant 0 : index
    %901 = memref.load %arg10[%c0_434, %c0_435] : memref<1x1xf32, #tpu.memory_space<smem>>
    %c0_436 = arith.constant 0 : index
    %c0_437 = arith.constant 0 : index
    %c0_438 = arith.constant 0 : index
    %902 = vector.load %arg17[%c0_436, %c0_437, %c0_438] : memref<8x2x32xf32, #tpu.memory_space<vmem>>, vector<1x2x32xf32>
    %903 = vector.shape_cast %902 : vector<1x2x32xf32> to vector<2x32xf32>
    %c0_439 = arith.constant 0 : index
    %c0_440 = arith.constant 0 : index
    %c0_441 = arith.constant 0 : index
    %904 = vector.load %arg18[%c0_439, %c0_440, %c0_441] : memref<8x2x32xf32, #tpu.memory_space<vmem>>, vector<1x2x32xf32>
    %905 = vector.shape_cast %904 : vector<1x2x32xf32> to vector<2x32xf32>
    %906 = tpu.concatenate %903, %905 in 1 : vector<2x32xf32>, vector<2x32xf32> -> vector<2x64xf32>
    %907 = math.tanh %906 : vector<2x64xf32>
    %908 = vector.broadcast %898 : vector<1x64xf32> to vector<2x64xf32>
    %909 = arith.mulf %907, %908 : vector<2x64xf32>
    %cst_442 = arith.constant dense<0.000000e+00> : vector<2xf32>
    %910 = vector.multi_reduction <add>, %909, %cst_442 [1] : vector<2x64xf32> to vector<2xf32>
    %911 = vector.shape_cast %910 : vector<2xf32> to vector<2x1xf32>
    %912 = vector.broadcast %899 : vector<1x64xf32> to vector<2x64xf32>
    %913 = arith.mulf %907, %912 : vector<2x64xf32>
    %cst_443 = arith.constant dense<0.000000e+00> : vector<2xf32>
    %914 = vector.multi_reduction <add>, %913, %cst_443 [1] : vector<2x64xf32> to vector<2xf32>
    %915 = vector.shape_cast %914 : vector<2xf32> to vector<2x1xf32>
    %c1_444 = arith.constant 1 : index
    %c0_445 = arith.constant 0 : index
    %c0_446 = arith.constant 0 : index
    %916 = vector.load %arg17[%c1_444, %c0_445, %c0_446] : memref<8x2x32xf32, #tpu.memory_space<vmem>>, vector<1x2x32xf32>
    %917 = vector.shape_cast %916 : vector<1x2x32xf32> to vector<2x32xf32>
    %c1_447 = arith.constant 1 : index
    %c0_448 = arith.constant 0 : index
    %c0_449 = arith.constant 0 : index
    %918 = vector.load %arg18[%c1_447, %c0_448, %c0_449] : memref<8x2x32xf32, #tpu.memory_space<vmem>>, vector<1x2x32xf32>
    %919 = vector.shape_cast %918 : vector<1x2x32xf32> to vector<2x32xf32>
    %920 = tpu.concatenate %917, %919 in 1 : vector<2x32xf32>, vector<2x32xf32> -> vector<2x64xf32>
    %921 = math.tanh %920 : vector<2x64xf32>
    %922 = vector.broadcast %898 : vector<1x64xf32> to vector<2x64xf32>
    %923 = arith.mulf %921, %922 : vector<2x64xf32>
    %cst_450 = arith.constant dense<0.000000e+00> : vector<2xf32>
    %924 = vector.multi_reduction <add>, %923, %cst_450 [1] : vector<2x64xf32> to vector<2xf32>
    %925 = vector.shape_cast %924 : vector<2xf32> to vector<2x1xf32>
    %926 = vector.broadcast %899 : vector<1x64xf32> to vector<2x64xf32>
    %927 = arith.mulf %921, %926 : vector<2x64xf32>
    %cst_451 = arith.constant dense<0.000000e+00> : vector<2xf32>
    %928 = vector.multi_reduction <add>, %927, %cst_451 [1] : vector<2x64xf32> to vector<2xf32>
    %929 = vector.shape_cast %928 : vector<2xf32> to vector<2x1xf32>
    %c2_452 = arith.constant 2 : index
    %c0_453 = arith.constant 0 : index
    %c0_454 = arith.constant 0 : index
    %930 = vector.load %arg17[%c2_452, %c0_453, %c0_454] : memref<8x2x32xf32, #tpu.memory_space<vmem>>, vector<1x2x32xf32>
    %931 = vector.shape_cast %930 : vector<1x2x32xf32> to vector<2x32xf32>
    %c2_455 = arith.constant 2 : index
    %c0_456 = arith.constant 0 : index
    %c0_457 = arith.constant 0 : index
    %932 = vector.load %arg18[%c2_455, %c0_456, %c0_457] : memref<8x2x32xf32, #tpu.memory_space<vmem>>, vector<1x2x32xf32>
    %933 = vector.shape_cast %932 : vector<1x2x32xf32> to vector<2x32xf32>
    %934 = tpu.concatenate %931, %933 in 1 : vector<2x32xf32>, vector<2x32xf32> -> vector<2x64xf32>
    %935 = math.tanh %934 : vector<2x64xf32>
    %936 = vector.broadcast %898 : vector<1x64xf32> to vector<2x64xf32>
    %937 = arith.mulf %935, %936 : vector<2x64xf32>
    %cst_458 = arith.constant dense<0.000000e+00> : vector<2xf32>
    %938 = vector.multi_reduction <add>, %937, %cst_458 [1] : vector<2x64xf32> to vector<2xf32>
    %939 = vector.shape_cast %938 : vector<2xf32> to vector<2x1xf32>
    %940 = vector.broadcast %899 : vector<1x64xf32> to vector<2x64xf32>
    %941 = arith.mulf %935, %940 : vector<2x64xf32>
    %cst_459 = arith.constant dense<0.000000e+00> : vector<2xf32>
    %942 = vector.multi_reduction <add>, %941, %cst_459 [1] : vector<2x64xf32> to vector<2xf32>
    %943 = vector.shape_cast %942 : vector<2xf32> to vector<2x1xf32>
    %c3_460 = arith.constant 3 : index
    %c0_461 = arith.constant 0 : index
    %c0_462 = arith.constant 0 : index
    %944 = vector.load %arg17[%c3_460, %c0_461, %c0_462] : memref<8x2x32xf32, #tpu.memory_space<vmem>>, vector<1x2x32xf32>
    %945 = vector.shape_cast %944 : vector<1x2x32xf32> to vector<2x32xf32>
    %c3_463 = arith.constant 3 : index
    %c0_464 = arith.constant 0 : index
    %c0_465 = arith.constant 0 : index
    %946 = vector.load %arg18[%c3_463, %c0_464, %c0_465] : memref<8x2x32xf32, #tpu.memory_space<vmem>>, vector<1x2x32xf32>
    %947 = vector.shape_cast %946 : vector<1x2x32xf32> to vector<2x32xf32>
    %948 = tpu.concatenate %945, %947 in 1 : vector<2x32xf32>, vector<2x32xf32> -> vector<2x64xf32>
    %949 = math.tanh %948 : vector<2x64xf32>
    %950 = vector.broadcast %898 : vector<1x64xf32> to vector<2x64xf32>
    %951 = arith.mulf %949, %950 : vector<2x64xf32>
    %cst_466 = arith.constant dense<0.000000e+00> : vector<2xf32>
    %952 = vector.multi_reduction <add>, %951, %cst_466 [1] : vector<2x64xf32> to vector<2xf32>
    %953 = vector.shape_cast %952 : vector<2xf32> to vector<2x1xf32>
    %954 = vector.broadcast %899 : vector<1x64xf32> to vector<2x64xf32>
    %955 = arith.mulf %949, %954 : vector<2x64xf32>
    %cst_467 = arith.constant dense<0.000000e+00> : vector<2xf32>
    %956 = vector.multi_reduction <add>, %955, %cst_467 [1] : vector<2x64xf32> to vector<2xf32>
    %957 = vector.shape_cast %956 : vector<2xf32> to vector<2x1xf32>
    %c4_468 = arith.constant 4 : index
    %c0_469 = arith.constant 0 : index
    %c0_470 = arith.constant 0 : index
    %958 = vector.load %arg17[%c4_468, %c0_469, %c0_470] : memref<8x2x32xf32, #tpu.memory_space<vmem>>, vector<1x2x32xf32>
    %959 = vector.shape_cast %958 : vector<1x2x32xf32> to vector<2x32xf32>
    %c4_471 = arith.constant 4 : index
    %c0_472 = arith.constant 0 : index
    %c0_473 = arith.constant 0 : index
    %960 = vector.load %arg18[%c4_471, %c0_472, %c0_473] : memref<8x2x32xf32, #tpu.memory_space<vmem>>, vector<1x2x32xf32>
    %961 = vector.shape_cast %960 : vector<1x2x32xf32> to vector<2x32xf32>
    %962 = tpu.concatenate %959, %961 in 1 : vector<2x32xf32>, vector<2x32xf32> -> vector<2x64xf32>
    %963 = math.tanh %962 : vector<2x64xf32>
    %964 = vector.broadcast %898 : vector<1x64xf32> to vector<2x64xf32>
    %965 = arith.mulf %963, %964 : vector<2x64xf32>
    %cst_474 = arith.constant dense<0.000000e+00> : vector<2xf32>
    %966 = vector.multi_reduction <add>, %965, %cst_474 [1] : vector<2x64xf32> to vector<2xf32>
    %967 = vector.shape_cast %966 : vector<2xf32> to vector<2x1xf32>
    %968 = vector.broadcast %899 : vector<1x64xf32> to vector<2x64xf32>
    %969 = arith.mulf %963, %968 : vector<2x64xf32>
    %cst_475 = arith.constant dense<0.000000e+00> : vector<2xf32>
    %970 = vector.multi_reduction <add>, %969, %cst_475 [1] : vector<2x64xf32> to vector<2xf32>
    %971 = vector.shape_cast %970 : vector<2xf32> to vector<2x1xf32>
    %c5_476 = arith.constant 5 : index
    %c0_477 = arith.constant 0 : index
    %c0_478 = arith.constant 0 : index
    %972 = vector.load %arg17[%c5_476, %c0_477, %c0_478] : memref<8x2x32xf32, #tpu.memory_space<vmem>>, vector<1x2x32xf32>
    %973 = vector.shape_cast %972 : vector<1x2x32xf32> to vector<2x32xf32>
    %c5_479 = arith.constant 5 : index
    %c0_480 = arith.constant 0 : index
    %c0_481 = arith.constant 0 : index
    %974 = vector.load %arg18[%c5_479, %c0_480, %c0_481] : memref<8x2x32xf32, #tpu.memory_space<vmem>>, vector<1x2x32xf32>
    %975 = vector.shape_cast %974 : vector<1x2x32xf32> to vector<2x32xf32>
    %976 = tpu.concatenate %973, %975 in 1 : vector<2x32xf32>, vector<2x32xf32> -> vector<2x64xf32>
    %977 = math.tanh %976 : vector<2x64xf32>
    %978 = vector.broadcast %898 : vector<1x64xf32> to vector<2x64xf32>
    %979 = arith.mulf %977, %978 : vector<2x64xf32>
    %cst_482 = arith.constant dense<0.000000e+00> : vector<2xf32>
    %980 = vector.multi_reduction <add>, %979, %cst_482 [1] : vector<2x64xf32> to vector<2xf32>
    %981 = vector.shape_cast %980 : vector<2xf32> to vector<2x1xf32>
    %982 = vector.broadcast %899 : vector<1x64xf32> to vector<2x64xf32>
    %983 = arith.mulf %977, %982 : vector<2x64xf32>
    %cst_483 = arith.constant dense<0.000000e+00> : vector<2xf32>
    %984 = vector.multi_reduction <add>, %983, %cst_483 [1] : vector<2x64xf32> to vector<2xf32>
    %985 = vector.shape_cast %984 : vector<2xf32> to vector<2x1xf32>
    %c6_484 = arith.constant 6 : index
    %c0_485 = arith.constant 0 : index
    %c0_486 = arith.constant 0 : index
    %986 = vector.load %arg17[%c6_484, %c0_485, %c0_486] : memref<8x2x32xf32, #tpu.memory_space<vmem>>, vector<1x2x32xf32>
    %987 = vector.shape_cast %986 : vector<1x2x32xf32> to vector<2x32xf32>
    %c6_487 = arith.constant 6 : index
    %c0_488 = arith.constant 0 : index
    %c0_489 = arith.constant 0 : index
    %988 = vector.load %arg18[%c6_487, %c0_488, %c0_489] : memref<8x2x32xf32, #tpu.memory_space<vmem>>, vector<1x2x32xf32>
    %989 = vector.shape_cast %988 : vector<1x2x32xf32> to vector<2x32xf32>
    %990 = tpu.concatenate %987, %989 in 1 : vector<2x32xf32>, vector<2x32xf32> -> vector<2x64xf32>
    %991 = math.tanh %990 : vector<2x64xf32>
    %992 = vector.broadcast %898 : vector<1x64xf32> to vector<2x64xf32>
    %993 = arith.mulf %991, %992 : vector<2x64xf32>
    %cst_490 = arith.constant dense<0.000000e+00> : vector<2xf32>
    %994 = vector.multi_reduction <add>, %993, %cst_490 [1] : vector<2x64xf32> to vector<2xf32>
    %995 = vector.shape_cast %994 : vector<2xf32> to vector<2x1xf32>
    %996 = vector.broadcast %899 : vector<1x64xf32> to vector<2x64xf32>
    %997 = arith.mulf %991, %996 : vector<2x64xf32>
    %cst_491 = arith.constant dense<0.000000e+00> : vector<2xf32>
    %998 = vector.multi_reduction <add>, %997, %cst_491 [1] : vector<2x64xf32> to vector<2xf32>
    %999 = vector.shape_cast %998 : vector<2xf32> to vector<2x1xf32>
    %c7_492 = arith.constant 7 : index
    %c0_493 = arith.constant 0 : index
    %c0_494 = arith.constant 0 : index
    %1000 = vector.load %arg17[%c7_492, %c0_493, %c0_494] : memref<8x2x32xf32, #tpu.memory_space<vmem>>, vector<1x2x32xf32>
    %1001 = vector.shape_cast %1000 : vector<1x2x32xf32> to vector<2x32xf32>
    %c7_495 = arith.constant 7 : index
    %c0_496 = arith.constant 0 : index
    %c0_497 = arith.constant 0 : index
    %1002 = vector.load %arg18[%c7_495, %c0_496, %c0_497] : memref<8x2x32xf32, #tpu.memory_space<vmem>>, vector<1x2x32xf32>
    %1003 = vector.shape_cast %1002 : vector<1x2x32xf32> to vector<2x32xf32>
    %1004 = tpu.concatenate %1001, %1003 in 1 : vector<2x32xf32>, vector<2x32xf32> -> vector<2x64xf32>
    %1005 = math.tanh %1004 : vector<2x64xf32>
    %1006 = vector.broadcast %898 : vector<1x64xf32> to vector<2x64xf32>
    %1007 = arith.mulf %1005, %1006 : vector<2x64xf32>
    %cst_498 = arith.constant dense<0.000000e+00> : vector<2xf32>
    %1008 = vector.multi_reduction <add>, %1007, %cst_498 [1] : vector<2x64xf32> to vector<2xf32>
    %1009 = vector.shape_cast %1008 : vector<2xf32> to vector<2x1xf32>
    %1010 = vector.broadcast %899 : vector<1x64xf32> to vector<2x64xf32>
    %1011 = arith.mulf %1005, %1010 : vector<2x64xf32>
    %cst_499 = arith.constant dense<0.000000e+00> : vector<2xf32>
    %1012 = vector.multi_reduction <add>, %1011, %cst_499 [1] : vector<2x64xf32> to vector<2xf32>
    %1013 = vector.shape_cast %1012 : vector<2xf32> to vector<2x1xf32>
    %1014 = tpu.concatenate %911, %925, %939, %953, %967, %981, %995, %1009 in 1 : vector<2x1xf32>, vector<2x1xf32>, vector<2x1xf32>, vector<2x1xf32>, vector<2x1xf32>, vector<2x1xf32>, vector<2x1xf32>, vector<2x1xf32> -> vector<2x8xf32>
    %1015 = vector.broadcast %900 : f32 to vector<2x8xf32>
    %1016 = arith.addf %1014, %1015 : vector<2x8xf32>
    %1017 = tpu.concatenate %915, %929, %943, %957, %971, %985, %999, %1013 in 1 : vector<2x1xf32>, vector<2x1xf32>, vector<2x1xf32>, vector<2x1xf32>, vector<2x1xf32>, vector<2x1xf32>, vector<2x1xf32>, vector<2x1xf32> -> vector<2x8xf32>
    %1018 = vector.broadcast %901 : f32 to vector<2x8xf32>
    %1019 = arith.addf %1017, %1018 : vector<2x8xf32>
    %c0_500 = arith.constant 0 : index
    %c0_501 = arith.constant 0 : index
    %1020 = vector.load %arg12[%c0_500, %c0_501] : memref<2x8xf32, #tpu.memory_space<vmem>>, vector<2x8xf32>
    tpu.vector_store %arg12[%c0_500, %c0_501], %1019 {strides = array<i32>} : memref<2x8xf32, #tpu.memory_space<vmem>>, vector<2x8xf32>,
    %cst_502 = arith.constant dense<0xFF800000> : vector<2xf32>
    %1021 = vector.multi_reduction <maximumf>, %1016, %cst_502 [1] : vector<2x8xf32> to vector<2xf32>
    %1022 = vector.shape_cast %1021 : vector<2xf32> to vector<2x1xf32>
    %1023 = vector.broadcast %1022 : vector<2x1xf32> to vector<2x8xf32>
    %1024 = arith.subf %1016, %1023 : vector<2x8xf32>
    %1025 = math.exp %1024 : vector<2x8xf32>
    %cst_503 = arith.constant dense<0.000000e+00> : vector<2xf32>
    %1026 = vector.multi_reduction <add>, %1025, %cst_503 [1] : vector<2x8xf32> to vector<2xf32>
    %1027 = vector.shape_cast %1026 : vector<2xf32> to vector<2x1xf32>
    %1028 = tpu.reciprocal %1027 {approx = true} : vector<2x1xf32> -> vector<2x1xf32>
    %1029 = vector.broadcast %1028 : vector<2x1xf32> to vector<2x8xf32>
    %1030 = arith.mulf %1025, %1029 : vector<2x8xf32>
    %1031 = vector.extract_strided_slice %1030 {offsets = [0, 0], sizes = [2, 1], strides = [1, 1]} : vector<2x8xf32> to vector<2x1xf32>
    %1032 = vector.broadcast %1031 : vector<2x1xf32> to vector<2x64xf32>
    %1033 = arith.mulf %1032, %906 : vector<2x64xf32>
    %1034 = vector.extract_strided_slice %1030 {offsets = [0, 1], sizes = [2, 1], strides = [1, 1]} : vector<2x8xf32> to vector<2x1xf32>
    %1035 = vector.broadcast %1034 : vector<2x1xf32> to vector<2x64xf32>
    %1036 = arith.mulf %1035, %920 : vector<2x64xf32>
    %1037 = arith.addf %1033, %1036 : vector<2x64xf32>
    %1038 = vector.extract_strided_slice %1030 {offsets = [0, 2], sizes = [2, 1], strides = [1, 1]} : vector<2x8xf32> to vector<2x1xf32>
    %1039 = vector.broadcast %1038 : vector<2x1xf32> to vector<2x64xf32>
    %1040 = arith.mulf %1039, %934 : vector<2x64xf32>
    %1041 = arith.addf %1037, %1040 : vector<2x64xf32>
    %1042 = vector.extract_strided_slice %1030 {offsets = [0, 3], sizes = [2, 1], strides = [1, 1]} : vector<2x8xf32> to vector<2x1xf32>
    %1043 = vector.broadcast %1042 : vector<2x1xf32> to vector<2x64xf32>
    %1044 = arith.mulf %1043, %948 : vector<2x64xf32>
    %1045 = arith.addf %1041, %1044 : vector<2x64xf32>
    %1046 = vector.extract_strided_slice %1030 {offsets = [0, 4], sizes = [2, 1], strides = [1, 1]} : vector<2x8xf32> to vector<2x1xf32>
    %1047 = vector.broadcast %1046 : vector<2x1xf32> to vector<2x64xf32>
    %1048 = arith.mulf %1047, %962 : vector<2x64xf32>
    %1049 = arith.addf %1045, %1048 : vector<2x64xf32>
    %1050 = vector.extract_strided_slice %1030 {offsets = [0, 5], sizes = [2, 1], strides = [1, 1]} : vector<2x8xf32> to vector<2x1xf32>
    %1051 = vector.broadcast %1050 : vector<2x1xf32> to vector<2x64xf32>
    %1052 = arith.mulf %1051, %976 : vector<2x64xf32>
    %1053 = arith.addf %1049, %1052 : vector<2x64xf32>
    %1054 = vector.extract_strided_slice %1030 {offsets = [0, 6], sizes = [2, 1], strides = [1, 1]} : vector<2x8xf32> to vector<2x1xf32>
    %1055 = vector.broadcast %1054 : vector<2x1xf32> to vector<2x64xf32>
    %1056 = arith.mulf %1055, %990 : vector<2x64xf32>
    %1057 = arith.addf %1053, %1056 : vector<2x64xf32>
    %1058 = vector.extract_strided_slice %1030 {offsets = [0, 7], sizes = [2, 1], strides = [1, 1]} : vector<2x8xf32> to vector<2x1xf32>
    %1059 = vector.broadcast %1058 : vector<2x1xf32> to vector<2x64xf32>
    %1060 = arith.mulf %1059, %1004 : vector<2x64xf32>
    %1061 = arith.addf %1057, %1060 : vector<2x64xf32>
    %c0_504 = arith.constant 0 : index
    %c0_505 = arith.constant 0 : index
    %1062 = vector.load %arg11[%c0_504, %c0_505] : memref<2x64xf32, #tpu.memory_space<vmem>>, vector<2x64xf32>
    tpu.vector_store %arg11[%c0_504, %c0_505], %1061 {strides = array<i32>} : memref<2x64xf32, #tpu.memory_space<vmem>>, vector<2x64xf32>,
    return
  }
}

</mosaic_0001>

<llo_original>
// kernel: lstm_mil_forward.1
$region0: #{lstm_mil_forward.1}
  #allocation0 [shape = 'u32[]', space=smem, size = 0x4, offset = 0x4, fixed_abs, tag = 'smem constant byte address 0x4 - core index']
  #allocation1 [shape = 'u32[144,128]{1,0:T(1,128)}', space=vmem, size = 0x12000, scoped, tag = 'internal scratch']
  #allocation2 [shape = 'f32[8,2,128]{2,1,0:T(2,128)}', space=vmem, size = 0x2000, scoped, tag = 'scratch operand']
  #allocation3 [shape = 'f32[8,2,128]{2,1,0:T(2,128)}', space=vmem, size = 0x2000, scoped, tag = 'scratch operand']
  #allocation4 [shape = 'f32[8,2,32]{2,1,0:T(2,128)}', space=vmem, size = 0x2000, scoped, tag = 'scratch operand']
  #allocation5 [shape = 'f32[8,2,32]{2,1,0:T(2,128)}', space=vmem, size = 0x2000, scoped, tag = 'scratch operand']
  #allocation6 [shape = 'f32[8,2,32]{2,1,0:T(2,128)}', space=vmem, size = 0x2000, scoped, tag = 'scratch operand']
  #allocation7 [shape = 'f32[8,2,32]{2,1,0:T(2,128)}', space=vmem, size = 0x2000, scoped, tag = 'scratch operand']
  #allocation8 [shape = 'f32[1,1]{1,0:T(1,128)S(6)}', space=smem, size = 0x200, scoped, tag = 'scoped memory for lstm_mil_forward.1']
  #allocation9 [shape = 'f32[1,1]{1,0:T(1,128)S(6)}', space=smem, size = 0x200, scoped, tag = 'scoped memory for lstm_mil_forward.1']
  %s0 = inlined_call_operand.hbm [shape: f32[2,8,64], index: 0, kind: input, shape index: {}]
  %s1 = inlined_call_operand.hbm [shape: f32[64,256], index: 1, kind: input, shape index: {}]
  %s2 = inlined_call_operand.hbm [shape: f32[64,128], index: 2, kind: input, shape index: {}]
  %s3 = inlined_call_operand.vmem [shape: f32[1,256], index: 3, kind: input, shape index: {}]
  %s4 = inlined_call_operand.hbm [shape: f32[64,256], index: 4, kind: input, shape index: {}]
  %s5 = inlined_call_operand.hbm [shape: f32[64,128], index: 5, kind: input, shape index: {}]
  %s6 = inlined_call_operand.vmem [shape: f32[1,256], index: 6, kind: input, shape index: {}]
  %s7 = inlined_call_operand.vmem [shape: f32[1,64], index: 7, kind: input, shape index: {}]
  %s8 = inlined_call_operand.<no memory space> [shape: f32[1,1], index: 8, kind: input, shape index: {}]
  %s9 = inlined_call_operand.vmem [shape: f32[1,64], index: 9, kind: input, shape index: {}]
  %s10 = inlined_call_operand.<no memory space> [shape: f32[1,1], index: 10, kind: input, shape index: {}]
  %s11 = inlined_call_operand.hbm [shape: f32[2,64], index: 11, kind: output, shape index: {0}]
  %s12 = inlined_call_operand.hbm [shape: f32[2,8], index: 12, kind: output, shape index: {1}]
  %13 = xla_tuple %s11, %s12
  %s14 = sld [smem:[#allocation0]]
  $region82: #{lstm_mil_forward.1} parent=0
    _
  %s16 = ssub.s32 1, %s14
  %s17 = scalar_select 0, %s16, %s14
  %18 = sst [smem:[#allocation8]] %s8
  %19 = sst [smem:[#allocation9]] %s10
  $region1: #{lstm_mil_forward.1} parent=0
    #allocation10 [shape = 'u8[8192]{0}', space=vmem, size = 0x2000, scoped, tag = 'input window, operand 0, single buffered']
    #allocation11 [shape = 's32[1]{0}', space=sflag, size = 0x4, scoped, tag = 'scoped memory for lstm_mil_forward.1']
    #allocation12 [shape = 's32[1]{0}', space=sflag, size = 0x4, scoped, tag = 'scoped memory for lstm_mil_forward.1']
    #allocation13 [shape = 'u8[65536]{0}', space=vmem, size = 0x10000, scoped, tag = 'input window, operand 1, single buffered']
    #allocation14 [shape = 's32[1]{0}', space=sflag, size = 0x4, scoped, tag = 'scoped memory for lstm_mil_forward.1']
    #allocation15 [shape = 'u8[32768]{0}', space=vmem, size = 0x8000, scoped, tag = 'input window, operand 2, single buffered']
    #allocation16 [shape = 'u8[65536]{0}', space=vmem, size = 0x10000, scoped, tag = 'input window, operand 4, single buffered']
    #allocation17 [shape = 's32[1]{0}', space=sflag, size = 0x4, scoped, tag = 'scoped memory for lstm_mil_forward.1']
    #allocation18 [shape = 'u8[32768]{0}', space=vmem, size = 0x8000, scoped, tag = 'input window, operand 5, single buffered']
    #allocation19 [shape = 'u8[1024]{0}', space=vmem, size = 0x400, scoped, tag = 'output window, operand 0, single buffered']
    #allocation20 [shape = 'u8[1024]{0}', space=vmem, size = 0x400, scoped, tag = 'output window, operand 1, single buffered']
    #allocation21 [shape = 's32[1]{0}', space=sflag, size = 0x4, scoped, tag = 'scoped memory for lstm_mil_forward.1']
    %20 = vsyncpa [#allocation11], 0
    %21 = vsyncpa [#allocation14], 0
    %22 = vsyncpa [#allocation17], 0
    %23 = vsyncpa [#allocation12], 0
    %24 = vsyncpa [#allocation21], 0
    // Predicated region
    $region2: #{lstm_mil_forward.1} parent=1 // pred_check
      _
    $region3: #{lstm_mil_forward.1} parent=1 // pred_check_branch
      %26 = sbr.rel (0) target = $region5
    $region4: #{lstm_mil_forward.1} parent=1 // pred_region
      %s28 = ssub.s32 256, 256
      %29 = vsyncadd [#allocation11], %s28
      %s30 = sshll.u32 [#allocation10], 4
      %s31 = int_to_ptr.vmem [resolvable:$true] %s30
      %36 = dma.hbm_to_vmem [thread:$0]  %s0, 256, %s31, [#allocation11], 128, 128, 8
    $region5: #{lstm_mil_forward.1} parent=1 // pred_fallthru
      _
    // Predicated region
    $region6: #{lstm_mil_forward.1} parent=1 // pred_check
      _
    $region7: #{lstm_mil_forward.1} parent=1 // pred_check_branch
      %38 = sbr.rel (0) target = $region9
    $region8: #{lstm_mil_forward.1} parent=1 // pred_region
      %s40 = ssub.s32 2048, 2048
      %41 = vsyncadd [#allocation14], %s40
      %s42 = sshll.u32 [#allocation13], 4
      %s43 = int_to_ptr.vmem [resolvable:$true] %s42
      %48 = dma.hbm_to_vmem [thread:$0]  %s1, 2048, %s43, [#allocation14], 256, 256, 16
    $region9: #{lstm_mil_forward.1} parent=1 // pred_fallthru
      _
    // Predicated region
    $region10: #{lstm_mil_forward.1} parent=1 // pred_check
      _
    $region11: #{lstm_mil_forward.1} parent=1 // pred_check_branch
      %50 = sbr.rel (0) target = $region13
    $region12: #{lstm_mil_forward.1} parent=1 // pred_region
      %s52 = ssub.s32 1024, 1024
      %53 = vsyncadd [#allocation14], %s52
      %s54 = sshll.u32 [#allocation15], 4
      %s55 = int_to_ptr.vmem [resolvable:$true] %s54
      %60 = dma.hbm_to_vmem [thread:$0]  %s2, 1024, %s55, [#allocation14], 128, 128, 8
    $region13: #{lstm_mil_forward.1} parent=1 // pred_fallthru
      _
    // Predicated region
    $region14: #{lstm_mil_forward.1} parent=1 // pred_check
      _
    $region15: #{lstm_mil_forward.1} parent=1 // pred_check_branch
      %62 = sbr.rel (0) target = $region17
    $region16: #{lstm_mil_forward.1} parent=1 // pred_region
      _
    $region17: #{lstm_mil_forward.1} parent=1 // pred_fallthru
      _
    // Predicated region
    $region18: #{lstm_mil_forward.1} parent=1 // pred_check
      _
    $region19: #{lstm_mil_forward.1} parent=1 // pred_check_branch
      %64 = sbr.rel (0) target = $region21
    $region20: #{lstm_mil_forward.1} parent=1 // pred_region
      %s66 = ssub.s32 2048, 2048
      %67 = vsyncadd [#allocation17], %s66
      %s68 = sshll.u32 [#allocation16], 4
      %s69 = int_to_ptr.vmem [resolvable:$true] %s68
      %74 = dma.hbm_to_vmem [thread:$0]  %s4, 2048, %s69, [#allocation17], 256, 256, 16
    $region21: #{lstm_mil_forward.1} parent=1 // pred_fallthru
      _
    // Predicated region
    $region22: #{lstm_mil_forward.1} parent=1 // pred_check
      _
    $region23: #{lstm_mil_forward.1} parent=1 // pred_check_branch
      %76 = sbr.rel (0) target = $region25
    $region24: #{lstm_mil_forward.1} parent=1 // pred_region
      %s78 = ssub.s32 1024, 1024
      %79 = vsyncadd [#allocation17], %s78
      %s80 = sshll.u32 [#allocation18], 4
      %s81 = int_to_ptr.vmem [resolvable:$true] %s80
      %86 = dma.hbm_to_vmem [thread:$0]  %s5, 1024, %s81, [#allocation17], 128, 128, 8
    $region25: #{lstm_mil_forward.1} parent=1 // pred_fallthru
      _
    // Predicated region
    $region26: #{lstm_mil_forward.1} parent=1 // pred_check
      _
    $region27: #{lstm_mil_forward.1} parent=1 // pred_check_branch
      %88 = sbr.rel (0) target = $region29
    $region28: #{lstm_mil_forward.1} parent=1 // pred_region
      _
    $region29: #{lstm_mil_forward.1} parent=1 // pred_fallthru
      _
    // Predicated region
    $region30: #{lstm_mil_forward.1} parent=1 // pred_check
      _
    $region31: #{lstm_mil_forward.1} parent=1 // pred_check_branch
      %90 = sbr.rel (0) target = $region33
    $region32: #{lstm_mil_forward.1} parent=1 // pred_region
      _
    $region33: #{lstm_mil_forward.1} parent=1 // pred_fallthru
      _
    // Predicated region
    $region34: #{lstm_mil_forward.1} parent=1 // pred_check
      _
    $region35: #{lstm_mil_forward.1} parent=1 // pred_check_branch
      %92 = sbr.rel (0) target = $region37
    $region36: #{lstm_mil_forward.1} parent=1 // pred_region
      _
    $region37: #{lstm_mil_forward.1} parent=1 // pred_fallthru
      _
    // Predicated region
    $region38: #{lstm_mil_forward.1} parent=1 // pred_check
      _
    $region39: #{lstm_mil_forward.1} parent=1 // pred_check_branch
      %94 = sbr.rel (0) target = $region41
    $region40: #{lstm_mil_forward.1} parent=1 // pred_region
      _
    $region41: #{lstm_mil_forward.1} parent=1 // pred_fallthru
      _
    // Predicated region
    $region42: #{lstm_mil_forward.1} parent=1 // pred_check
      _
    $region43: #{lstm_mil_forward.1} parent=1 // pred_check_branch
      %96 = sbr.rel (0) target = $region45
    $region44: #{lstm_mil_forward.1} parent=1 // pred_region
      _
    $region45: #{lstm_mil_forward.1} parent=1 // pred_fallthru
      _
    // Predicated region
    $region46: #{lstm_mil_forward.1} parent=1 // pred_check
      _
    $region47: #{lstm_mil_forward.1} parent=1 // pred_check_branch
      %98 = sbr.rel (0) target = $region49
    $region48: #{lstm_mil_forward.1} parent=1 // pred_region
      %99 = dma.done [#allocation11], 256
    $region49: #{lstm_mil_forward.1} parent=1 // pred_fallthru
      _
    // Predicated region
    $region50: #{lstm_mil_forward.1} parent=1 // pred_check
      _
    $region51: #{lstm_mil_forward.1} parent=1 // pred_check_branch
      %101 = sbr.rel (0) target = $region53
    $region52: #{lstm_mil_forward.1} parent=1 // pred_region
      %102 = dma.done [#allocation14], 2048
    $region53: #{lstm_mil_forward.1} parent=1 // pred_fallthru
      _
    // Predicated region
    $region54: #{lstm_mil_forward.1} parent=1 // pred_check
      _
    $region55: #{lstm_mil_forward.1} parent=1 // pred_check_branch
      %104 = sbr.rel (0) target = $region57
    $region56: #{lstm_mil_forward.1} parent=1 // pred_region
      %105 = dma.done [#allocation14], 1024
    $region57: #{lstm_mil_forward.1} parent=1 // pred_fallthru
      _
    // Predicated region
    $region58: #{lstm_mil_forward.1} parent=1 // pred_check
      _
    $region59: #{lstm_mil_forward.1} parent=1 // pred_check_branch
      %107 = sbr.rel (0) target = $region61
    $region60: #{lstm_mil_forward.1} parent=1 // pred_region
      %108 = dma.done [#allocation17], 2048
    $region61: #{lstm_mil_forward.1} parent=1 // pred_fallthru
      _
    // Predicated region
    $region62: #{lstm_mil_forward.1} parent=1 // pred_check
      _
    $region63: #{lstm_mil_forward.1} parent=1 // pred_check_branch
      %110 = sbr.rel (0) target = $region65
    $region64: #{lstm_mil_forward.1} parent=1 // pred_region
      %111 = dma.done [#allocation17], 1024
    $region65: #{lstm_mil_forward.1} parent=1 // pred_fallthru
      _
    %v112 = vlaneseq
    %v113 = vshrl.u32 %v112, 7
    %v114 = vlaneseq
    %v115 = vand.u32 %v114, 127
    %vm116 = vcmp.lt.s32.totalorder %v113, 2
    %vm117 = vcmp.lt.s32.totalorder %v115, 32
    %vm118 = vmxor %vm116, %vm117
    %vm119 = vmxor %vm118, 1
    %v120 = vld [vmem:[#allocation10] sm:$0x1]
    %v121 = vld [vmem:[#allocation10 + $0x8] sm:$0x1]
    %v122 = vld [vmem:[#allocation10 + $0x1] sm:$0x1]
    %v123 = vld [vmem:[#allocation10 + $0x9] sm:$0x1]
    %v124 = vld [vmem:[#allocation10 + $0x2] sm:$0x1]
    %v125 = vld [vmem:[#allocation10 + $0xa] sm:$0x1]
    %v126 = vld [vmem:[#allocation10 + $0x3] sm:$0x1]
    %v127 = vld [vmem:[#allocation10 + $0xb] sm:$0x1]
    %v128 = vld [vmem:[#allocation10 + $0x4] sm:$0x1]
    %v129 = vld [vmem:[#allocation10 + $0xc] sm:$0x1]
    %v130 = vld [vmem:[#allocation10 + $0x5] sm:$0x1]
    %v131 = vld [vmem:[#allocation10 + $0xd] sm:$0x1]
    %v132 = vld [vmem:[#allocation10 + $0x6] sm:$0x1]
    %v133 = vld [vmem:[#allocation10 + $0xe] sm:$0x1]
    %v134 = vld [vmem:[#allocation10 + $0x7] sm:$0x1]
    %v135 = vld [vmem:[#allocation10 + $0xf] sm:$0x1]
    %v138 = vrot.slane %v121, 7
    %vm139 = vcmask 1041409
    %v140 = vsel %vm139, %v138, %v120
    %v144 = vrot.slane %v122, 6
    %v145 = vrot.slane %v123, 5
    %vm146 = vcmask 1043459
    %v147 = vsel %vm146, %v145, %v144
    %v151 = vrot.slane %v124, 4
    %v152 = vrot.slane %v125, 3
    %vm153 = vcmask 1045509
    %v154 = vsel %vm153, %v152, %v151
    %v158 = vrot.slane %v126, 2
    %v159 = vrot.slane %v127, 1
    %vm160 = vcmask 1047559
    %v161 = vsel %vm160, %v159, %v158
    %v165 = vrot.slane %v129, 7
    %v166 = vsel %vm139, %v165, %v128
    %v170 = vrot.slane %v130, 6
    %v171 = vrot.slane %v131, 5
    %v172 = vsel %vm146, %v171, %v170
    %v176 = vrot.slane %v132, 4
    %v177 = vrot.slane %v133, 3
    %v178 = vsel %vm153, %v177, %v176
    %v182 = vrot.slane %v134, 2
    %v183 = vrot.slane %v135, 1
    %v184 = vsel %vm160, %v183, %v182
    %vm186 = vcmask 1041408
    %v187 = vsel %vm186, %v140, %v147
    %vm188 = vcmask 1043456
    %v189 = vsel %vm188, %v187, %v154
    %vm190 = vcmask 1045504
    %v191 = vsel %vm190, %v189, %v161
    %v192 = vsel %vm186, %v166, %v172
    %v193 = vsel %vm188, %v192, %v178
    %v194 = vsel %vm190, %v193, %v184
    %v195 = vld [vmem:[#allocation13] sm:$0xff]
    %v196 = vld [vmem:[#allocation13 + $0x8] sm:$0xff]
    %v197 = vld [vmem:[#allocation13 + $0x10] sm:$0xff]
    %v198 = vld [vmem:[#allocation13 + $0x18] sm:$0xff]
    %v199 = vld [vmem:[#allocation13 + $0x20] sm:$0xff]
    %v200 = vld [vmem:[#allocation13 + $0x28] sm:$0xff]
    %v201 = vld [vmem:[#allocation13 + $0x30] sm:$0xff]
    %v202 = vld [vmem:[#allocation13 + $0x38] sm:$0xff]
    %v203 = vld [vmem:[#allocation13 + $0x40] sm:$0xff]
    %v204 = vld [vmem:[#allocation13 + $0x48] sm:$0xff]
    %v205 = vld [vmem:[#allocation13 + $0x50] sm:$0xff]
    %v206 = vld [vmem:[#allocation13 + $0x58] sm:$0xff]
    %v207 = vld [vmem:[#allocation13 + $0x60] sm:$0xff]
    %v208 = vld [vmem:[#allocation13 + $0x68] sm:$0xff]
    %v209 = vld [vmem:[#allocation13 + $0x70] sm:$0xff]
    %v210 = vld [vmem:[#allocation13 + $0x78] sm:$0xff]
    %v211 = vld [vmem:[%s3] sm:$0x3]
    %v213 = vlaneseq
    %v214 = vshrl.u32 %v213, 7
    %v215 = vsub.s32 0, %v214
    %v216 = vrot.slane %v211, %v215
    %v217 = vlaneseq
    %v218 = vshrl.u32 %v217, 7
    %v219 = vsub.s32 1, %v218
    %v220 = vrot.slane %v211, %v219
    %vm223 = vcmask 523264
    %v225 = vsel %vm223, %v191, 0
    %v228 = vsel %vm223, %v194, 0
    %230 = vmatprep.subr.mxu0 0.0
    %231 = vmatpush1.msra.mxu0 0.0
    %232 = vmatprep.subr.mxu0 0.0
    %233 = vmatpush1.msra.mxu0 0.0
    %234 = vmatprep.subr.mxu0 0.0
    %235 = vmatpush1.msra.mxu0 0.0
    %236 = vmatprep.subr.mxu0 0.0
    %237 = vmatpush1.msra.mxu0 0.0
    %238 = vmatprep.subr.mxu0 0.0
    %239 = vmatpush1.msra.mxu0 0.0
    %240 = vmatprep.subr.mxu0 0.0
    %241 = vmatpush1.msra.mxu0 0.0
    %242 = vmatprep.subr.mxu0 0.0
    %243 = vmatpush1.msra.mxu0 0.0
    %244 = vmatprep.subr.mxu0 0.0
    %245 = vmatpush1.msra.mxu0 0.0
    %246 = vmatprep.subr.mxu0 %v210
    %247 = vmatpush1.msra.mxu0 %v209
    %248 = vmatprep.subr.mxu0 %v208
    %249 = vmatpush1.msra.mxu0 %v207
    %250 = vmatprep.subr.mxu0 %v206
    %251 = vmatpush1.msra.mxu0 %v205
    %252 = vmatprep.subr.mxu0 %v204
    %253 = vmatpush1.msra.mxu0 %v203
    %254 = vmatprep.subr.mxu0 %v202
    %255 = vmatpush1.msra.mxu0 %v201
    %256 = vmatprep.subr.mxu0 %v200
    %257 = vmatpush1.msra.mxu0 %v199
    %258 = vmatprep.subr.mxu0 %v198
    %259 = vmatpush1.msra.mxu0 %v197
    %260 = vmatprep.subr.mxu0 %v196
    %261 = vmatpush1.msra.mxu0 %v195
    %262 = vmatprep.subr.mxu0 0.0
    %263 = vmatpush2.msra.mxu0 0.0
    %264 = vmatprep.subr.mxu0 0.0
    %265 = vmatpush2.msra.mxu0 0.0
    %266 = vmatprep.subr.mxu0 0.0
    %267 = vmatpush2.msra.mxu0 0.0
    %268 = vmatprep.subr.mxu0 0.0
    %269 = vmatpush2.msra.mxu0 0.0
    %270 = vmatprep.subr.mxu0 0.0
    %271 = vmatpush2.msra.mxu0 0.0
    %272 = vmatprep.subr.mxu0 0.0
    %273 = vmatpush2.msra.mxu0 0.0
    %274 = vmatprep.subr.mxu0 0.0
    %275 = vmatpush2.msra.mxu0 0.0
    %276 = vmatprep.subr.mxu0 0.0
    %277 = vmatpush2.msra.mxu0 0.0
    %278 = vmatprep.subr.mxu0 0.0
    %279 = vmatpush2.msra.mxu0 0.0
    %280 = vmatprep.subr.mxu0 0.0
    %281 = vmatpush2.msra.mxu0 0.0
    %282 = vmatprep.subr.mxu0 0.0
    %283 = vmatpush2.msra.mxu0 0.0
    %284 = vmatprep.subr.mxu0 0.0
    %285 = vmatpush2.msra.mxu0 0.0
    %286 = vmatprep.subr.mxu0 0.0
    %287 = vmatpush2.msra.mxu0 0.0
    %288 = vmatprep.subr.mxu0 0.0
    %289 = vmatpush2.msra.mxu0 0.0
    %290 = vmatprep.subr.mxu0 0.0
    %291 = vmatpush2.msra.mxu0 0.0
    %292 = vmatprep.subr.mxu0 0.0
    %293 = vmatpush2.msra.mxu0 0.0
    %294 = vmatprep.mubr.f32.mxu0 0.0
    %295 = vmatmul.mubr.f32.gmra.mxu0 %v225
    %v296 = vpop.f32.mrf.mxu0
    %v297 = vadd.f32 %v216, %v296
    %v298 = vpop.f32.mrf.mxu0
    %v299 = vadd.f32 %v220, %v298
    %300 = vmatprep.mubr.f32.mxu0 0.0
    %301 = vmatmul.mubr.f32.gmra.mxu0 %v228
    %v302 = vpop.f32.mrf.mxu0
    %v303 = vadd.f32 %v216, %v302
    %v304 = vpop.f32.mrf.mxu0
    %v305 = vadd.f32 %v220, %v304
    %306 = vdwg.mxu0
    %307 = vst [vmem:[#allocation2] sm:$0x3] %v297
    %308 = vst [vmem:[#allocation3] sm:$0x3] %v299
    %s309 = scalar_lea.vmem [#allocation2], 2
    %310 = vst [vmem:[%s309 - $0x2] sm:$0xc] %v297
    %s311 = scalar_lea.vmem [#allocation3], 2
    %312 = vst [vmem:[%s311 - $0x2] sm:$0xc] %v299
    %s313 = scalar_lea.vmem [#allocation2], 4
    %314 = vst [vmem:[%s313 - $0x4] sm:$0x30] %v297
    %s315 = scalar_lea.vmem [#allocation3], 4
    %316 = vst [vmem:[%s315 - $0x4] sm:$0x30] %v299
    %s317 = scalar_lea.vmem [#allocation2], 6
    %318 = vst [vmem:[%s317 - $0x6] sm:$0xc0] %v297
    %s319 = scalar_lea.vmem [#allocation3], 6
    %320 = vst [vmem:[%s319 - $0x6] sm:$0xc0] %v299
    %s321 = scalar_lea.vmem [#allocation2], 8
    %322 = vst [vmem:[%s321] sm:$0x3] %v303
    %s323 = scalar_lea.vmem [#allocation3], 8
    %324 = vst [vmem:[%s323] sm:$0x3] %v305
    %s325 = scalar_lea.vmem [#allocation2], 10
    %326 = vst [vmem:[%s325 - $0x2] sm:$0xc] %v303
    %s327 = scalar_lea.vmem [#allocation3], 10
    %328 = vst [vmem:[%s327 - $0x2] sm:$0xc] %v305
    %s329 = scalar_lea.vmem [#allocation2], 12
    %330 = vst [vmem:[%s329 - $0x4] sm:$0x30] %v303
    %s331 = scalar_lea.vmem [#allocation3], 12
    %332 = vst [vmem:[%s331 - $0x4] sm:$0x30] %v305
    %s333 = scalar_lea.vmem [#allocation2], 14
    %334 = vst [vmem:[%s333 - $0x6] sm:$0xc0] %v303
    %s335 = scalar_lea.vmem [#allocation3], 14
    %336 = vst [vmem:[%s335 - $0x6] sm:$0xc0] %v305
    %v337 = vld [vmem:[#allocation15] sm:$0xff]
    %v338 = vld [vmem:[#allocation15 + $0x8] sm:$0xff]
    %v339 = vld [vmem:[#allocation15 + $0x10] sm:$0xff]
    %v340 = vld [vmem:[#allocation15 + $0x18] sm:$0xff]
    %v341 = vld [vmem:[#allocation15 + $0x20] sm:$0xff]
    %v342 = vld [vmem:[#allocation15 + $0x28] sm:$0xff]
    %v343 = vld [vmem:[#allocation15 + $0x30] sm:$0xff]
    %v344 = vld [vmem:[#allocation15 + $0x38] sm:$0xff]
    %v345 = vld [vmem:[#allocation2] sm:$0x3]
    %v346 = vld [vmem:[%s335] sm:$0x3]
    %v348 = vrot.slane %v346, 6
    %v350 = vsel %vm186, %v345, %v348
    %v352 = vsel %vm223, 0.0, 0
    %354 = vmatprep.subr.mxu0 0.0
    %355 = vmatpush1.msra.mxu0 0.0
    %356 = vmatprep.subr.mxu0 0.0
    %357 = vmatpush1.msra.mxu0 0.0
    %358 = vmatprep.subr.mxu0 0.0
    %359 = vmatpush1.msra.mxu0 0.0
    %360 = vmatprep.subr.mxu0 0.0
    %361 = vmatpush1.msra.mxu0 0.0
    %362 = vmatprep.subr.mxu0 0.0
    %363 = vmatpush1.msra.mxu0 0.0
    %364 = vmatprep.subr.mxu0 0.0
    %365 = vmatpush1.msra.mxu0 0.0
    %366 = vmatprep.subr.mxu0 0.0
    %367 = vmatpush1.msra.mxu0 0.0
    %368 = vmatprep.subr.mxu0 0.0
    %369 = vmatpush1.msra.mxu0 0.0
    %370 = vmatprep.subr.mxu0 0.0
    %371 = vmatpush1.msra.mxu0 %v344
    %372 = vmatprep.subr.mxu0 0.0
    %373 = vmatpush1.msra.mxu0 %v343
    %374 = vmatprep.subr.mxu0 0.0
    %375 = vmatpush1.msra.mxu0 %v342
    %376 = vmatprep.subr.mxu0 0.0
    %377 = vmatpush1.msra.mxu0 %v341
    %378 = vmatprep.subr.mxu0 0.0
    %379 = vmatpush1.msra.mxu0 %v340
    %380 = vmatprep.subr.mxu0 0.0
    %381 = vmatpush1.msra.mxu0 %v339
    %382 = vmatprep.subr.mxu0 0.0
    %383 = vmatpush1.msra.mxu0 %v338
    %384 = vmatprep.subr.mxu0 0.0
    %385 = vmatpush1.msra.mxu0 %v337
    %386 = vmatprep.subr.mxu0 0.0
    %387 = vmatpush2.msra.mxu0 0.0
    %388 = vmatprep.subr.mxu0 0.0
    %389 = vmatpush2.msra.mxu0 0.0
    %390 = vmatprep.subr.mxu0 0.0
    %391 = vmatpush2.msra.mxu0 0.0
    %392 = vmatprep.subr.mxu0 0.0
    %393 = vmatpush2.msra.mxu0 0.0
    %394 = vmatprep.subr.mxu0 0.0
    %395 = vmatpush2.msra.mxu0 0.0
    %396 = vmatprep.subr.mxu0 0.0
    %397 = vmatpush2.msra.mxu0 0.0
    %398 = vmatprep.subr.mxu0 0.0
    %399 = vmatpush2.msra.mxu0 0.0
    %400 = vmatprep.subr.mxu0 0.0
    %401 = vmatpush2.msra.mxu0 0.0
    %402 = vmatprep.subr.mxu0 0.0
    %403 = vmatpush2.msra.mxu0 0.0
    %404 = vmatprep.subr.mxu0 0.0
    %405 = vmatpush2.msra.mxu0 0.0
    %406 = vmatprep.subr.mxu0 0.0
    %407 = vmatpush2.msra.mxu0 0.0
    %408 = vmatprep.subr.mxu0 0.0
    %409 = vmatpush2.msra.mxu0 0.0
    %410 = vmatprep.subr.mxu0 0.0
    %411 = vmatpush2.msra.mxu0 0.0
    %412 = vmatprep.subr.mxu0 0.0
    %413 = vmatpush2.msra.mxu0 0.0
    %414 = vmatprep.subr.mxu0 0.0
    %415 = vmatpush2.msra.mxu0 0.0
    %416 = vmatprep.subr.mxu0 0.0
    %417 = vmatpush2.msra.mxu0 0.0
    %418 = vmatprep.mubr.f32.mxu0 0.0
    %419 = vmatmul.mubr.f32.gmra.mxu0 %v352
    %v420 = vpop.f32.mrf.mxu0
    %v421 = vadd.f32 0.0, %v420
    %v422 = vpop.f32.mrf.mxu0
    %423 = vdwg.mxu0
    %v424 = vadd.f32 %v350, %v421
    %v425 = vmul.f32 %v424, 0.5
    %v426 = vtanh.pop %v425
    %v427 = vmul.f32 %v426, 0.5
    %v428 = vadd.f32 %v427, 0.5
    %v429 = vtanh.pop %v424
    %v430 = vmul.f32 %v428, 0.0
    %432 = vrot.lane.b32.xlu0 %v429, 32
    %v433 = vpop.permute.xlu0 %432
    %v435 = vmul.f32 %v428, %v433
    %437 = vrot.lane.b32.xlu0 %v435, 32
    %v438 = vpop.permute.xlu0 %437
    %v440 = vadd.f32 %v430, %v438
    %v441 = vtanh.pop %v440
    %443 = vrot.lane.b32.xlu0 %v441, 32
    %v444 = vpop.permute.xlu0 %443
    %v446 = vmul.f32 %v428, %v444
    %448 = vrot.lane.b32.xlu0 %v446, 64
    %v449 = vpop.permute.xlu0 %448
    %vm451 = vcmask 254976
    %452 = vst.msk [vmem:[#allocation4] sm:$0x3] %vm451, %v449
    %s453 = scalar_lea.vmem [#allocation5], 14
    %vm454 = vcmask 257026
    %455 = vst.msk [vmem:[%s453 - $0x2] sm:$0xc] %vm454, %v449
    %456 = vrot.lane.b32.xlu0 %v446, 96
    %v457 = vpop.permute.xlu0 %456
    %vm459 = vcmask 261120
    %v460 = vsel %vm459, %v449, %v457
    %v461 = vsel %vm119, %v460, 0.0
    %v462 = vld [vmem:[%s309] sm:$0x3]
    %v463 = vld [vmem:[%s331] sm:$0x3]
    %v465 = vrot.slane %v463, 6
    %v467 = vsel %vm186, %v462, %v465
    %v469 = vsel %vm223, %v461, 0
    %471 = vmatprep.subr.mxu0 0.0
    %472 = vmatpush1.msra.mxu0 0.0
    %473 = vmatprep.subr.mxu0 0.0
    %474 = vmatpush1.msra.mxu0 0.0
    %475 = vmatprep.subr.mxu0 0.0
    %476 = vmatpush1.msra.mxu0 0.0
    %477 = vmatprep.subr.mxu0 0.0
    %478 = vmatpush1.msra.mxu0 0.0
    %479 = vmatprep.subr.mxu0 0.0
    %480 = vmatpush1.msra.mxu0 0.0
    %481 = vmatprep.subr.mxu0 0.0
    %482 = vmatpush1.msra.mxu0 0.0
    %483 = vmatprep.subr.mxu0 0.0
    %484 = vmatpush1.msra.mxu0 0.0
    %485 = vmatprep.subr.mxu0 0.0
    %486 = vmatpush1.msra.mxu0 0.0
    %487 = vmatprep.subr.mxu0 0.0
    %488 = vmatpush1.msra.mxu0 %v344
    %489 = vmatprep.subr.mxu0 0.0
    %490 = vmatpush1.msra.mxu0 %v343
    %491 = vmatprep.subr.mxu0 0.0
    %492 = vmatpush1.msra.mxu0 %v342
    %493 = vmatprep.subr.mxu0 0.0
    %494 = vmatpush1.msra.mxu0 %v341
    %495 = vmatprep.subr.mxu0 0.0
    %496 = vmatpush1.msra.mxu0 %v340
    %497 = vmatprep.subr.mxu0 0.0
    %498 = vmatpush1.msra.mxu0 %v339
    %499 = vmatprep.subr.mxu0 0.0
    %500 = vmatpush1.msra.mxu0 %v338
    %501 = vmatprep.subr.mxu0 0.0
    %502 = vmatpush1.msra.mxu0 %v337
    %503 = vmatprep.subr.mxu0 0.0
    %504 = vmatpush2.msra.mxu0 0.0
    %505 = vmatprep.subr.mxu0 0.0
    %506 = vmatpush2.msra.mxu0 0.0
    %507 = vmatprep.subr.mxu0 0.0
    %508 = vmatpush2.msra.mxu0 0.0
    %509 = vmatprep.subr.mxu0 0.0
    %510 = vmatpush2.msra.mxu0 0.0
    %511 = vmatprep.subr.mxu0 0.0
    %512 = vmatpush2.msra.mxu0 0.0
    %513 = vmatprep.subr.mxu0 0.0
    %514 = vmatpush2.msra.mxu0 0.0
    %515 = vmatprep.subr.mxu0 0.0
    %516 = vmatpush2.msra.mxu0 0.0
    %517 = vmatprep.subr.mxu0 0.0
    %518 = vmatpush2.msra.mxu0 0.0
    %519 = vmatprep.subr.mxu0 0.0
    %520 = vmatpush2.msra.mxu0 0.0
    %521 = vmatprep.subr.mxu0 0.0
    %522 = vmatpush2.msra.mxu0 0.0
    %523 = vmatprep.subr.mxu0 0.0
    %524 = vmatpush2.msra.mxu0 0.0
    %525 = vmatprep.subr.mxu0 0.0
    %526 = vmatpush2.msra.mxu0 0.0
    %527 = vmatprep.subr.mxu0 0.0
    %528 = vmatpush2.msra.mxu0 0.0
    %529 = vmatprep.subr.mxu0 0.0
    %530 = vmatpush2.msra.mxu0 0.0
    %531 = vmatprep.subr.mxu0 0.0
    %532 = vmatpush2.msra.mxu0 0.0
    %533 = vmatprep.subr.mxu0 0.0
    %534 = vmatpush2.msra.mxu0 0.0
    %535 = vmatprep.mubr.f32.mxu0 0.0
    %536 = vmatmul.mubr.f32.gmra.mxu0 %v469
    %v537 = vpop.f32.mrf.mxu0
    %v538 = vadd.f32 0.0, %v537
    %v539 = vpop.f32.mrf.mxu0
    %540 = vdwg.mxu0
    %v541 = vadd.f32 %v467, %v538
    %v542 = vmul.f32 %v541, 0.5
    %v543 = vtanh.pop %v542
    %v544 = vmul.f32 %v543, 0.5
    %v545 = vadd.f32 %v544, 0.5
    %v546 = vtanh.pop %v541
    %v547 = vmul.f32 %v545, %v440
    %549 = vrot.lane.b32.xlu0 %v546, 32
    %v550 = vpop.permute.xlu0 %549
    %v552 = vmul.f32 %v545, %v550
    %554 = vrot.lane.b32.xlu0 %v552, 32
    %v555 = vpop.permute.xlu0 %554
    %v557 = vadd.f32 %v547, %v555
    %v558 = vtanh.pop %v557
    %560 = vrot.lane.b32.xlu0 %v558, 32
    %v561 = vpop.permute.xlu0 %560
    %v563 = vmul.f32 %v545, %v561
    %565 = vrot.lane.b32.xlu0 %v563, 64
    %v566 = vpop.permute.xlu0 %565
    %s568 = scalar_lea.vmem [#allocation4], 2
    %569 = vst.msk [vmem:[%s568] sm:$0x3] %vm451, %v566
    %s570 = scalar_lea.vmem [#allocation5], 12
    %571 = vst.msk [vmem:[%s570 - $0x2] sm:$0xc] %vm454, %v566
    %572 = vrot.lane.b32.xlu0 %v563, 96
    %v573 = vpop.permute.xlu0 %572
    %v575 = vsel %vm459, %v566, %v573
    %v576 = vsel %vm119, %v575, 0.0
    %v577 = vld [vmem:[%s313] sm:$0x3]
    %v578 = vld [vmem:[%s327] sm:$0x3]
    %v580 = vrot.slane %v578, 6
    %v582 = vsel %vm186, %v577, %v580
    %v584 = vsel %vm223, %v576, 0
    %586 = vmatprep.subr.mxu0 0.0
    %587 = vmatpush1.msra.mxu0 0.0
    %588 = vmatprep.subr.mxu0 0.0
    %589 = vmatpush1.msra.mxu0 0.0
    %590 = vmatprep.subr.mxu0 0.0
    %591 = vmatpush1.msra.mxu0 0.0
    %592 = vmatprep.subr.mxu0 0.0
    %593 = vmatpush1.msra.mxu0 0.0
    %594 = vmatprep.subr.mxu0 0.0
    %595 = vmatpush1.msra.mxu0 0.0
    %596 = vmatprep.subr.mxu0 0.0
    %597 = vmatpush1.msra.mxu0 0.0
    %598 = vmatprep.subr.mxu0 0.0
    %599 = vmatpush1.msra.mxu0 0.0
    %600 = vmatprep.subr.mxu0 0.0
    %601 = vmatpush1.msra.mxu0 0.0
    %602 = vmatprep.subr.mxu0 0.0
    %603 = vmatpush1.msra.mxu0 %v344
    %604 = vmatprep.subr.mxu0 0.0
    %605 = vmatpush1.msra.mxu0 %v343
    %606 = vmatprep.subr.mxu0 0.0
    %607 = vmatpush1.msra.mxu0 %v342
    %608 = vmatprep.subr.mxu0 0.0
    %609 = vmatpush1.msra.mxu0 %v341
    %610 = vmatprep.subr.mxu0 0.0
    %611 = vmatpush1.msra.mxu0 %v340
    %612 = vmatprep.subr.mxu0 0.0
    %613 = vmatpush1.msra.mxu0 %v339
    %614 = vmatprep.subr.mxu0 0.0
    %615 = vmatpush1.msra.mxu0 %v338
    %616 = vmatprep.subr.mxu0 0.0
    %617 = vmatpush1.msra.mxu0 %v337
    %618 = vmatprep.subr.mxu0 0.0
    %619 = vmatpush2.msra.mxu0 0.0
    %620 = vmatprep.subr.mxu0 0.0
    %621 = vmatpush2.msra.mxu0 0.0
    %622 = vmatprep.subr.mxu0 0.0
    %623 = vmatpush2.msra.mxu0 0.0
    %624 = vmatprep.subr.mxu0 0.0
    %625 = vmatpush2.msra.mxu0 0.0
    %626 = vmatprep.subr.mxu0 0.0
    %627 = vmatpush2.msra.mxu0 0.0
    %628 = vmatprep.subr.mxu0 0.0
    %629 = vmatpush2.msra.mxu0 0.0
    %630 = vmatprep.subr.mxu0 0.0
    %631 = vmatpush2.msra.mxu0 0.0
    %632 = vmatprep.subr.mxu0 0.0
    %633 = vmatpush2.msra.mxu0 0.0
    %634 = vmatprep.subr.mxu0 0.0
    %635 = vmatpush2.msra.mxu0 0.0
    %636 = vmatprep.subr.mxu0 0.0
    %637 = vmatpush2.msra.mxu0 0.0
    %638 = vmatprep.subr.mxu0 0.0
    %639 = vmatpush2.msra.mxu0 0.0
    %640 = vmatprep.subr.mxu0 0.0
    %641 = vmatpush2.msra.mxu0 0.0
    %642 = vmatprep.subr.mxu0 0.0
    %643 = vmatpush2.msra.mxu0 0.0
    %644 = vmatprep.subr.mxu0 0.0
    %645 = vmatpush2.msra.mxu0 0.0
    %646 = vmatprep.subr.mxu0 0.0
    %647 = vmatpush2.msra.mxu0 0.0
    %648 = vmatprep.subr.mxu0 0.0
    %649 = vmatpush2.msra.mxu0 0.0
    %650 = vmatprep.mubr.f32.mxu0 0.0
    %651 = vmatmul.mubr.f32.gmra.mxu0 %v584
    %v652 = vpop.f32.mrf.mxu0
    %v653 = vadd.f32 0.0, %v652
    %v654 = vpop.f32.mrf.mxu0
    %655 = vdwg.mxu0
    %v656 = vadd.f32 %v582, %v653
    %v657 = vmul.f32 %v656, 0.5
    %v658 = vtanh.pop %v657
    %v659 = vmul.f32 %v658, 0.5
    %v660 = vadd.f32 %v659, 0.5
    %v661 = vtanh.pop %v656
    %v662 = vmul.f32 %v660, %v557
    %664 = vrot.lane.b32.xlu0 %v661, 32
    %v665 = vpop.permute.xlu0 %664
    %v667 = vmul.f32 %v660, %v665
    %669 = vrot.lane.b32.xlu0 %v667, 32
    %v670 = vpop.permute.xlu0 %669
    %v672 = vadd.f32 %v662, %v670
    %v673 = vtanh.pop %v672
    %675 = vrot.lane.b32.xlu0 %v673, 32
    %v676 = vpop.permute.xlu0 %675
    %v678 = vmul.f32 %v660, %v676
    %680 = vrot.lane.b32.xlu0 %v678, 64
    %v681 = vpop.permute.xlu0 %680
    %s683 = scalar_lea.vmem [#allocation4], 4
    %684 = vst.msk [vmem:[%s683] sm:$0x3] %vm451, %v681
    %s685 = scalar_lea.vmem [#allocation5], 10
    %686 = vst.msk [vmem:[%s685 - $0x2] sm:$0xc] %vm454, %v681
    %687 = vrot.lane.b32.xlu0 %v678, 96
    %v688 = vpop.permute.xlu0 %687
    %v690 = vsel %vm459, %v681, %v688
    %v691 = vsel %vm119, %v690, 0.0
    %v692 = vld [vmem:[%s317] sm:$0x3]
    %v693 = vld [vmem:[%s323] sm:$0x3]
    %v695 = vrot.slane %v693, 6
    %v697 = vsel %vm186, %v692, %v695
    %v699 = vsel %vm223, %v691, 0
    %701 = vmatprep.subr.mxu0 0.0
    %702 = vmatpush1.msra.mxu0 0.0
    %703 = vmatprep.subr.mxu0 0.0
    %704 = vmatpush1.msra.mxu0 0.0
    %705 = vmatprep.subr.mxu0 0.0
    %706 = vmatpush1.msra.mxu0 0.0
    %707 = vmatprep.subr.mxu0 0.0
    %708 = vmatpush1.msra.mxu0 0.0
    %709 = vmatprep.subr.mxu0 0.0
    %710 = vmatpush1.msra.mxu0 0.0
    %711 = vmatprep.subr.mxu0 0.0
    %712 = vmatpush1.msra.mxu0 0.0
    %713 = vmatprep.subr.mxu0 0.0
    %714 = vmatpush1.msra.mxu0 0.0
    %715 = vmatprep.subr.mxu0 0.0
    %716 = vmatpush1.msra.mxu0 0.0
    %717 = vmatprep.subr.mxu0 0.0
    %718 = vmatpush1.msra.mxu0 %v344
    %719 = vmatprep.subr.mxu0 0.0
    %720 = vmatpush1.msra.mxu0 %v343
    %721 = vmatprep.subr.mxu0 0.0
    %722 = vmatpush1.msra.mxu0 %v342
    %723 = vmatprep.subr.mxu0 0.0
    %724 = vmatpush1.msra.mxu0 %v341
    %725 = vmatprep.subr.mxu0 0.0
    %726 = vmatpush1.msra.mxu0 %v340
    %727 = vmatprep.subr.mxu0 0.0
    %728 = vmatpush1.msra.mxu0 %v339
    %729 = vmatprep.subr.mxu0 0.0
    %730 = vmatpush1.msra.mxu0 %v338
    %731 = vmatprep.subr.mxu0 0.0
    %732 = vmatpush1.msra.mxu0 %v337
    %733 = vmatprep.subr.mxu0 0.0
    %734 = vmatpush2.msra.mxu0 0.0
    %735 = vmatprep.subr.mxu0 0.0
    %736 = vmatpush2.msra.mxu0 0.0
    %737 = vmatprep.subr.mxu0 0.0
    %738 = vmatpush2.msra.mxu0 0.0
    %739 = vmatprep.subr.mxu0 0.0
    %740 = vmatpush2.msra.mxu0 0.0
    %741 = vmatprep.subr.mxu0 0.0
    %742 = vmatpush2.msra.mxu0 0.0
    %743 = vmatprep.subr.mxu0 0.0
    %744 = vmatpush2.msra.mxu0 0.0
    %745 = vmatprep.subr.mxu0 0.0
    %746 = vmatpush2.msra.mxu0 0.0
    %747 = vmatprep.subr.mxu0 0.0
    %748 = vmatpush2.msra.mxu0 0.0
    %749 = vmatprep.subr.mxu0 0.0
    %750 = vmatpush2.msra.mxu0 0.0
    %751 = vmatprep.subr.mxu0 0.0
    %752 = vmatpush2.msra.mxu0 0.0
    %753 = vmatprep.subr.mxu0 0.0
    %754 = vmatpush2.msra.mxu0 0.0
    %755 = vmatprep.subr.mxu0 0.0
    %756 = vmatpush2.msra.mxu0 0.0
    %757 = vmatprep.subr.mxu0 0.0
    %758 = vmatpush2.msra.mxu0 0.0
    %759 = vmatprep.subr.mxu0 0.0
    %760 = vmatpush2.msra.mxu0 0.0
    %761 = vmatprep.subr.mxu0 0.0
    %762 = vmatpush2.msra.mxu0 0.0
    %763 = vmatprep.subr.mxu0 0.0
    %764 = vmatpush2.msra.mxu0 0.0
    %765 = vmatprep.mubr.f32.mxu0 0.0
    %766 = vmatmul.mubr.f32.gmra.mxu0 %v699
    %v767 = vpop.f32.mrf.mxu0
    %v768 = vadd.f32 0.0, %v767
    %v769 = vpop.f32.mrf.mxu0
    %770 = vdwg.mxu0
    %v771 = vadd.f32 %v697, %v768
    %v772 = vmul.f32 %v771, 0.5
    %v773 = vtanh.pop %v772
    %v774 = vmul.f32 %v773, 0.5
    %v775 = vadd.f32 %v774, 0.5
    %v776 = vtanh.pop %v771
    %v777 = vmul.f32 %v775, %v672
    %779 = vrot.lane.b32.xlu0 %v776, 32
    %v780 = vpop.permute.xlu0 %779
    %v782 = vmul.f32 %v775, %v780
    %784 = vrot.lane.b32.xlu0 %v782, 32
    %v785 = vpop.permute.xlu0 %784
    %v787 = vadd.f32 %v777, %v785
    %v788 = vtanh.pop %v787
    %790 = vrot.lane.b32.xlu0 %v788, 32
    %v791 = vpop.permute.xlu0 %790
    %v793 = vmul.f32 %v775, %v791
    %795 = vrot.lane.b32.xlu0 %v793, 64
    %v796 = vpop.permute.xlu0 %795
    %s798 = scalar_lea.vmem [#allocation4], 6
    %799 = vst.msk [vmem:[%s798] sm:$0x3] %vm451, %v796
    %s800 = scalar_lea.vmem [#allocation5], 8
    %801 = vst.msk [vmem:[%s800 - $0x2] sm:$0xc] %vm454, %v796
    %802 = vrot.lane.b32.xlu0 %v793, 96
    %v803 = vpop.permute.xlu0 %802
    %v805 = vsel %vm459, %v796, %v803
    %v806 = vsel %vm119, %v805, 0.0
    %v807 = vld [vmem:[%s321] sm:$0x3]
    %v808 = vld [vmem:[%s319] sm:$0x3]
    %v810 = vrot.slane %v808, 6
    %v812 = vsel %vm186, %v807, %v810
    %v814 = vsel %vm223, %v806, 0
    %816 = vmatprep.subr.mxu0 0.0
    %817 = vmatpush1.msra.mxu0 0.0
    %818 = vmatprep.subr.mxu0 0.0
    %819 = vmatpush1.msra.mxu0 0.0
    %820 = vmatprep.subr.mxu0 0.0
    %821 = vmatpush1.msra.mxu0 0.0
    %822 = vmatprep.subr.mxu0 0.0
    %823 = vmatpush1.msra.mxu0 0.0
    %824 = vmatprep.subr.mxu0 0.0
    %825 = vmatpush1.msra.mxu0 0.0
    %826 = vmatprep.subr.mxu0 0.0
    %827 = vmatpush1.msra.mxu0 0.0
    %828 = vmatprep.subr.mxu0 0.0
    %829 = vmatpush1.msra.mxu0 0.0
    %830 = vmatprep.subr.mxu0 0.0
    %831 = vmatpush1.msra.mxu0 0.0
    %832 = vmatprep.subr.mxu0 0.0
    %833 = vmatpush1.msra.mxu0 %v344
    %834 = vmatprep.subr.mxu0 0.0
    %835 = vmatpush1.msra.mxu0 %v343
    %836 = vmatprep.subr.mxu0 0.0
    %837 = vmatpush1.msra.mxu0 %v342
    %838 = vmatprep.subr.mxu0 0.0
    %839 = vmatpush1.msra.mxu0 %v341
    %840 = vmatprep.subr.mxu0 0.0
    %841 = vmatpush1.msra.mxu0 %v340
    %842 = vmatprep.subr.mxu0 0.0
    %843 = vmatpush1.msra.mxu0 %v339
    %844 = vmatprep.subr.mxu0 0.0
    %845 = vmatpush1.msra.mxu0 %v338
    %846 = vmatprep.subr.mxu0 0.0
    %847 = vmatpush1.msra.mxu0 %v337
    %848 = vmatprep.subr.mxu0 0.0
    %849 = vmatpush2.msra.mxu0 0.0
    %850 = vmatprep.subr.mxu0 0.0
    %851 = vmatpush2.msra.mxu0 0.0
    %852 = vmatprep.subr.mxu0 0.0
    %853 = vmatpush2.msra.mxu0 0.0
    %854 = vmatprep.subr.mxu0 0.0
    %855 = vmatpush2.msra.mxu0 0.0
    %856 = vmatprep.subr.mxu0 0.0
    %857 = vmatpush2.msra.mxu0 0.0
    %858 = vmatprep.subr.mxu0 0.0
    %859 = vmatpush2.msra.mxu0 0.0
    %860 = vmatprep.subr.mxu0 0.0
    %861 = vmatpush2.msra.mxu0 0.0
    %862 = vmatprep.subr.mxu0 0.0
    %863 = vmatpush2.msra.mxu0 0.0
    %864 = vmatprep.subr.mxu0 0.0
    %865 = vmatpush2.msra.mxu0 0.0
    %866 = vmatprep.subr.mxu0 0.0
    %867 = vmatpush2.msra.mxu0 0.0
    %868 = vmatprep.subr.mxu0 0.0
    %869 = vmatpush2.msra.mxu0 0.0
    %870 = vmatprep.subr.mxu0 0.0
    %871 = vmatpush2.msra.mxu0 0.0
    %872 = vmatprep.subr.mxu0 0.0
    %873 = vmatpush2.msra.mxu0 0.0
    %874 = vmatprep.subr.mxu0 0.0
    %875 = vmatpush2.msra.mxu0 0.0
    %876 = vmatprep.subr.mxu0 0.0
    %877 = vmatpush2.msra.mxu0 0.0
    %878 = vmatprep.subr.mxu0 0.0
    %879 = vmatpush2.msra.mxu0 0.0
    %880 = vmatprep.mubr.f32.mxu0 0.0
    %881 = vmatmul.mubr.f32.gmra.mxu0 %v814
    %v882 = vpop.f32.mrf.mxu0
    %v883 = vadd.f32 0.0, %v882
    %v884 = vpop.f32.mrf.mxu0
    %885 = vdwg.mxu0
    %v886 = vadd.f32 %v812, %v883
    %v887 = vmul.f32 %v886, 0.5
    %v888 = vtanh.pop %v887
    %v889 = vmul.f32 %v888, 0.5
    %v890 = vadd.f32 %v889, 0.5
    %v891 = vtanh.pop %v886
    %v892 = vmul.f32 %v890, %v787
    %894 = vrot.lane.b32.xlu0 %v891, 32
    %v895 = vpop.permute.xlu0 %894
    %v897 = vmul.f32 %v890, %v895
    %899 = vrot.lane.b32.xlu0 %v897, 32
    %v900 = vpop.permute.xlu0 %899
    %v902 = vadd.f32 %v892, %v900
    %v903 = vtanh.pop %v902
    %905 = vrot.lane.b32.xlu0 %v903, 32
    %v906 = vpop.permute.xlu0 %905
    %v908 = vmul.f32 %v890, %v906
    %910 = vrot.lane.b32.xlu0 %v908, 64
    %v911 = vpop.permute.xlu0 %910
    %s913 = scalar_lea.vmem [#allocation4], 8
    %914 = vst.msk [vmem:[%s913] sm:$0x3] %vm451, %v911
    %s915 = scalar_lea.vmem [#allocation5], 6
    %916 = vst.msk [vmem:[%s915 - $0x2] sm:$0xc] %vm454, %v911
    %917 = vrot.lane.b32.xlu0 %v908, 96
    %v918 = vpop.permute.xlu0 %917
    %v920 = vsel %vm459, %v911, %v918
    %v921 = vsel %vm119, %v920, 0.0
    %v922 = vld [vmem:[%s325] sm:$0x3]
    %v923 = vld [vmem:[%s315] sm:$0x3]
    %v925 = vrot.slane %v923, 6
    %v927 = vsel %vm186, %v922, %v925
    %v929 = vsel %vm223, %v921, 0
    %931 = vmatprep.subr.mxu0 0.0
    %932 = vmatpush1.msra.mxu0 0.0
    %933 = vmatprep.subr.mxu0 0.0
    %934 = vmatpush1.msra.mxu0 0.0
    %935 = vmatprep.subr.mxu0 0.0
    %936 = vmatpush1.msra.mxu0 0.0
    %937 = vmatprep.subr.mxu0 0.0
    %938 = vmatpush1.msra.mxu0 0.0
    %939 = vmatprep.subr.mxu0 0.0
    %940 = vmatpush1.msra.mxu0 0.0
    %941 = vmatprep.subr.mxu0 0.0
    %942 = vmatpush1.msra.mxu0 0.0
    %943 = vmatprep.subr.mxu0 0.0
    %944 = vmatpush1.msra.mxu0 0.0
    %945 = vmatprep.subr.mxu0 0.0
    %946 = vmatpush1.msra.mxu0 0.0
    %947 = vmatprep.subr.mxu0 0.0
    %948 = vmatpush1.msra.mxu0 %v344
    %949 = vmatprep.subr.mxu0 0.0
    %950 = vmatpush1.msra.mxu0 %v343
    %951 = vmatprep.subr.mxu0 0.0
    %952 = vmatpush1.msra.mxu0 %v342
    %953 = vmatprep.subr.mxu0 0.0
    %954 = vmatpush1.msra.mxu0 %v341
    %955 = vmatprep.subr.mxu0 0.0
    %956 = vmatpush1.msra.mxu0 %v340
    %957 = vmatprep.subr.mxu0 0.0
    %958 = vmatpush1.msra.mxu0 %v339
    %959 = vmatprep.subr.mxu0 0.0
    %960 = vmatpush1.msra.mxu0 %v338
    %961 = vmatprep.subr.mxu0 0.0
    %962 = vmatpush1.msra.mxu0 %v337
    %963 = vmatprep.subr.mxu0 0.0
    %964 = vmatpush2.msra.mxu0 0.0
    %965 = vmatprep.subr.mxu0 0.0
    %966 = vmatpush2.msra.mxu0 0.0
    %967 = vmatprep.subr.mxu0 0.0
    %968 = vmatpush2.msra.mxu0 0.0
    %969 = vmatprep.subr.mxu0 0.0
    %970 = vmatpush2.msra.mxu0 0.0
    %971 = vmatprep.subr.mxu0 0.0
    %972 = vmatpush2.msra.mxu0 0.0
    %973 = vmatprep.subr.mxu0 0.0
    %974 = vmatpush2.msra.mxu0 0.0
    %975 = vmatprep.subr.mxu0 0.0
    %976 = vmatpush2.msra.mxu0 0.0
    %977 = vmatprep.subr.mxu0 0.0
    %978 = vmatpush2.msra.mxu0 0.0
    %979 = vmatprep.subr.mxu0 0.0
    %980 = vmatpush2.msra.mxu0 0.0
    %981 = vmatprep.subr.mxu0 0.0
    %982 = vmatpush2.msra.mxu0 0.0
    %983 = vmatprep.subr.mxu0 0.0
    %984 = vmatpush2.msra.mxu0 0.0
    %985 = vmatprep.subr.mxu0 0.0
    %986 = vmatpush2.msra.mxu0 0.0
    %987 = vmatprep.subr.mxu0 0.0
    %988 = vmatpush2.msra.mxu0 0.0
    %989 = vmatprep.subr.mxu0 0.0
    %990 = vmatpush2.msra.mxu0 0.0
    %991 = vmatprep.subr.mxu0 0.0
    %992 = vmatpush2.msra.mxu0 0.0
    %993 = vmatprep.subr.mxu0 0.0
    %994 = vmatpush2.msra.mxu0 0.0
    %995 = vmatprep.mubr.f32.mxu0 0.0
    %996 = vmatmul.mubr.f32.gmra.mxu0 %v929
    %v997 = vpop.f32.mrf.mxu0
    %v998 = vadd.f32 0.0, %v997
    %v999 = vpop.f32.mrf.mxu0
    %1000 = vdwg.mxu0
    %v1001 = vadd.f32 %v927, %v998
    %v1002 = vmul.f32 %v1001, 0.5
    %v1003 = vtanh.pop %v1002
    %v1004 = vmul.f32 %v1003, 0.5
    %v1005 = vadd.f32 %v1004, 0.5
    %v1006 = vtanh.pop %v1001
    %v1007 = vmul.f32 %v1005, %v902
    %1009 = vrot.lane.b32.xlu0 %v1006, 32
    %v1010 = vpop.permute.xlu0 %1009
    %v1012 = vmul.f32 %v1005, %v1010
    %1014 = vrot.lane.b32.xlu0 %v1012, 32
    %v1015 = vpop.permute.xlu0 %1014
    %v1017 = vadd.f32 %v1007, %v1015
    %v1018 = vtanh.pop %v1017
    %1020 = vrot.lane.b32.xlu0 %v1018, 32
    %v1021 = vpop.permute.xlu0 %1020
    %v1023 = vmul.f32 %v1005, %v1021
    %1025 = vrot.lane.b32.xlu0 %v1023, 64
    %v1026 = vpop.permute.xlu0 %1025
    %s1028 = scalar_lea.vmem [#allocation4], 10
    %1029 = vst.msk [vmem:[%s1028] sm:$0x3] %vm451, %v1026
    %s1030 = scalar_lea.vmem [#allocation5], 4
    %1031 = vst.msk [vmem:[%s1030 - $0x2] sm:$0xc] %vm454, %v1026
    %1032 = vrot.lane.b32.xlu0 %v1023, 96
    %v1033 = vpop.permute.xlu0 %1032
    %v1035 = vsel %vm459, %v1026, %v1033
    %v1036 = vsel %vm119, %v1035, 0.0
    %v1037 = vld [vmem:[%s329] sm:$0x3]
    %v1038 = vld [vmem:[%s311] sm:$0x3]
    %v1040 = vrot.slane %v1038, 6
    %v1042 = vsel %vm186, %v1037, %v1040
    %v1044 = vsel %vm223, %v1036, 0
    %1046 = vmatprep.subr.mxu0 0.0
    %1047 = vmatpush1.msra.mxu0 0.0
    %1048 = vmatprep.subr.mxu0 0.0
    %1049 = vmatpush1.msra.mxu0 0.0
    %1050 = vmatprep.subr.mxu0 0.0
    %1051 = vmatpush1.msra.mxu0 0.0
    %1052 = vmatprep.subr.mxu0 0.0
    %1053 = vmatpush1.msra.mxu0 0.0
    %1054 = vmatprep.subr.mxu0 0.0
    %1055 = vmatpush1.msra.mxu0 0.0
    %1056 = vmatprep.subr.mxu0 0.0
    %1057 = vmatpush1.msra.mxu0 0.0
    %1058 = vmatprep.subr.mxu0 0.0
    %1059 = vmatpush1.msra.mxu0 0.0
    %1060 = vmatprep.subr.mxu0 0.0
    %1061 = vmatpush1.msra.mxu0 0.0
    %1062 = vmatprep.subr.mxu0 0.0
    %1063 = vmatpush1.msra.mxu0 %v344
    %1064 = vmatprep.subr.mxu0 0.0
    %1065 = vmatpush1.msra.mxu0 %v343
    %1066 = vmatprep.subr.mxu0 0.0
    %1067 = vmatpush1.msra.mxu0 %v342
    %1068 = vmatprep.subr.mxu0 0.0
    %1069 = vmatpush1.msra.mxu0 %v341
    %1070 = vmatprep.subr.mxu0 0.0
    %1071 = vmatpush1.msra.mxu0 %v340
    %1072 = vmatprep.subr.mxu0 0.0
    %1073 = vmatpush1.msra.mxu0 %v339
    %1074 = vmatprep.subr.mxu0 0.0
    %1075 = vmatpush1.msra.mxu0 %v338
    %1076 = vmatprep.subr.mxu0 0.0
    %1077 = vmatpush1.msra.mxu0 %v337
    %1078 = vmatprep.subr.mxu0 0.0
    %1079 = vmatpush2.msra.mxu0 0.0
    %1080 = vmatprep.subr.mxu0 0.0
    %1081 = vmatpush2.msra.mxu0 0.0
    %1082 = vmatprep.subr.mxu0 0.0
    %1083 = vmatpush2.msra.mxu0 0.0
    %1084 = vmatprep.subr.mxu0 0.0
    %1085 = vmatpush2.msra.mxu0 0.0
    %1086 = vmatprep.subr.mxu0 0.0
    %1087 = vmatpush2.msra.mxu0 0.0
    %1088 = vmatprep.subr.mxu0 0.0
    %1089 = vmatpush2.msra.mxu0 0.0
    %1090 = vmatprep.subr.mxu0 0.0
    %1091 = vmatpush2.msra.mxu0 0.0
    %1092 = vmatprep.subr.mxu0 0.0
    %1093 = vmatpush2.msra.mxu0 0.0
    %1094 = vmatprep.subr.mxu0 0.0
    %1095 = vmatpush2.msra.mxu0 0.0
    %1096 = vmatprep.subr.mxu0 0.0
    %1097 = vmatpush2.msra.mxu0 0.0
    %1098 = vmatprep.subr.mxu0 0.0
    %1099 = vmatpush2.msra.mxu0 0.0
    %1100 = vmatprep.subr.mxu0 0.0
    %1101 = vmatpush2.msra.mxu0 0.0
    %1102 = vmatprep.subr.mxu0 0.0
    %1103 = vmatpush2.msra.mxu0 0.0
    %1104 = vmatprep.subr.mxu0 0.0
    %1105 = vmatpush2.msra.mxu0 0.0
    %1106 = vmatprep.subr.mxu0 0.0
    %1107 = vmatpush2.msra.mxu0 0.0
    %1108 = vmatprep.subr.mxu0 0.0
    %1109 = vmatpush2.msra.mxu0 0.0
    %1110 = vmatprep.mubr.f32.mxu0 0.0
    %1111 = vmatmul.mubr.f32.gmra.mxu0 %v1044
    %v1112 = vpop.f32.mrf.mxu0
    %v1113 = vadd.f32 0.0, %v1112
    %v1114 = vpop.f32.mrf.mxu0
    %1115 = vdwg.mxu0
    %v1116 = vadd.f32 %v1042, %v1113
    %v1117 = vmul.f32 %v1116, 0.5
    %v1118 = vtanh.pop %v1117
    %v1119 = vmul.f32 %v1118, 0.5
    %v1120 = vadd.f32 %v1119, 0.5
    %v1121 = vtanh.pop %v1116
    %v1122 = vmul.f32 %v1120, %v1017
    %1124 = vrot.lane.b32.xlu0 %v1121, 32
    %v1125 = vpop.permute.xlu0 %1124
    %v1127 = vmul.f32 %v1120, %v1125
    %1129 = vrot.lane.b32.xlu0 %v1127, 32
    %v1130 = vpop.permute.xlu0 %1129
    %v1132 = vadd.f32 %v1122, %v1130
    %v1133 = vtanh.pop %v1132
    %1135 = vrot.lane.b32.xlu0 %v1133, 32
    %v1136 = vpop.permute.xlu0 %1135
    %v1138 = vmul.f32 %v1120, %v1136
    %1140 = vrot.lane.b32.xlu0 %v1138, 64
    %v1141 = vpop.permute.xlu0 %1140
    %s1143 = scalar_lea.vmem [#allocation4], 12
    %1144 = vst.msk [vmem:[%s1143] sm:$0x3] %vm451, %v1141
    %s1145 = scalar_lea.vmem [#allocation5], 2
    %1146 = vst.msk [vmem:[%s1145 - $0x2] sm:$0xc] %vm454, %v1141
    %1147 = vrot.lane.b32.xlu0 %v1138, 96
    %v1148 = vpop.permute.xlu0 %1147
    %v1150 = vsel %vm459, %v1141, %v1148
    %v1151 = vsel %vm119, %v1150, 0.0
    %v1152 = vld [vmem:[%s333] sm:$0x3]
    %v1153 = vld [vmem:[#allocation3] sm:$0x3]
    %v1155 = vrot.slane %v1153, 6
    %v1157 = vsel %vm186, %v1152, %v1155
    %v1159 = vsel %vm223, %v1151, 0
    %1161 = vmatprep.subr.mxu0 0.0
    %1162 = vmatpush1.msra.mxu0 0.0
    %1163 = vmatprep.subr.mxu0 0.0
    %1164 = vmatpush1.msra.mxu0 0.0
    %1165 = vmatprep.subr.mxu0 0.0
    %1166 = vmatpush1.msra.mxu0 0.0
    %1167 = vmatprep.subr.mxu0 0.0
    %1168 = vmatpush1.msra.mxu0 0.0
    %1169 = vmatprep.subr.mxu0 0.0
    %1170 = vmatpush1.msra.mxu0 0.0
    %1171 = vmatprep.subr.mxu0 0.0
    %1172 = vmatpush1.msra.mxu0 0.0
    %1173 = vmatprep.subr.mxu0 0.0
    %1174 = vmatpush1.msra.mxu0 0.0
    %1175 = vmatprep.subr.mxu0 0.0
    %1176 = vmatpush1.msra.mxu0 0.0
    %1177 = vmatprep.subr.mxu0 0.0
    %1178 = vmatpush1.msra.mxu0 %v344
    %1179 = vmatprep.subr.mxu0 0.0
    %1180 = vmatpush1.msra.mxu0 %v343
    %1181 = vmatprep.subr.mxu0 0.0
    %1182 = vmatpush1.msra.mxu0 %v342
    %1183 = vmatprep.subr.mxu0 0.0
    %1184 = vmatpush1.msra.mxu0 %v341
    %1185 = vmatprep.subr.mxu0 0.0
    %1186 = vmatpush1.msra.mxu0 %v340
    %1187 = vmatprep.subr.mxu0 0.0
    %1188 = vmatpush1.msra.mxu0 %v339
    %1189 = vmatprep.subr.mxu0 0.0
    %1190 = vmatpush1.msra.mxu0 %v338
    %1191 = vmatprep.subr.mxu0 0.0
    %1192 = vmatpush1.msra.mxu0 %v337
    %1193 = vmatprep.subr.mxu0 0.0
    %1194 = vmatpush2.msra.mxu0 0.0
    %1195 = vmatprep.subr.mxu0 0.0
    %1196 = vmatpush2.msra.mxu0 0.0
    %1197 = vmatprep.subr.mxu0 0.0
    %1198 = vmatpush2.msra.mxu0 0.0
    %1199 = vmatprep.subr.mxu0 0.0
    %1200 = vmatpush2.msra.mxu0 0.0
    %1201 = vmatprep.subr.mxu0 0.0
    %1202 = vmatpush2.msra.mxu0 0.0
    %1203 = vmatprep.subr.mxu0 0.0
    %1204 = vmatpush2.msra.mxu0 0.0
    %1205 = vmatprep.subr.mxu0 0.0
    %1206 = vmatpush2.msra.mxu0 0.0
    %1207 = vmatprep.subr.mxu0 0.0
    %1208 = vmatpush2.msra.mxu0 0.0
    %1209 = vmatprep.subr.mxu0 0.0
    %1210 = vmatpush2.msra.mxu0 0.0
    %1211 = vmatprep.subr.mxu0 0.0
    %1212 = vmatpush2.msra.mxu0 0.0
    %1213 = vmatprep.subr.mxu0 0.0
    %1214 = vmatpush2.msra.mxu0 0.0
    %1215 = vmatprep.subr.mxu0 0.0
    %1216 = vmatpush2.msra.mxu0 0.0
    %1217 = vmatprep.subr.mxu0 0.0
    %1218 = vmatpush2.msra.mxu0 0.0
    %1219 = vmatprep.subr.mxu0 0.0
    %1220 = vmatpush2.msra.mxu0 0.0
    %1221 = vmatprep.subr.mxu0 0.0
    %1222 = vmatpush2.msra.mxu0 0.0
    %1223 = vmatprep.subr.mxu0 0.0
    %1224 = vmatpush2.msra.mxu0 0.0
    %1225 = vmatprep.mubr.f32.mxu0 0.0
    %1226 = vmatmul.mubr.f32.gmra.mxu0 %v1159
    %v1227 = vpop.f32.mrf.mxu0
    %v1228 = vadd.f32 0.0, %v1227
    %v1229 = vpop.f32.mrf.mxu0
    %1230 = vdwg.mxu0
    %v1231 = vadd.f32 %v1157, %v1228
    %v1232 = vmul.f32 %v1231, 0.5
    %v1233 = vtanh.pop %v1232
    %v1234 = vmul.f32 %v1233, 0.5
    %v1235 = vadd.f32 %v1234, 0.5
    %v1236 = vtanh.pop %v1231
    %v1237 = vmul.f32 %v1235, %v1132
    %1239 = vrot.lane.b32.xlu0 %v1236, 32
    %v1240 = vpop.permute.xlu0 %1239
    %v1242 = vmul.f32 %v1235, %v1240
    %1244 = vrot.lane.b32.xlu0 %v1242, 32
    %v1245 = vpop.permute.xlu0 %1244
    %v1247 = vadd.f32 %v1237, %v1245
    %v1248 = vtanh.pop %v1247
    %1250 = vrot.lane.b32.xlu0 %v1248, 32
    %v1251 = vpop.permute.xlu0 %1250
    %v1253 = vmul.f32 %v1235, %v1251
    %1255 = vrot.lane.b32.xlu0 %v1253, 64
    %v1256 = vpop.permute.xlu0 %1255
    %s1258 = scalar_lea.vmem [#allocation4], 14
    %1259 = vst.msk [vmem:[%s1258] sm:$0x3] %vm451, %v1256
    %1260 = vst.msk [vmem:[#allocation5 - $0x2] sm:$0xc] %vm454, %v1256
    %v1261 = vld [vmem:[#allocation4] sm:$0x3]
    %v1262 = vld [vmem:[#allocation5] sm:$0x3]
    %1264 = vrot.lane.b32.xlu0 %v1262, 32
    %v1265 = vpop.permute.xlu0 %1264
    %v1267 = vsel %vm459, %v1261, %v1265
    %v1268 = vld [vmem:[%s568] sm:$0x3]
    %v1269 = vld [vmem:[%s1145] sm:$0x3]
    %1271 = vrot.lane.b32.xlu0 %v1269, 32
    %v1272 = vpop.permute.xlu0 %1271
    %v1274 = vsel %vm459, %v1268, %v1272
    %v1275 = vld [vmem:[%s683] sm:$0x3]
    %v1276 = vld [vmem:[%s1030] sm:$0x3]
    %1278 = vrot.lane.b32.xlu0 %v1276, 32
    %v1279 = vpop.permute.xlu0 %1278
    %v1281 = vsel %vm459, %v1275, %v1279
    %v1282 = vld [vmem:[%s798] sm:$0x3]
    %v1283 = vld [vmem:[%s915] sm:$0x3]
    %1285 = vrot.lane.b32.xlu0 %v1283, 32
    %v1286 = vpop.permute.xlu0 %1285
    %v1288 = vsel %vm459, %v1282, %v1286
    %v1289 = vld [vmem:[%s913] sm:$0x3]
    %v1290 = vld [vmem:[%s800] sm:$0x3]
    %1292 = vrot.lane.b32.xlu0 %v1290, 32
    %v1293 = vpop.permute.xlu0 %1292
    %v1295 = vsel %vm459, %v1289, %v1293
    %v1296 = vld [vmem:[%s1028] sm:$0x3]
    %v1297 = vld [vmem:[%s685] sm:$0x3]
    %1299 = vrot.lane.b32.xlu0 %v1297, 32
    %v1300 = vpop.permute.xlu0 %1299
    %v1302 = vsel %vm459, %v1296, %v1300
    %v1303 = vld [vmem:[%s1143] sm:$0x3]
    %v1304 = vld [vmem:[%s570] sm:$0x3]
    %1306 = vrot.lane.b32.xlu0 %v1304, 32
    %v1307 = vpop.permute.xlu0 %1306
    %v1309 = vsel %vm459, %v1303, %v1307
    %v1310 = vld [vmem:[%s1258] sm:$0x3]
    %v1311 = vld [vmem:[%s453] sm:$0x3]
    %1313 = vrot.lane.b32.xlu0 %v1311, 32
    %v1314 = vpop.permute.xlu0 %1313
    %v1316 = vsel %vm459, %v1310, %v1314
    %v1318 = vrot.slane %v1274, 6
    %v1321 = vrot.slane %v1281, 4
    %v1324 = vrot.slane %v1288, 2
    %v1327 = vrot.slane %v1302, 6
    %v1330 = vrot.slane %v1309, 4
    %v1333 = vrot.slane %v1316, 2
    %v1335 = vsel %vm186, %v1267, %v1318
    %v1336 = vsel %vm188, %v1335, %v1321
    %v1337 = vsel %vm190, %v1336, %v1324
    %v1338 = vsel %vm186, %v1295, %v1327
    %v1339 = vsel %vm188, %v1338, %v1330
    %v1340 = vsel %vm190, %v1339, %v1333
    %v1341 = vld [vmem:[#allocation16] sm:$0xff]
    %v1342 = vld [vmem:[#allocation16 + $0x8] sm:$0xff]
    %v1343 = vld [vmem:[#allocation16 + $0x10] sm:$0xff]
    %v1344 = vld [vmem:[#allocation16 + $0x18] sm:$0xff]
    %v1345 = vld [vmem:[#allocation16 + $0x20] sm:$0xff]
    %v1346 = vld [vmem:[#allocation16 + $0x28] sm:$0xff]
    %v1347 = vld [vmem:[#allocation16 + $0x30] sm:$0xff]
    %v1348 = vld [vmem:[#allocation16 + $0x38] sm:$0xff]
    %v1349 = vld [vmem:[#allocation16 + $0x40] sm:$0xff]
    %v1350 = vld [vmem:[#allocation16 + $0x48] sm:$0xff]
    %v1351 = vld [vmem:[#allocation16 + $0x50] sm:$0xff]
    %v1352 = vld [vmem:[#allocation16 + $0x58] sm:$0xff]
    %v1353 = vld [vmem:[#allocation16 + $0x60] sm:$0xff]
    %v1354 = vld [vmem:[#allocation16 + $0x68] sm:$0xff]
    %v1355 = vld [vmem:[#allocation16 + $0x70] sm:$0xff]
    %v1356 = vld [vmem:[#allocation16 + $0x78] sm:$0xff]
    %v1357 = vld [vmem:[%s6] sm:$0x3]
    %v1359 = vlaneseq
    %v1360 = vshrl.u32 %v1359, 7
    %v1361 = vsub.s32 0, %v1360
    %v1362 = vrot.slane %v1357, %v1361
    %v1363 = vlaneseq
    %v1364 = vshrl.u32 %v1363, 7
    %v1365 = vsub.s32 1, %v1364
    %v1366 = vrot.slane %v1357, %v1365
    %v1370 = vsel %vm223, %v1337, 0
    %v1373 = vsel %vm223, %v1340, 0
    %1375 = vmatprep.subr.mxu0 0.0
    %1376 = vmatpush1.msra.mxu0 0.0
    %1377 = vmatprep.subr.mxu0 0.0
    %1378 = vmatpush1.msra.mxu0 0.0
    %1379 = vmatprep.subr.mxu0 0.0
    %1380 = vmatpush1.msra.mxu0 0.0
    %1381 = vmatprep.subr.mxu0 0.0
    %1382 = vmatpush1.msra.mxu0 0.0
    %1383 = vmatprep.subr.mxu0 0.0
    %1384 = vmatpush1.msra.mxu0 0.0
    %1385 = vmatprep.subr.mxu0 0.0
    %1386 = vmatpush1.msra.mxu0 0.0
    %1387 = vmatprep.subr.mxu0 0.0
    %1388 = vmatpush1.msra.mxu0 0.0
    %1389 = vmatprep.subr.mxu0 0.0
    %1390 = vmatpush1.msra.mxu0 0.0
    %1391 = vmatprep.subr.mxu0 %v1356
    %1392 = vmatpush1.msra.mxu0 %v1355
    %1393 = vmatprep.subr.mxu0 %v1354
    %1394 = vmatpush1.msra.mxu0 %v1353
    %1395 = vmatprep.subr.mxu0 %v1352
    %1396 = vmatpush1.msra.mxu0 %v1351
    %1397 = vmatprep.subr.mxu0 %v1350
    %1398 = vmatpush1.msra.mxu0 %v1349
    %1399 = vmatprep.subr.mxu0 %v1348
    %1400 = vmatpush1.msra.mxu0 %v1347
    %1401 = vmatprep.subr.mxu0 %v1346
    %1402 = vmatpush1.msra.mxu0 %v1345
    %1403 = vmatprep.subr.mxu0 %v1344
    %1404 = vmatpush1.msra.mxu0 %v1343
    %1405 = vmatprep.subr.mxu0 %v1342
    %1406 = vmatpush1.msra.mxu0 %v1341
    %1407 = vmatprep.subr.mxu0 0.0
    %1408 = vmatpush2.msra.mxu0 0.0
    %1409 = vmatprep.subr.mxu0 0.0
    %1410 = vmatpush2.msra.mxu0 0.0
    %1411 = vmatprep.subr.mxu0 0.0
    %1412 = vmatpush2.msra.mxu0 0.0
    %1413 = vmatprep.subr.mxu0 0.0
    %1414 = vmatpush2.msra.mxu0 0.0
    %1415 = vmatprep.subr.mxu0 0.0
    %1416 = vmatpush2.msra.mxu0 0.0
    %1417 = vmatprep.subr.mxu0 0.0
    %1418 = vmatpush2.msra.mxu0 0.0
    %1419 = vmatprep.subr.mxu0 0.0
    %1420 = vmatpush2.msra.mxu0 0.0
    %1421 = vmatprep.subr.mxu0 0.0
    %1422 = vmatpush2.msra.mxu0 0.0
    %1423 = vmatprep.subr.mxu0 0.0
    %1424 = vmatpush2.msra.mxu0 0.0
    %1425 = vmatprep.subr.mxu0 0.0
    %1426 = vmatpush2.msra.mxu0 0.0
    %1427 = vmatprep.subr.mxu0 0.0
    %1428 = vmatpush2.msra.mxu0 0.0
    %1429 = vmatprep.subr.mxu0 0.0
    %1430 = vmatpush2.msra.mxu0 0.0
    %1431 = vmatprep.subr.mxu0 0.0
    %1432 = vmatpush2.msra.mxu0 0.0
    %1433 = vmatprep.subr.mxu0 0.0
    %1434 = vmatpush2.msra.mxu0 0.0
    %1435 = vmatprep.subr.mxu0 0.0
    %1436 = vmatpush2.msra.mxu0 0.0
    %1437 = vmatprep.subr.mxu0 0.0
    %1438 = vmatpush2.msra.mxu0 0.0
    %1439 = vmatprep.mubr.f32.mxu0 0.0
    %1440 = vmatmul.mubr.f32.gmra.mxu0 %v1370
    %v1441 = vpop.f32.mrf.mxu0
    %v1442 = vadd.f32 %v1362, %v1441
    %v1443 = vpop.f32.mrf.mxu0
    %v1444 = vadd.f32 %v1366, %v1443
    %1445 = vmatprep.mubr.f32.mxu0 0.0
    %1446 = vmatmul.mubr.f32.gmra.mxu0 %v1373
    %v1447 = vpop.f32.mrf.mxu0
    %v1448 = vadd.f32 %v1362, %v1447
    %v1449 = vpop.f32.mrf.mxu0
    %v1450 = vadd.f32 %v1366, %v1449
    %1451 = vdwg.mxu0
    %1452 = vst [vmem:[#allocation2] sm:$0x3] %v1442
    %1453 = vst [vmem:[#allocation3] sm:$0x3] %v1444
    %1454 = vst [vmem:[%s309 - $0x2] sm:$0xc] %v1442
    %1455 = vst [vmem:[%s311 - $0x2] sm:$0xc] %v1444
    %1456 = vst [vmem:[%s313 - $0x4] sm:$0x30] %v1442
    %1457 = vst [vmem:[%s315 - $0x4] sm:$0x30] %v1444
    %1458 = vst [vmem:[%s317 - $0x6] sm:$0xc0] %v1442
    %1459 = vst [vmem:[%s319 - $0x6] sm:$0xc0] %v1444
    %1460 = vst [vmem:[%s321] sm:$0x3] %v1448
    %1461 = vst [vmem:[%s323] sm:$0x3] %v1450
    %1462 = vst [vmem:[%s325 - $0x2] sm:$0xc] %v1448
    %1463 = vst [vmem:[%s327 - $0x2] sm:$0xc] %v1450
    %1464 = vst [vmem:[%s329 - $0x4] sm:$0x30] %v1448
    %1465 = vst [vmem:[%s331 - $0x4] sm:$0x30] %v1450
    %1466 = vst [vmem:[%s333 - $0x6] sm:$0xc0] %v1448
    %1467 = vst [vmem:[%s335 - $0x6] sm:$0xc0] %v1450
    %v1468 = vld [vmem:[#allocation18] sm:$0xff]
    %v1469 = vld [vmem:[#allocation18 + $0x8] sm:$0xff]
    %v1470 = vld [vmem:[#allocation18 + $0x10] sm:$0xff]
    %v1471 = vld [vmem:[#allocation18 + $0x18] sm:$0xff]
    %v1472 = vld [vmem:[#allocation18 + $0x20] sm:$0xff]
    %v1473 = vld [vmem:[#allocation18 + $0x28] sm:$0xff]
    %v1474 = vld [vmem:[#allocation18 + $0x30] sm:$0xff]
    %v1475 = vld [vmem:[#allocation18 + $0x38] sm:$0xff]
    %v1476 = vld [vmem:[#allocation2] sm:$0x3]
    %v1477 = vld [vmem:[%s335] sm:$0x3]
    %v1479 = vrot.slane %v1477, 6
    %v1481 = vsel %vm186, %v1476, %v1479
    %1482 = vmatprep.subr.mxu0 0.0
    %1483 = vmatpush1.msra.mxu0 0.0
    %1484 = vmatprep.subr.mxu0 0.0
    %1485 = vmatpush1.msra.mxu0 0.0
    %1486 = vmatprep.subr.mxu0 0.0
    %1487 = vmatpush1.msra.mxu0 0.0
    %1488 = vmatprep.subr.mxu0 0.0
    %1489 = vmatpush1.msra.mxu0 0.0
    %1490 = vmatprep.subr.mxu0 0.0
    %1491 = vmatpush1.msra.mxu0 0.0
    %1492 = vmatprep.subr.mxu0 0.0
    %1493 = vmatpush1.msra.mxu0 0.0
    %1494 = vmatprep.subr.mxu0 0.0
    %1495 = vmatpush1.msra.mxu0 0.0
    %1496 = vmatprep.subr.mxu0 0.0
    %1497 = vmatpush1.msra.mxu0 0.0
    %1498 = vmatprep.subr.mxu0 0.0
    %1499 = vmatpush1.msra.mxu0 %v1475
    %1500 = vmatprep.subr.mxu0 0.0
    %1501 = vmatpush1.msra.mxu0 %v1474
    %1502 = vmatprep.subr.mxu0 0.0
    %1503 = vmatpush1.msra.mxu0 %v1473
    %1504 = vmatprep.subr.mxu0 0.0
    %1505 = vmatpush1.msra.mxu0 %v1472
    %1506 = vmatprep.subr.mxu0 0.0
    %1507 = vmatpush1.msra.mxu0 %v1471
    %1508 = vmatprep.subr.mxu0 0.0
    %1509 = vmatpush1.msra.mxu0 %v1470
    %1510 = vmatprep.subr.mxu0 0.0
    %1511 = vmatpush1.msra.mxu0 %v1469
    %1512 = vmatprep.subr.mxu0 0.0
    %1513 = vmatpush1.msra.mxu0 %v1468
    %1514 = vmatprep.subr.mxu0 0.0
    %1515 = vmatpush2.msra.mxu0 0.0
    %1516 = vmatprep.subr.mxu0 0.0
    %1517 = vmatpush2.msra.mxu0 0.0
    %1518 = vmatprep.subr.mxu0 0.0
    %1519 = vmatpush2.msra.mxu0 0.0
    %1520 = vmatprep.subr.mxu0 0.0
    %1521 = vmatpush2.msra.mxu0 0.0
    %1522 = vmatprep.subr.mxu0 0.0
    %1523 = vmatpush2.msra.mxu0 0.0
    %1524 = vmatprep.subr.mxu0 0.0
    %1525 = vmatpush2.msra.mxu0 0.0
    %1526 = vmatprep.subr.mxu0 0.0
    %1527 = vmatpush2.msra.mxu0 0.0
    %1528 = vmatprep.subr.mxu0 0.0
    %1529 = vmatpush2.msra.mxu0 0.0
    %1530 = vmatprep.subr.mxu0 0.0
    %1531 = vmatpush2.msra.mxu0 0.0
    %1532 = vmatprep.subr.mxu0 0.0
    %1533 = vmatpush2.msra.mxu0 0.0
    %1534 = vmatprep.subr.mxu0 0.0
    %1535 = vmatpush2.msra.mxu0 0.0
    %1536 = vmatprep.subr.mxu0 0.0
    %1537 = vmatpush2.msra.mxu0 0.0
    %1538 = vmatprep.subr.mxu0 0.0
    %1539 = vmatpush2.msra.mxu0 0.0
    %1540 = vmatprep.subr.mxu0 0.0
    %1541 = vmatpush2.msra.mxu0 0.0
    %1542 = vmatprep.subr.mxu0 0.0
    %1543 = vmatpush2.msra.mxu0 0.0
    %1544 = vmatprep.subr.mxu0 0.0
    %1545 = vmatpush2.msra.mxu0 0.0
    %1546 = vmatprep.mubr.f32.mxu0 0.0
    %1547 = vmatmul.mubr.f32.gmra.mxu0 %v352
    %v1548 = vpop.f32.mrf.mxu0
    %v1549 = vadd.f32 0.0, %v1548
    %v1550 = vpop.f32.mrf.mxu0
    %1551 = vdwg.mxu0
    %v1552 = vadd.f32 %v1481, %v1549
    %v1553 = vmul.f32 %v1552, 0.5
    %v1554 = vtanh.pop %v1553
    %v1555 = vmul.f32 %v1554, 0.5
    %v1556 = vadd.f32 %v1555, 0.5
    %v1557 = vtanh.pop %v1552
    %v1558 = vmul.f32 %v1556, 0.0
    %1560 = vrot.lane.b32.xlu0 %v1557, 32
    %v1561 = vpop.permute.xlu0 %1560
    %v1563 = vmul.f32 %v1556, %v1561
    %1565 = vrot.lane.b32.xlu0 %v1563, 32
    %v1566 = vpop.permute.xlu0 %1565
    %v1568 = vadd.f32 %v1558, %v1566
    %v1569 = vtanh.pop %v1568
    %1571 = vrot.lane.b32.xlu0 %v1569, 32
    %v1572 = vpop.permute.xlu0 %1571
    %v1574 = vmul.f32 %v1556, %v1572
    %1576 = vrot.lane.b32.xlu0 %v1574, 64
    %v1577 = vpop.permute.xlu0 %1576
    %1579 = vst.msk [vmem:[#allocation6] sm:$0x3] %vm451, %v1577
    %s1580 = scalar_lea.vmem [#allocation7], 14
    %1581 = vst.msk [vmem:[%s1580 - $0x2] sm:$0xc] %vm454, %v1577
    %1582 = vrot.lane.b32.xlu0 %v1574, 96
    %v1583 = vpop.permute.xlu0 %1582
    %v1585 = vsel %vm459, %v1577, %v1583
    %v1586 = vsel %vm119, %v1585, 0.0
    %v1587 = vld [vmem:[%s309] sm:$0x3]
    %v1588 = vld [vmem:[%s331] sm:$0x3]
    %v1590 = vrot.slane %v1588, 6
    %v1592 = vsel %vm186, %v1587, %v1590
    %v1594 = vsel %vm223, %v1586, 0
    %1596 = vmatprep.subr.mxu0 0.0
    %1597 = vmatpush1.msra.mxu0 0.0
    %1598 = vmatprep.subr.mxu0 0.0
    %1599 = vmatpush1.msra.mxu0 0.0
    %1600 = vmatprep.subr.mxu0 0.0
    %1601 = vmatpush1.msra.mxu0 0.0
    %1602 = vmatprep.subr.mxu0 0.0
    %1603 = vmatpush1.msra.mxu0 0.0
    %1604 = vmatprep.subr.mxu0 0.0
    %1605 = vmatpush1.msra.mxu0 0.0
    %1606 = vmatprep.subr.mxu0 0.0
    %1607 = vmatpush1.msra.mxu0 0.0
    %1608 = vmatprep.subr.mxu0 0.0
    %1609 = vmatpush1.msra.mxu0 0.0
    %1610 = vmatprep.subr.mxu0 0.0
    %1611 = vmatpush1.msra.mxu0 0.0
    %1612 = vmatprep.subr.mxu0 0.0
    %1613 = vmatpush1.msra.mxu0 %v1475
    %1614 = vmatprep.subr.mxu0 0.0
    %1615 = vmatpush1.msra.mxu0 %v1474
    %1616 = vmatprep.subr.mxu0 0.0
    %1617 = vmatpush1.msra.mxu0 %v1473
    %1618 = vmatprep.subr.mxu0 0.0
    %1619 = vmatpush1.msra.mxu0 %v1472
    %1620 = vmatprep.subr.mxu0 0.0
    %1621 = vmatpush1.msra.mxu0 %v1471
    %1622 = vmatprep.subr.mxu0 0.0
    %1623 = vmatpush1.msra.mxu0 %v1470
    %1624 = vmatprep.subr.mxu0 0.0
    %1625 = vmatpush1.msra.mxu0 %v1469
    %1626 = vmatprep.subr.mxu0 0.0
    %1627 = vmatpush1.msra.mxu0 %v1468
    %1628 = vmatprep.subr.mxu0 0.0
    %1629 = vmatpush2.msra.mxu0 0.0
    %1630 = vmatprep.subr.mxu0 0.0
    %1631 = vmatpush2.msra.mxu0 0.0
    %1632 = vmatprep.subr.mxu0 0.0
    %1633 = vmatpush2.msra.mxu0 0.0
    %1634 = vmatprep.subr.mxu0 0.0
    %1635 = vmatpush2.msra.mxu0 0.0
    %1636 = vmatprep.subr.mxu0 0.0
    %1637 = vmatpush2.msra.mxu0 0.0
    %1638 = vmatprep.subr.mxu0 0.0
    %1639 = vmatpush2.msra.mxu0 0.0
    %1640 = vmatprep.subr.mxu0 0.0
    %1641 = vmatpush2.msra.mxu0 0.0
    %1642 = vmatprep.subr.mxu0 0.0
    %1643 = vmatpush2.msra.mxu0 0.0
    %1644 = vmatprep.subr.mxu0 0.0
    %1645 = vmatpush2.msra.mxu0 0.0
    %1646 = vmatprep.subr.mxu0 0.0
    %1647 = vmatpush2.msra.mxu0 0.0
    %1648 = vmatprep.subr.mxu0 0.0
    %1649 = vmatpush2.msra.mxu0 0.0
    %1650 = vmatprep.subr.mxu0 0.0
    %1651 = vmatpush2.msra.mxu0 0.0
    %1652 = vmatprep.subr.mxu0 0.0
    %1653 = vmatpush2.msra.mxu0 0.0
    %1654 = vmatprep.subr.mxu0 0.0
    %1655 = vmatpush2.msra.mxu0 0.0
    %1656 = vmatprep.subr.mxu0 0.0
    %1657 = vmatpush2.msra.mxu0 0.0
    %1658 = vmatprep.subr.mxu0 0.0
    %1659 = vmatpush2.msra.mxu0 0.0
    %1660 = vmatprep.mubr.f32.mxu0 0.0
    %1661 = vmatmul.mubr.f32.gmra.mxu0 %v1594
    %v1662 = vpop.f32.mrf.mxu0
    %v1663 = vadd.f32 0.0, %v1662
    %v1664 = vpop.f32.mrf.mxu0
    %1665 = vdwg.mxu0
    %v1666 = vadd.f32 %v1592, %v1663
    %v1667 = vmul.f32 %v1666, 0.5
    %v1668 = vtanh.pop %v1667
    %v1669 = vmul.f32 %v1668, 0.5
    %v1670 = vadd.f32 %v1669, 0.5
    %v1671 = vtanh.pop %v1666
    %v1672 = vmul.f32 %v1670, %v1568
    %1674 = vrot.lane.b32.xlu0 %v1671, 32
    %v1675 = vpop.permute.xlu0 %1674
    %v1677 = vmul.f32 %v1670, %v1675
    %1679 = vrot.lane.b32.xlu0 %v1677, 32
    %v1680 = vpop.permute.xlu0 %1679
    %v1682 = vadd.f32 %v1672, %v1680
    %v1683 = vtanh.pop %v1682
    %1685 = vrot.lane.b32.xlu0 %v1683, 32
    %v1686 = vpop.permute.xlu0 %1685
    %v1688 = vmul.f32 %v1670, %v1686
    %1690 = vrot.lane.b32.xlu0 %v1688, 64
    %v1691 = vpop.permute.xlu0 %1690
    %s1693 = scalar_lea.vmem [#allocation6], 2
    %1694 = vst.msk [vmem:[%s1693] sm:$0x3] %vm451, %v1691
    %s1695 = scalar_lea.vmem [#allocation7], 12
    %1696 = vst.msk [vmem:[%s1695 - $0x2] sm:$0xc] %vm454, %v1691
    %1697 = vrot.lane.b32.xlu0 %v1688, 96
    %v1698 = vpop.permute.xlu0 %1697
    %v1700 = vsel %vm459, %v1691, %v1698
    %v1701 = vsel %vm119, %v1700, 0.0
    %v1702 = vld [vmem:[%s313] sm:$0x3]
    %v1703 = vld [vmem:[%s327] sm:$0x3]
    %v1705 = vrot.slane %v1703, 6
    %v1707 = vsel %vm186, %v1702, %v1705
    %v1709 = vsel %vm223, %v1701, 0
    %1711 = vmatprep.subr.mxu0 0.0
    %1712 = vmatpush1.msra.mxu0 0.0
    %1713 = vmatprep.subr.mxu0 0.0
    %1714 = vmatpush1.msra.mxu0 0.0
    %1715 = vmatprep.subr.mxu0 0.0
    %1716 = vmatpush1.msra.mxu0 0.0
    %1717 = vmatprep.subr.mxu0 0.0
    %1718 = vmatpush1.msra.mxu0 0.0
    %1719 = vmatprep.subr.mxu0 0.0
    %1720 = vmatpush1.msra.mxu0 0.0
    %1721 = vmatprep.subr.mxu0 0.0
    %1722 = vmatpush1.msra.mxu0 0.0
    %1723 = vmatprep.subr.mxu0 0.0
    %1724 = vmatpush1.msra.mxu0 0.0
    %1725 = vmatprep.subr.mxu0 0.0
    %1726 = vmatpush1.msra.mxu0 0.0
    %1727 = vmatprep.subr.mxu0 0.0
    %1728 = vmatpush1.msra.mxu0 %v1475
    %1729 = vmatprep.subr.mxu0 0.0
    %1730 = vmatpush1.msra.mxu0 %v1474
    %1731 = vmatprep.subr.mxu0 0.0
    %1732 = vmatpush1.msra.mxu0 %v1473
    %1733 = vmatprep.subr.mxu0 0.0
    %1734 = vmatpush1.msra.mxu0 %v1472
    %1735 = vmatprep.subr.mxu0 0.0
    %1736 = vmatpush1.msra.mxu0 %v1471
    %1737 = vmatprep.subr.mxu0 0.0
    %1738 = vmatpush1.msra.mxu0 %v1470
    %1739 = vmatprep.subr.mxu0 0.0
    %1740 = vmatpush1.msra.mxu0 %v1469
    %1741 = vmatprep.subr.mxu0 0.0
    %1742 = vmatpush1.msra.mxu0 %v1468
    %1743 = vmatprep.subr.mxu0 0.0
    %1744 = vmatpush2.msra.mxu0 0.0
    %1745 = vmatprep.subr.mxu0 0.0
    %1746 = vmatpush2.msra.mxu0 0.0
    %1747 = vmatprep.subr.mxu0 0.0
    %1748 = vmatpush2.msra.mxu0 0.0
    %1749 = vmatprep.subr.mxu0 0.0
    %1750 = vmatpush2.msra.mxu0 0.0
    %1751 = vmatprep.subr.mxu0 0.0
    %1752 = vmatpush2.msra.mxu0 0.0
    %1753 = vmatprep.subr.mxu0 0.0
    %1754 = vmatpush2.msra.mxu0 0.0
    %1755 = vmatprep.subr.mxu0 0.0
    %1756 = vmatpush2.msra.mxu0 0.0
    %1757 = vmatprep.subr.mxu0 0.0
    %1758 = vmatpush2.msra.mxu0 0.0
    %1759 = vmatprep.subr.mxu0 0.0
    %1760 = vmatpush2.msra.mxu0 0.0
    %1761 = vmatprep.subr.mxu0 0.0
    %1762 = vmatpush2.msra.mxu0 0.0
    %1763 = vmatprep.subr.mxu0 0.0
    %1764 = vmatpush2.msra.mxu0 0.0
    %1765 = vmatprep.subr.mxu0 0.0
    %1766 = vmatpush2.msra.mxu0 0.0
    %1767 = vmatprep.subr.mxu0 0.0
    %1768 = vmatpush2.msra.mxu0 0.0
    %1769 = vmatprep.subr.mxu0 0.0
    %1770 = vmatpush2.msra.mxu0 0.0
    %1771 = vmatprep.subr.mxu0 0.0
    %1772 = vmatpush2.msra.mxu0 0.0
    %1773 = vmatprep.subr.mxu0 0.0
    %1774 = vmatpush2.msra.mxu0 0.0
    %1775 = vmatprep.mubr.f32.mxu0 0.0
    %1776 = vmatmul.mubr.f32.gmra.mxu0 %v1709
    %v1777 = vpop.f32.mrf.mxu0
    %v1778 = vadd.f32 0.0, %v1777
    %v1779 = vpop.f32.mrf.mxu0
    %1780 = vdwg.mxu0
    %v1781 = vadd.f32 %v1707, %v1778
    %v1782 = vmul.f32 %v1781, 0.5
    %v1783 = vtanh.pop %v1782
    %v1784 = vmul.f32 %v1783, 0.5
    %v1785 = vadd.f32 %v1784, 0.5
    %v1786 = vtanh.pop %v1781
    %v1787 = vmul.f32 %v1785, %v1682
    %1789 = vrot.lane.b32.xlu0 %v1786, 32
    %v1790 = vpop.permute.xlu0 %1789
    %v1792 = vmul.f32 %v1785, %v1790
    %1794 = vrot.lane.b32.xlu0 %v1792, 32
    %v1795 = vpop.permute.xlu0 %1794
    %v1797 = vadd.f32 %v1787, %v1795
    %v1798 = vtanh.pop %v1797
    %1800 = vrot.lane.b32.xlu0 %v1798, 32
    %v1801 = vpop.permute.xlu0 %1800
    %v1803 = vmul.f32 %v1785, %v1801
    %1805 = vrot.lane.b32.xlu0 %v1803, 64
    %v1806 = vpop.permute.xlu0 %1805
    %s1808 = scalar_lea.vmem [#allocation6], 4
    %1809 = vst.msk [vmem:[%s1808] sm:$0x3] %vm451, %v1806
    %s1810 = scalar_lea.vmem [#allocation7], 10
    %1811 = vst.msk [vmem:[%s1810 - $0x2] sm:$0xc] %vm454, %v1806
    %1812 = vrot.lane.b32.xlu0 %v1803, 96
    %v1813 = vpop.permute.xlu0 %1812
    %v1815 = vsel %vm459, %v1806, %v1813
    %v1816 = vsel %vm119, %v1815, 0.0
    %v1817 = vld [vmem:[%s317] sm:$0x3]
    %v1818 = vld [vmem:[%s323] sm:$0x3]
    %v1820 = vrot.slane %v1818, 6
    %v1822 = vsel %vm186, %v1817, %v1820
    %v1824 = vsel %vm223, %v1816, 0
    %1826 = vmatprep.subr.mxu0 0.0
    %1827 = vmatpush1.msra.mxu0 0.0
    %1828 = vmatprep.subr.mxu0 0.0
    %1829 = vmatpush1.msra.mxu0 0.0
    %1830 = vmatprep.subr.mxu0 0.0
    %1831 = vmatpush1.msra.mxu0 0.0
    %1832 = vmatprep.subr.mxu0 0.0
    %1833 = vmatpush1.msra.mxu0 0.0
    %1834 = vmatprep.subr.mxu0 0.0
    %1835 = vmatpush1.msra.mxu0 0.0
    %1836 = vmatprep.subr.mxu0 0.0
    %1837 = vmatpush1.msra.mxu0 0.0
    %1838 = vmatprep.subr.mxu0 0.0
    %1839 = vmatpush1.msra.mxu0 0.0
    %1840 = vmatprep.subr.mxu0 0.0
    %1841 = vmatpush1.msra.mxu0 0.0
    %1842 = vmatprep.subr.mxu0 0.0
    %1843 = vmatpush1.msra.mxu0 %v1475
    %1844 = vmatprep.subr.mxu0 0.0
    %1845 = vmatpush1.msra.mxu0 %v1474
    %1846 = vmatprep.subr.mxu0 0.0
    %1847 = vmatpush1.msra.mxu0 %v1473
    %1848 = vmatprep.subr.mxu0 0.0
    %1849 = vmatpush1.msra.mxu0 %v1472
    %1850 = vmatprep.subr.mxu0 0.0
    %1851 = vmatpush1.msra.mxu0 %v1471
    %1852 = vmatprep.subr.mxu0 0.0
    %1853 = vmatpush1.msra.mxu0 %v1470
    %1854 = vmatprep.subr.mxu0 0.0
    %1855 = vmatpush1.msra.mxu0 %v1469
    %1856 = vmatprep.subr.mxu0 0.0
    %1857 = vmatpush1.msra.mxu0 %v1468
    %1858 = vmatprep.subr.mxu0 0.0
    %1859 = vmatpush2.msra.mxu0 0.0
    %1860 = vmatprep.subr.mxu0 0.0
    %1861 = vmatpush2.msra.mxu0 0.0
    %1862 = vmatprep.subr.mxu0 0.0
    %1863 = vmatpush2.msra.mxu0 0.0
    %1864 = vmatprep.subr.mxu0 0.0
    %1865 = vmatpush2.msra.mxu0 0.0
    %1866 = vmatprep.subr.mxu0 0.0
    %1867 = vmatpush2.msra.mxu0 0.0
    %1868 = vmatprep.subr.mxu0 0.0
    %1869 = vmatpush2.msra.mxu0 0.0
    %1870 = vmatprep.subr.mxu0 0.0
    %1871 = vmatpush2.msra.mxu0 0.0
    %1872 = vmatprep.subr.mxu0 0.0
    %1873 = vmatpush2.msra.mxu0 0.0
    %1874 = vmatprep.subr.mxu0 0.0
    %1875 = vmatpush2.msra.mxu0 0.0
    %1876 = vmatprep.subr.mxu0 0.0
    %1877 = vmatpush2.msra.mxu0 0.0
    %1878 = vmatprep.subr.mxu0 0.0
    %1879 = vmatpush2.msra.mxu0 0.0
    %1880 = vmatprep.subr.mxu0 0.0
    %1881 = vmatpush2.msra.mxu0 0.0
    %1882 = vmatprep.subr.mxu0 0.0
    %1883 = vmatpush2.msra.mxu0 0.0
    %1884 = vmatprep.subr.mxu0 0.0
    %1885 = vmatpush2.msra.mxu0 0.0
    %1886 = vmatprep.subr.mxu0 0.0
    %1887 = vmatpush2.msra.mxu0 0.0
    %1888 = vmatprep.subr.mxu0 0.0
    %1889 = vmatpush2.msra.mxu0 0.0
    %1890 = vmatprep.mubr.f32.mxu0 0.0
    %1891 = vmatmul.mubr.f32.gmra.mxu0 %v1824
    %v1892 = vpop.f32.mrf.mxu0
    %v1893 = vadd.f32 0.0, %v1892
    %v1894 = vpop.f32.mrf.mxu0
    %1895 = vdwg.mxu0
    %v1896 = vadd.f32 %v1822, %v1893
    %v1897 = vmul.f32 %v1896, 0.5
    %v1898 = vtanh.pop %v1897
    %v1899 = vmul.f32 %v1898, 0.5
    %v1900 = vadd.f32 %v1899, 0.5
    %v1901 = vtanh.pop %v1896
    %v1902 = vmul.f32 %v1900, %v1797
    %1904 = vrot.lane.b32.xlu0 %v1901, 32
    %v1905 = vpop.permute.xlu0 %1904
    %v1907 = vmul.f32 %v1900, %v1905
    %1909 = vrot.lane.b32.xlu0 %v1907, 32
    %v1910 = vpop.permute.xlu0 %1909
    %v1912 = vadd.f32 %v1902, %v1910
    %v1913 = vtanh.pop %v1912
    %1915 = vrot.lane.b32.xlu0 %v1913, 32
    %v1916 = vpop.permute.xlu0 %1915
    %v1918 = vmul.f32 %v1900, %v1916
    %1920 = vrot.lane.b32.xlu0 %v1918, 64
    %v1921 = vpop.permute.xlu0 %1920
    %s1923 = scalar_lea.vmem [#allocation6], 6
    %1924 = vst.msk [vmem:[%s1923] sm:$0x3] %vm451, %v1921
    %s1925 = scalar_lea.vmem [#allocation7], 8
    %1926 = vst.msk [vmem:[%s1925 - $0x2] sm:$0xc] %vm454, %v1921
    %1927 = vrot.lane.b32.xlu0 %v1918, 96
    %v1928 = vpop.permute.xlu0 %1927
    %v1930 = vsel %vm459, %v1921, %v1928
    %v1931 = vsel %vm119, %v1930, 0.0
    %v1932 = vld [vmem:[%s321] sm:$0x3]
    %v1933 = vld [vmem:[%s319] sm:$0x3]
    %v1935 = vrot.slane %v1933, 6
    %v1937 = vsel %vm186, %v1932, %v1935
    %v1939 = vsel %vm223, %v1931, 0
    %1941 = vmatprep.subr.mxu0 0.0
    %1942 = vmatpush1.msra.mxu0 0.0
    %1943 = vmatprep.subr.mxu0 0.0
    %1944 = vmatpush1.msra.mxu0 0.0
    %1945 = vmatprep.subr.mxu0 0.0
    %1946 = vmatpush1.msra.mxu0 0.0
    %1947 = vmatprep.subr.mxu0 0.0
    %1948 = vmatpush1.msra.mxu0 0.0
    %1949 = vmatprep.subr.mxu0 0.0
    %1950 = vmatpush1.msra.mxu0 0.0
    %1951 = vmatprep.subr.mxu0 0.0
    %1952 = vmatpush1.msra.mxu0 0.0
    %1953 = vmatprep.subr.mxu0 0.0
    %1954 = vmatpush1.msra.mxu0 0.0
    %1955 = vmatprep.subr.mxu0 0.0
    %1956 = vmatpush1.msra.mxu0 0.0
    %1957 = vmatprep.subr.mxu0 0.0
    %1958 = vmatpush1.msra.mxu0 %v1475
    %1959 = vmatprep.subr.mxu0 0.0
    %1960 = vmatpush1.msra.mxu0 %v1474
    %1961 = vmatprep.subr.mxu0 0.0
    %1962 = vmatpush1.msra.mxu0 %v1473
    %1963 = vmatprep.subr.mxu0 0.0
    %1964 = vmatpush1.msra.mxu0 %v1472
    %1965 = vmatprep.subr.mxu0 0.0
    %1966 = vmatpush1.msra.mxu0 %v1471
    %1967 = vmatprep.subr.mxu0 0.0
    %1968 = vmatpush1.msra.mxu0 %v1470
    %1969 = vmatprep.subr.mxu0 0.0
    %1970 = vmatpush1.msra.mxu0 %v1469
    %1971 = vmatprep.subr.mxu0 0.0
    %1972 = vmatpush1.msra.mxu0 %v1468
    %1973 = vmatprep.subr.mxu0 0.0
    %1974 = vmatpush2.msra.mxu0 0.0
    %1975 = vmatprep.subr.mxu0 0.0
    %1976 = vmatpush2.msra.mxu0 0.0
    %1977 = vmatprep.subr.mxu0 0.0
    %1978 = vmatpush2.msra.mxu0 0.0
    %1979 = vmatprep.subr.mxu0 0.0
    %1980 = vmatpush2.msra.mxu0 0.0
    %1981 = vmatprep.subr.mxu0 0.0
    %1982 = vmatpush2.msra.mxu0 0.0
    %1983 = vmatprep.subr.mxu0 0.0
    %1984 = vmatpush2.msra.mxu0 0.0
    %1985 = vmatprep.subr.mxu0 0.0
    %1986 = vmatpush2.msra.mxu0 0.0
    %1987 = vmatprep.subr.mxu0 0.0
    %1988 = vmatpush2.msra.mxu0 0.0
    %1989 = vmatprep.subr.mxu0 0.0
    %1990 = vmatpush2.msra.mxu0 0.0
    %1991 = vmatprep.subr.mxu0 0.0
    %1992 = vmatpush2.msra.mxu0 0.0
    %1993 = vmatprep.subr.mxu0 0.0
    %1994 = vmatpush2.msra.mxu0 0.0
    %1995 = vmatprep.subr.mxu0 0.0
    %1996 = vmatpush2.msra.mxu0 0.0
    %1997 = vmatprep.subr.mxu0 0.0
    %1998 = vmatpush2.msra.mxu0 0.0
    %1999 = vmatprep.subr.mxu0 0.0
    %2000 = vmatpush2.msra.mxu0 0.0
    %2001 = vmatprep.subr.mxu0 0.0
    %2002 = vmatpush2.msra.mxu0 0.0
    %2003 = vmatprep.subr.mxu0 0.0
    %2004 = vmatpush2.msra.mxu0 0.0
    %2005 = vmatprep.mubr.f32.mxu0 0.0
    %2006 = vmatmul.mubr.f32.gmra.mxu0 %v1939
    %v2007 = vpop.f32.mrf.mxu0
    %v2008 = vadd.f32 0.0, %v2007
    %v2009 = vpop.f32.mrf.mxu0
    %2010 = vdwg.mxu0
    %v2011 = vadd.f32 %v1937, %v2008
    %v2012 = vmul.f32 %v2011, 0.5
    %v2013 = vtanh.pop %v2012
    %v2014 = vmul.f32 %v2013, 0.5
    %v2015 = vadd.f32 %v2014, 0.5
    %v2016 = vtanh.pop %v2011
    %v2017 = vmul.f32 %v2015, %v1912
    %2019 = vrot.lane.b32.xlu0 %v2016, 32
    %v2020 = vpop.permute.xlu0 %2019
    %v2022 = vmul.f32 %v2015, %v2020
    %2024 = vrot.lane.b32.xlu0 %v2022, 32
    %v2025 = vpop.permute.xlu0 %2024
    %v2027 = vadd.f32 %v2017, %v2025
    %v2028 = vtanh.pop %v2027
    %2030 = vrot.lane.b32.xlu0 %v2028, 32
    %v2031 = vpop.permute.xlu0 %2030
    %v2033 = vmul.f32 %v2015, %v2031
    %2035 = vrot.lane.b32.xlu0 %v2033, 64
    %v2036 = vpop.permute.xlu0 %2035
    %s2038 = scalar_lea.vmem [#allocation6], 8
    %2039 = vst.msk [vmem:[%s2038] sm:$0x3] %vm451, %v2036
    %s2040 = scalar_lea.vmem [#allocation7], 6
    %2041 = vst.msk [vmem:[%s2040 - $0x2] sm:$0xc] %vm454, %v2036
    %2042 = vrot.lane.b32.xlu0 %v2033, 96
    %v2043 = vpop.permute.xlu0 %2042
    %v2045 = vsel %vm459, %v2036, %v2043
    %v2046 = vsel %vm119, %v2045, 0.0
    %v2047 = vld [vmem:[%s325] sm:$0x3]
    %v2048 = vld [vmem:[%s315] sm:$0x3]
    %v2050 = vrot.slane %v2048, 6
    %v2052 = vsel %vm186, %v2047, %v2050
    %v2054 = vsel %vm223, %v2046, 0
    %2056 = vmatprep.subr.mxu0 0.0
    %2057 = vmatpush1.msra.mxu0 0.0
    %2058 = vmatprep.subr.mxu0 0.0
    %2059 = vmatpush1.msra.mxu0 0.0
    %2060 = vmatprep.subr.mxu0 0.0
    %2061 = vmatpush1.msra.mxu0 0.0
    %2062 = vmatprep.subr.mxu0 0.0
    %2063 = vmatpush1.msra.mxu0 0.0
    %2064 = vmatprep.subr.mxu0 0.0
    %2065 = vmatpush1.msra.mxu0 0.0
    %2066 = vmatprep.subr.mxu0 0.0
    %2067 = vmatpush1.msra.mxu0 0.0
    %2068 = vmatprep.subr.mxu0 0.0
    %2069 = vmatpush1.msra.mxu0 0.0
    %2070 = vmatprep.subr.mxu0 0.0
    %2071 = vmatpush1.msra.mxu0 0.0
    %2072 = vmatprep.subr.mxu0 0.0
    %2073 = vmatpush1.msra.mxu0 %v1475
    %2074 = vmatprep.subr.mxu0 0.0
    %2075 = vmatpush1.msra.mxu0 %v1474
    %2076 = vmatprep.subr.mxu0 0.0
    %2077 = vmatpush1.msra.mxu0 %v1473
    %2078 = vmatprep.subr.mxu0 0.0
    %2079 = vmatpush1.msra.mxu0 %v1472
    %2080 = vmatprep.subr.mxu0 0.0
    %2081 = vmatpush1.msra.mxu0 %v1471
    %2082 = vmatprep.subr.mxu0 0.0
    %2083 = vmatpush1.msra.mxu0 %v1470
    %2084 = vmatprep.subr.mxu0 0.0
    %2085 = vmatpush1.msra.mxu0 %v1469
    %2086 = vmatprep.subr.mxu0 0.0
    %2087 = vmatpush1.msra.mxu0 %v1468
    %2088 = vmatprep.subr.mxu0 0.0
    %2089 = vmatpush2.msra.mxu0 0.0
    %2090 = vmatprep.subr.mxu0 0.0
    %2091 = vmatpush2.msra.mxu0 0.0
    %2092 = vmatprep.subr.mxu0 0.0
    %2093 = vmatpush2.msra.mxu0 0.0
    %2094 = vmatprep.subr.mxu0 0.0
    %2095 = vmatpush2.msra.mxu0 0.0
    %2096 = vmatprep.subr.mxu0 0.0
    %2097 = vmatpush2.msra.mxu0 0.0
    %2098 = vmatprep.subr.mxu0 0.0
    %2099 = vmatpush2.msra.mxu0 0.0
    %2100 = vmatprep.subr.mxu0 0.0
    %2101 = vmatpush2.msra.mxu0 0.0
    %2102 = vmatprep.subr.mxu0 0.0
    %2103 = vmatpush2.msra.mxu0 0.0
    %2104 = vmatprep.subr.mxu0 0.0
    %2105 = vmatpush2.msra.mxu0 0.0
    %2106 = vmatprep.subr.mxu0 0.0
    %2107 = vmatpush2.msra.mxu0 0.0
    %2108 = vmatprep.subr.mxu0 0.0
    %2109 = vmatpush2.msra.mxu0 0.0
    %2110 = vmatprep.subr.mxu0 0.0
    %2111 = vmatpush2.msra.mxu0 0.0
    %2112 = vmatprep.subr.mxu0 0.0
    %2113 = vmatpush2.msra.mxu0 0.0
    %2114 = vmatprep.subr.mxu0 0.0
    %2115 = vmatpush2.msra.mxu0 0.0
    %2116 = vmatprep.subr.mxu0 0.0
    %2117 = vmatpush2.msra.mxu0 0.0
    %2118 = vmatprep.subr.mxu0 0.0
    %2119 = vmatpush2.msra.mxu0 0.0
    %2120 = vmatprep.mubr.f32.mxu0 0.0
    %2121 = vmatmul.mubr.f32.gmra.mxu0 %v2054
    %v2122 = vpop.f32.mrf.mxu0
    %v2123 = vadd.f32 0.0, %v2122
    %v2124 = vpop.f32.mrf.mxu0
    %2125 = vdwg.mxu0
    %v2126 = vadd.f32 %v2052, %v2123
    %v2127 = vmul.f32 %v2126, 0.5
    %v2128 = vtanh.pop %v2127
    %v2129 = vmul.f32 %v2128, 0.5
    %v2130 = vadd.f32 %v2129, 0.5
    %v2131 = vtanh.pop %v2126
    %v2132 = vmul.f32 %v2130, %v2027
    %2134 = vrot.lane.b32.xlu0 %v2131, 32
    %v2135 = vpop.permute.xlu0 %2134
    %v2137 = vmul.f32 %v2130, %v2135
    %2139 = vrot.lane.b32.xlu0 %v2137, 32
    %v2140 = vpop.permute.xlu0 %2139
    %v2142 = vadd.f32 %v2132, %v2140
    %v2143 = vtanh.pop %v2142
    %2145 = vrot.lane.b32.xlu0 %v2143, 32
    %v2146 = vpop.permute.xlu0 %2145
    %v2148 = vmul.f32 %v2130, %v2146
    %2150 = vrot.lane.b32.xlu0 %v2148, 64
    %v2151 = vpop.permute.xlu0 %2150
    %s2153 = scalar_lea.vmem [#allocation6], 10
    %2154 = vst.msk [vmem:[%s2153] sm:$0x3] %vm451, %v2151
    %s2155 = scalar_lea.vmem [#allocation7], 4
    %2156 = vst.msk [vmem:[%s2155 - $0x2] sm:$0xc] %vm454, %v2151
    %2157 = vrot.lane.b32.xlu0 %v2148, 96
    %v2158 = vpop.permute.xlu0 %2157
    %v2160 = vsel %vm459, %v2151, %v2158
    %v2161 = vsel %vm119, %v2160, 0.0
    %v2162 = vld [vmem:[%s329] sm:$0x3]
    %v2163 = vld [vmem:[%s311] sm:$0x3]
    %v2165 = vrot.slane %v2163, 6
    %v2167 = vsel %vm186, %v2162, %v2165
    %v2169 = vsel %vm223, %v2161, 0
    %2171 = vmatprep.subr.mxu0 0.0
    %2172 = vmatpush1.msra.mxu0 0.0
    %2173 = vmatprep.subr.mxu0 0.0
    %2174 = vmatpush1.msra.mxu0 0.0
    %2175 = vmatprep.subr.mxu0 0.0
    %2176 = vmatpush1.msra.mxu0 0.0
    %2177 = vmatprep.subr.mxu0 0.0
    %2178 = vmatpush1.msra.mxu0 0.0
    %2179 = vmatprep.subr.mxu0 0.0
    %2180 = vmatpush1.msra.mxu0 0.0
    %2181 = vmatprep.subr.mxu0 0.0
    %2182 = vmatpush1.msra.mxu0 0.0
    %2183 = vmatprep.subr.mxu0 0.0
    %2184 = vmatpush1.msra.mxu0 0.0
    %2185 = vmatprep.subr.mxu0 0.0
    %2186 = vmatpush1.msra.mxu0 0.0
    %2187 = vmatprep.subr.mxu0 0.0
    %2188 = vmatpush1.msra.mxu0 %v1475
    %2189 = vmatprep.subr.mxu0 0.0
    %2190 = vmatpush1.msra.mxu0 %v1474
    %2191 = vmatprep.subr.mxu0 0.0
    %2192 = vmatpush1.msra.mxu0 %v1473
    %2193 = vmatprep.subr.mxu0 0.0
    %2194 = vmatpush1.msra.mxu0 %v1472
    %2195 = vmatprep.subr.mxu0 0.0
    %2196 = vmatpush1.msra.mxu0 %v1471
    %2197 = vmatprep.subr.mxu0 0.0
    %2198 = vmatpush1.msra.mxu0 %v1470
    %2199 = vmatprep.subr.mxu0 0.0
    %2200 = vmatpush1.msra.mxu0 %v1469
    %2201 = vmatprep.subr.mxu0 0.0
    %2202 = vmatpush1.msra.mxu0 %v1468
    %2203 = vmatprep.subr.mxu0 0.0
    %2204 = vmatpush2.msra.mxu0 0.0
    %2205 = vmatprep.subr.mxu0 0.0
    %2206 = vmatpush2.msra.mxu0 0.0
    %2207 = vmatprep.subr.mxu0 0.0
    %2208 = vmatpush2.msra.mxu0 0.0
    %2209 = vmatprep.subr.mxu0 0.0
    %2210 = vmatpush2.msra.mxu0 0.0
    %2211 = vmatprep.subr.mxu0 0.0
    %2212 = vmatpush2.msra.mxu0 0.0
    %2213 = vmatprep.subr.mxu0 0.0
    %2214 = vmatpush2.msra.mxu0 0.0
    %2215 = vmatprep.subr.mxu0 0.0
    %2216 = vmatpush2.msra.mxu0 0.0
    %2217 = vmatprep.subr.mxu0 0.0
    %2218 = vmatpush2.msra.mxu0 0.0
    %2219 = vmatprep.subr.mxu0 0.0
    %2220 = vmatpush2.msra.mxu0 0.0
    %2221 = vmatprep.subr.mxu0 0.0
    %2222 = vmatpush2.msra.mxu0 0.0
    %2223 = vmatprep.subr.mxu0 0.0
    %2224 = vmatpush2.msra.mxu0 0.0
    %2225 = vmatprep.subr.mxu0 0.0
    %2226 = vmatpush2.msra.mxu0 0.0
    %2227 = vmatprep.subr.mxu0 0.0
    %2228 = vmatpush2.msra.mxu0 0.0
    %2229 = vmatprep.subr.mxu0 0.0
    %2230 = vmatpush2.msra.mxu0 0.0
    %2231 = vmatprep.subr.mxu0 0.0
    %2232 = vmatpush2.msra.mxu0 0.0
    %2233 = vmatprep.subr.mxu0 0.0
    %2234 = vmatpush2.msra.mxu0 0.0
    %2235 = vmatprep.mubr.f32.mxu0 0.0
    %2236 = vmatmul.mubr.f32.gmra.mxu0 %v2169
    %v2237 = vpop.f32.mrf.mxu0
    %v2238 = vadd.f32 0.0, %v2237
    %v2239 = vpop.f32.mrf.mxu0
    %2240 = vdwg.mxu0
    %v2241 = vadd.f32 %v2167, %v2238
    %v2242 = vmul.f32 %v2241, 0.5
    %v2243 = vtanh.pop %v2242
    %v2244 = vmul.f32 %v2243, 0.5
    %v2245 = vadd.f32 %v2244, 0.5
    %v2246 = vtanh.pop %v2241
    %v2247 = vmul.f32 %v2245, %v2142
    %2249 = vrot.lane.b32.xlu0 %v2246, 32
    %v2250 = vpop.permute.xlu0 %2249
    %v2252 = vmul.f32 %v2245, %v2250
    %2254 = vrot.lane.b32.xlu0 %v2252, 32
    %v2255 = vpop.permute.xlu0 %2254
    %v2257 = vadd.f32 %v2247, %v2255
    %v2258 = vtanh.pop %v2257
    %2260 = vrot.lane.b32.xlu0 %v2258, 32
    %v2261 = vpop.permute.xlu0 %2260
    %v2263 = vmul.f32 %v2245, %v2261
    %2265 = vrot.lane.b32.xlu0 %v2263, 64
    %v2266 = vpop.permute.xlu0 %2265
    %s2268 = scalar_lea.vmem [#allocation6], 12
    %2269 = vst.msk [vmem:[%s2268] sm:$0x3] %vm451, %v2266
    %s2270 = scalar_lea.vmem [#allocation7], 2
    %2271 = vst.msk [vmem:[%s2270 - $0x2] sm:$0xc] %vm454, %v2266
    %2272 = vrot.lane.b32.xlu0 %v2263, 96
    %v2273 = vpop.permute.xlu0 %2272
    %v2275 = vsel %vm459, %v2266, %v2273
    %v2276 = vsel %vm119, %v2275, 0.0
    %v2277 = vld [vmem:[%s333] sm:$0x3]
    %v2278 = vld [vmem:[#allocation3] sm:$0x3]
    %v2280 = vrot.slane %v2278, 6
    %v2282 = vsel %vm186, %v2277, %v2280
    %v2284 = vsel %vm223, %v2276, 0
    %2286 = vmatprep.subr.mxu0 0.0
    %2287 = vmatpush1.msra.mxu0 0.0
    %2288 = vmatprep.subr.mxu0 0.0
    %2289 = vmatpush1.msra.mxu0 0.0
    %2290 = vmatprep.subr.mxu0 0.0
    %2291 = vmatpush1.msra.mxu0 0.0
    %2292 = vmatprep.subr.mxu0 0.0
    %2293 = vmatpush1.msra.mxu0 0.0
    %2294 = vmatprep.subr.mxu0 0.0
    %2295 = vmatpush1.msra.mxu0 0.0
    %2296 = vmatprep.subr.mxu0 0.0
    %2297 = vmatpush1.msra.mxu0 0.0
    %2298 = vmatprep.subr.mxu0 0.0
    %2299 = vmatpush1.msra.mxu0 0.0
    %2300 = vmatprep.subr.mxu0 0.0
    %2301 = vmatpush1.msra.mxu0 0.0
    %2302 = vmatprep.subr.mxu0 0.0
    %2303 = vmatpush1.msra.mxu0 %v1475
    %2304 = vmatprep.subr.mxu0 0.0
    %2305 = vmatpush1.msra.mxu0 %v1474
    %2306 = vmatprep.subr.mxu0 0.0
    %2307 = vmatpush1.msra.mxu0 %v1473
    %2308 = vmatprep.subr.mxu0 0.0
    %2309 = vmatpush1.msra.mxu0 %v1472
    %2310 = vmatprep.subr.mxu0 0.0
    %2311 = vmatpush1.msra.mxu0 %v1471
    %2312 = vmatprep.subr.mxu0 0.0
    %2313 = vmatpush1.msra.mxu0 %v1470
    %2314 = vmatprep.subr.mxu0 0.0
    %2315 = vmatpush1.msra.mxu0 %v1469
    %2316 = vmatprep.subr.mxu0 0.0
    %2317 = vmatpush1.msra.mxu0 %v1468
    %2318 = vmatprep.subr.mxu0 0.0
    %2319 = vmatpush2.msra.mxu0 0.0
    %2320 = vmatprep.subr.mxu0 0.0
    %2321 = vmatpush2.msra.mxu0 0.0
    %2322 = vmatprep.subr.mxu0 0.0
    %2323 = vmatpush2.msra.mxu0 0.0
    %2324 = vmatprep.subr.mxu0 0.0
    %2325 = vmatpush2.msra.mxu0 0.0
    %2326 = vmatprep.subr.mxu0 0.0
    %2327 = vmatpush2.msra.mxu0 0.0
    %2328 = vmatprep.subr.mxu0 0.0
    %2329 = vmatpush2.msra.mxu0 0.0
    %2330 = vmatprep.subr.mxu0 0.0
    %2331 = vmatpush2.msra.mxu0 0.0
    %2332 = vmatprep.subr.mxu0 0.0
    %2333 = vmatpush2.msra.mxu0 0.0
    %2334 = vmatprep.subr.mxu0 0.0
    %2335 = vmatpush2.msra.mxu0 0.0
    %2336 = vmatprep.subr.mxu0 0.0
    %2337 = vmatpush2.msra.mxu0 0.0
    %2338 = vmatprep.subr.mxu0 0.0
    %2339 = vmatpush2.msra.mxu0 0.0
    %2340 = vmatprep.subr.mxu0 0.0
    %2341 = vmatpush2.msra.mxu0 0.0
    %2342 = vmatprep.subr.mxu0 0.0
    %2343 = vmatpush2.msra.mxu0 0.0
    %2344 = vmatprep.subr.mxu0 0.0
    %2345 = vmatpush2.msra.mxu0 0.0
    %2346 = vmatprep.subr.mxu0 0.0
    %2347 = vmatpush2.msra.mxu0 0.0
    %2348 = vmatprep.subr.mxu0 0.0
    %2349 = vmatpush2.msra.mxu0 0.0
    %2350 = vmatprep.mubr.f32.mxu0 0.0
    %2351 = vmatmul.mubr.f32.gmra.mxu0 %v2284
    %v2352 = vpop.f32.mrf.mxu0
    %v2353 = vadd.f32 0.0, %v2352
    %v2354 = vpop.f32.mrf.mxu0
    %2355 = vdwg.mxu0
    %v2356 = vadd.f32 %v2282, %v2353
    %v2357 = vmul.f32 %v2356, 0.5
    %v2358 = vtanh.pop %v2357
    %v2359 = vmul.f32 %v2358, 0.5
    %v2360 = vadd.f32 %v2359, 0.5
    %v2361 = vtanh.pop %v2356
    %v2362 = vmul.f32 %v2360, %v2257
    %2364 = vrot.lane.b32.xlu0 %v2361, 32
    %v2365 = vpop.permute.xlu0 %2364
    %v2367 = vmul.f32 %v2360, %v2365
    %2369 = vrot.lane.b32.xlu0 %v2367, 32
    %v2370 = vpop.permute.xlu0 %2369
    %v2372 = vadd.f32 %v2362, %v2370
    %v2373 = vtanh.pop %v2372
    %2375 = vrot.lane.b32.xlu0 %v2373, 32
    %v2376 = vpop.permute.xlu0 %2375
    %v2378 = vmul.f32 %v2360, %v2376
    %2380 = vrot.lane.b32.xlu0 %v2378, 64
    %v2381 = vpop.permute.xlu0 %2380
    %s2383 = scalar_lea.vmem [#allocation6], 14
    %2384 = vst.msk [vmem:[%s2383] sm:$0x3] %vm451, %v2381
    %2385 = vst.msk [vmem:[#allocation7 - $0x2] sm:$0xc] %vm454, %v2381
    %v2386 = vld [vmem:[%s7] sm:$0x1]
    %v2387 = vld [vmem:[%s9] sm:$0x1]
    %s2388 = sld [smem:[#allocation8]]
    %s2389 = sld [smem:[#allocation9]]
    %v2390 = vld [vmem:[#allocation6] sm:$0x3]
    %v2391 = vld [vmem:[#allocation7] sm:$0x3]
    %2393 = vrot.lane.b32.xlu0 %v2391, 32
    %v2394 = vpop.permute.xlu0 %2393
    %v2396 = vsel %vm459, %v2390, %v2394
    %v2397 = vtanh.pop %v2396
    %v2399 = vlaneseq
    %v2400 = vshrl.u32 %v2399, 7
    %v2401 = vsub.s32 0, %v2400
    %v2402 = vrot.slane %v2386, %v2401
    %v2404 = vmul.f32 %v2397, %v2402
    %vm2405 = vcmask 517120
    %v2406 = vsel %vm2405, %v2404, 0.0
    %2407 = vadd.xlane.f32.xlu0 %v2406
    %v2408 = vpop.xlane.xlu0 %2407
    %v2410 = vlaneseq
    %v2411 = vshrl.u32 %v2410, 7
    %v2412 = vsub.s32 0, %v2411
    %v2413 = vrot.slane %v2387, %v2412
    %v2415 = vmul.f32 %v2397, %v2413
    %v2416 = vsel %vm2405, %v2415, 0.0
    %2417 = vadd.xlane.f32.xlu0 %v2416
    %v2418 = vpop.xlane.xlu0 %2417
    %v2419 = vld [vmem:[%s1693] sm:$0x3]
    %v2420 = vld [vmem:[%s2270] sm:$0x3]
    %2422 = vrot.lane.b32.xlu0 %v2420, 32
    %v2423 = vpop.permute.xlu0 %2422
    %v2425 = vsel %vm459, %v2419, %v2423
    %v2426 = vtanh.pop %v2425
    %v2427 = vmul.f32 %v2426, %v2402
    %v2428 = vsel %vm2405, %v2427, 0.0
    %2429 = vadd.xlane.f32.xlu0 %v2428
    %v2430 = vpop.xlane.xlu0 %2429
    %v2431 = vmul.f32 %v2426, %v2413
    %v2432 = vsel %vm2405, %v2431, 0.0
    %2433 = vadd.xlane.f32.xlu0 %v2432
    %v2434 = vpop.xlane.xlu0 %2433
    %v2435 = vld [vmem:[%s1808] sm:$0x3]
    %v2436 = vld [vmem:[%s2155] sm:$0x3]
    %2438 = vrot.lane.b32.xlu0 %v2436, 32
    %v2439 = vpop.permute.xlu0 %2438
    %v2441 = vsel %vm459, %v2435, %v2439
    %v2442 = vtanh.pop %v2441
    %v2443 = vmul.f32 %v2442, %v2402
    %v2444 = vsel %vm2405, %v2443, 0.0
    %2445 = vadd.xlane.f32.xlu0 %v2444
    %v2446 = vpop.xlane.xlu0 %2445
    %v2447 = vmul.f32 %v2442, %v2413
    %v2448 = vsel %vm2405, %v2447, 0.0
    %2449 = vadd.xlane.f32.xlu0 %v2448
    %v2450 = vpop.xlane.xlu0 %2449
    %v2451 = vld [vmem:[%s1923] sm:$0x3]
    %v2452 = vld [vmem:[%s2040] sm:$0x3]
    %2454 = vrot.lane.b32.xlu0 %v2452, 32
    %v2455 = vpop.permute.xlu0 %2454
    %v2457 = vsel %vm459, %v2451, %v2455
    %v2458 = vtanh.pop %v2457
    %v2459 = vmul.f32 %v2458, %v2402
    %v2460 = vsel %vm2405, %v2459, 0.0
    %2461 = vadd.xlane.f32.xlu0 %v2460
    %v2462 = vpop.xlane.xlu0 %2461
    %v2463 = vmul.f32 %v2458, %v2413
    %v2464 = vsel %vm2405, %v2463, 0.0
    %2465 = vadd.xlane.f32.xlu0 %v2464
    %v2466 = vpop.xlane.xlu0 %2465
    %v2467 = vld [vmem:[%s2038] sm:$0x3]
    %v2468 = vld [vmem:[%s1925] sm:$0x3]
    %2470 = vrot.lane.b32.xlu0 %v2468, 32
    %v2471 = vpop.permute.xlu0 %2470
    %v2473 = vsel %vm459, %v2467, %v2471
    %v2474 = vtanh.pop %v2473
    %v2475 = vmul.f32 %v2474, %v2402
    %v2476 = vsel %vm2405, %v2475, 0.0
    %2477 = vadd.xlane.f32.xlu0 %v2476
    %v2478 = vpop.xlane.xlu0 %2477
    %v2479 = vmul.f32 %v2474, %v2413
    %v2480 = vsel %vm2405, %v2479, 0.0
    %2481 = vadd.xlane.f32.xlu0 %v2480
    %v2482 = vpop.xlane.xlu0 %2481
    %v2483 = vld [vmem:[%s2153] sm:$0x3]
    %v2484 = vld [vmem:[%s1810] sm:$0x3]
    %2486 = vrot.lane.b32.xlu0 %v2484, 32
    %v2487 = vpop.permute.xlu0 %2486
    %v2489 = vsel %vm459, %v2483, %v2487
    %v2490 = vtanh.pop %v2489
    %v2491 = vmul.f32 %v2490, %v2402
    %v2492 = vsel %vm2405, %v2491, 0.0
    %2493 = vadd.xlane.f32.xlu0 %v2492
    %v2494 = vpop.xlane.xlu0 %2493
    %v2495 = vmul.f32 %v2490, %v2413
    %v2496 = vsel %vm2405, %v2495, 0.0
    %2497 = vadd.xlane.f32.xlu0 %v2496
    %v2498 = vpop.xlane.xlu0 %2497
    %v2499 = vld [vmem:[%s2268] sm:$0x3]
    %v2500 = vld [vmem:[%s1695] sm:$0x3]
    %2502 = vrot.lane.b32.xlu0 %v2500, 32
    %v2503 = vpop.permute.xlu0 %2502
    %v2505 = vsel %vm459, %v2499, %v2503
    %v2506 = vtanh.pop %v2505
    %v2507 = vmul.f32 %v2506, %v2402
    %v2508 = vsel %vm2405, %v2507, 0.0
    %2509 = vadd.xlane.f32.xlu0 %v2508
    %v2510 = vpop.xlane.xlu0 %2509
    %v2511 = vmul.f32 %v2506, %v2413
    %v2512 = vsel %vm2405, %v2511, 0.0
    %2513 = vadd.xlane.f32.xlu0 %v2512
    %v2514 = vpop.xlane.xlu0 %2513
    %v2515 = vld [vmem:[%s2383] sm:$0x3]
    %v2516 = vld [vmem:[%s1580] sm:$0x3]
    %2518 = vrot.lane.b32.xlu0 %v2516, 32
    %v2519 = vpop.permute.xlu0 %2518
    %v2521 = vsel %vm459, %v2515, %v2519
    %v2522 = vtanh.pop %v2521
    %v2523 = vmul.f32 %v2522, %v2402
    %v2524 = vsel %vm2405, %v2523, 0.0
    %2525 = vadd.xlane.f32.xlu0 %v2524
    %v2526 = vpop.xlane.xlu0 %2525
    %v2527 = vmul.f32 %v2522, %v2413
    %v2528 = vsel %vm2405, %v2527, 0.0
    %2529 = vadd.xlane.f32.xlu0 %v2528
    %v2530 = vpop.xlane.xlu0 %2529
    %vm2531 = vcmask 7168
    %v2532 = vsel %vm2531, %v2408, %v2430
    %vm2533 = vcmask 15360
    %v2534 = vsel %vm2533, %v2532, %v2446
    %vm2535 = vcmask 23552
    %v2536 = vsel %vm2535, %v2534, %v2462
    %vm2537 = vcmask 31744
    %v2538 = vsel %vm2537, %v2536, %v2478
    %vm2539 = vcmask 39936
    %v2540 = vsel %vm2539, %v2538, %v2494
    %vm2541 = vcmask 48128
    %v2542 = vsel %vm2541, %v2540, %v2510
    %vm2543 = vcmask 56320
    %v2544 = vsel %vm2543, %v2542, %v2526
    %v2545 = vstv %s2388
    %v2546 = vadd.f32 %v2544, %v2545
    %v2547 = vsel %vm2531, %v2418, %v2434
    %v2548 = vsel %vm2533, %v2547, %v2450
    %v2549 = vsel %vm2535, %v2548, %v2466
    %v2550 = vsel %vm2537, %v2549, %v2482
    %v2551 = vsel %vm2539, %v2550, %v2498
    %v2552 = vsel %vm2541, %v2551, %v2514
    %v2553 = vsel %vm2543, %v2552, %v2530
    %v2554 = vstv %s2389
    %v2555 = vadd.f32 %v2553, %v2554
    %vm2556 = vcmask 58368
    %2557 = vst.msk [vmem:[#allocation20] sm:$0x3] %vm2556, %v2555
    %v2558 = vsel %vm2556, %v2546, -inf
    %2559 = vmax.xlane.f32.xlu0 %v2558
    %v2560 = vpop.xlane.xlu0 %2559
    %v2561 = vsub.f32 %v2546, %v2560
    %v2562 = vmul.f32 %v2561, 1.442695
    %v2563 = vpow.pop %v2562
    %v2564 = vsel %vm2556, %v2563, 0.0
    %2565 = vadd.xlane.f32.xlu0 %v2564
    %v2566 = vpop.xlane.xlu0 %2565
    %v2567 = vrcp.pop %v2566
    %v2568 = vmul.f32 %v2563, %v2567
    %2570 = vset.pattern.permute.xlu0 0
    %2571 = vperm.xlu0 %2570, %v2568
    %v2572 = vpop.permute.xlu0 %2571
    %v2574 = vmul.f32 %v2572, %v2396
    %2575 = vset.pattern.permute.xlu0 1
    %2576 = vperm.xlu0 %2575, %v2568
    %v2577 = vpop.permute.xlu0 %2576
    %v2579 = vmul.f32 %v2577, %v2425
    %v2580 = vadd.f32 %v2574, %v2579
    %2581 = vset.pattern.permute.xlu0 2
    %2582 = vperm.xlu0 %2581, %v2568
    %v2583 = vpop.permute.xlu0 %2582
    %v2585 = vmul.f32 %v2583, %v2441
    %v2586 = vadd.f32 %v2580, %v2585
    %2587 = vset.pattern.permute.xlu0 3
    %2588 = vperm.xlu0 %2587, %v2568
    %v2589 = vpop.permute.xlu0 %2588
    %v2591 = vmul.f32 %v2589, %v2457
    %v2592 = vadd.f32 %v2586, %v2591
    %2593 = vset.pattern.permute.xlu0 4
    %2594 = vperm.xlu0 %2593, %v2568
    %v2595 = vpop.permute.xlu0 %2594
    %v2597 = vmul.f32 %v2595, %v2473
    %v2598 = vadd.f32 %v2592, %v2597
    %2599 = vset.pattern.permute.xlu0 5
    %2600 = vperm.xlu0 %2599, %v2568
    %v2601 = vpop.permute.xlu0 %2600
    %v2603 = vmul.f32 %v2601, %v2489
    %v2604 = vadd.f32 %v2598, %v2603
    %2605 = vset.pattern.permute.xlu0 6
    %2606 = vperm.xlu0 %2605, %v2568
    %v2607 = vpop.permute.xlu0 %2606
    %v2609 = vmul.f32 %v2607, %v2505
    %v2610 = vadd.f32 %v2604, %v2609
    %2611 = vset.pattern.permute.xlu0 7
    %2612 = vperm.xlu0 %2611, %v2568
    %v2613 = vpop.permute.xlu0 %2612
    %v2615 = vmul.f32 %v2613, %v2521
    %v2616 = vadd.f32 %v2610, %v2615
    %2617 = vst.msk [vmem:[#allocation19] sm:$0x3] %vm2405, %v2616
    // Predicated region
    $region66: #{lstm_mil_forward.1} parent=1 // pred_check
      _
    $region67: #{lstm_mil_forward.1} parent=1 // pred_check_branch
      %2619 = sbr.rel (0) target = $region69
    $region68: #{lstm_mil_forward.1} parent=1 // pred_region
      %s2621 = ssub.s32 32, 32
      %2622 = vsyncadd [#allocation12], %s2621
      %s2624 = sshll.u32 [#allocation19], 4
      %s2625 = int_to_ptr.vmem [resolvable:$true] %s2624
      %2627 = dma.vmem_to_hbm [thread:$0]  %s2625, 32, %s11, [#allocation12]
    $region69: #{lstm_mil_forward.1} parent=1 // pred_fallthru
      _
    // Predicated region
    $region70: #{lstm_mil_forward.1} parent=1 // pred_check
      _
    $region71: #{lstm_mil_forward.1} parent=1 // pred_check_branch
      %2629 = sbr.rel (0) target = $region73
    $region72: #{lstm_mil_forward.1} parent=1 // pred_region
      %s2631 = ssub.s32 32, 32
      %2632 = vsyncadd [#allocation21], %s2631
      %s2634 = sshll.u32 [#allocation20], 4
      %s2635 = int_to_ptr.vmem [resolvable:$true] %s2634
      %2637 = dma.vmem_to_hbm [thread:$0]  %s2635, 32, %s12, [#allocation21]
    $region73: #{lstm_mil_forward.1} parent=1 // pred_fallthru
      _
    // Predicated region
    $region74: #{lstm_mil_forward.1} parent=1 // pred_check
      _
    $region75: #{lstm_mil_forward.1} parent=1 // pred_check_branch
      %2639 = sbr.rel (0) target = $region77
    $region76: #{lstm_mil_forward.1} parent=1 // pred_region
      %2640 = dma.done [#allocation12], 32
    $region77: #{lstm_mil_forward.1} parent=1 // pred_fallthru
      _
    // Predicated region
    $region78: #{lstm_mil_forward.1} parent=1 // pred_check
      _
    $region79: #{lstm_mil_forward.1} parent=1 // pred_check_branch
      %2642 = sbr.rel (0) target = $region81
    $region80: #{lstm_mil_forward.1} parent=1 // pred_region
      %2643 = dma.done [#allocation21], 32
    $region81: #{lstm_mil_forward.1} parent=1 // pred_fallthru
      _
    %2644 = vsyncpa [#allocation11], 1
    %2645 = vsyncpa [#allocation14], 1
    %2646 = vsyncpa [#allocation17], 1
    %2647 = vsyncpa [#allocation12], 1
    %2648 = vsyncpa [#allocation21], 1

</llo_original>
